<compile_context>
chip_gen: v6e
topology: v6e:2x2x1
jax: 0.10.0
libtpu: 0.0.40
codegen_flags: <defaults>
</compile_context>

<pallas_src>
import functools

import jax
import jax.numpy as jnp
from jax.experimental import pallas as pl
from jax.experimental.pallas import tpu as pltpu


def _downblock2d_kernel(x_ref, w_ref, g_ref, bt_ref, o_ref, col_ref, act_ref,
                        *, eps, H, W, KH, KW):
    # x_ref  : (1, Hp, Wp, Cin_pad)   bf16 padded input for one batch element (NHWC)
    # w_ref  : (KH*KW*Cin_pad, Cout_pad) bf16 im2col-layout weights
    # g_ref / bt_ref : (1, Cout_pad)  f32 InstanceNorm affine params
    # o_ref  : (1, Ho, Wo, Cout_pad)  f32 output block (lane-dense last dim)
    # col_ref: (H*W, KH*KW*Cin_pad)   bf16 im2col scratch
    # act_ref: (H*W, Cout_pad)        f32 post-ReLU scratch (for strided pooling reads)
    Cin = x_ref.shape[3]
    Cout = w_ref.shape[1]
    Ho, Wo = H // 2, W // 2

    # --- im2col: one shifted-window write per tap (9 taps for 3x3) ---
    for kh in range(KH):
        for kw in range(KW):
            t = kh * KW + kw
            patch = x_ref[0, kh:kh + H, kw:kw + W, :]          # (H, W, Cin) bf16
            col_ref[:, t * Cin:(t + 1) * Cin] = patch.reshape(H * W, Cin)

    # --- Conv2d as ONE bf16 MXU matmul, f32 accumulation ---
    acc = jnp.dot(col_ref[...], w_ref[...],
                  preferred_element_type=jnp.float32)          # (H*W, Cout) f32
    # Conv bias omitted on purpose: InstanceNorm's mean subtraction cancels it.

    # --- InstanceNorm2d (affine, biased variance) over spatial dims, f32 ---
    mean = jnp.mean(acc, axis=0, keepdims=True)                # (1, Cout)
    cent = acc - mean
    var = jnp.mean(cent * cent, axis=0, keepdims=True)
    normed = cent * jax.lax.rsqrt(var + eps)
    normed = normed * g_ref[...] + bt_ref[...]

    # --- ReLU ---
    act_ref[...] = jnp.maximum(normed, 0.0)                    # (H*W, Cout) f32

    # --- AvgPool2d(2,2) on the VPU ---
    # W-direction: adjacent flattened rows (even/odd w) summed via stride-2 reads.
    wsum = (act_ref[pl.ds(0, H * Wo, 2), :] +
            act_ref[pl.ds(1, H * Wo, 2), :])                   # (H*Wo, Cout)
    # H-direction: split rows into (Ho, 2*Wo) and add the two contiguous halves.
    w3 = wsum.reshape(Ho, 2 * Wo, Cout)
    pooled = (w3[:, :Wo, :] + w3[:, Wo:, :]) * 0.25            # (Ho, Wo, Cout)

    o_ref[...] = pooled.reshape(1, Ho, Wo, Cout).astype(o_ref.dtype)


def downblock2d_forward(x_nchw, w_oihw, bias, gamma, beta, eps=1e-5):
    """Forward pass matching PyTorch DownBlock2d. Returns NCHW output."""
    N, Cin, H, W = x_nchw.shape
    Cout, _, KH, KW = w_oihw.shape
    pad = (KH - 1) // 2
    Ho, Wo = H // 2, W // 2

    SUB, LANE = 8, 128
    cin_p = max(SUB, ((Cin + SUB - 1) // SUB) * SUB)       # sublane-friendly contraction
    cout_p = max(LANE, ((Cout + LANE - 1) // LANE) * LANE)  # lane-dense output channels

    # NCHW -> NHWC, spatial zero-pad (conv padding=1), channel pad, bf16 for the MXU.
    x = jnp.transpose(x_nchw, (0, 2, 3, 1))
    x = jnp.pad(x, ((0, 0), (pad, pad), (pad, pad), (0, cin_p - Cin)))
    x = x.astype(jnp.bfloat16)
    Hp, Wp = H + 2 * pad, W + 2 * pad

    # OIHW -> HWIO, pad channels, reshape to im2col weight layout (KH*KW*Cin_pad, Cout_pad).
    w = jnp.transpose(w_oihw, (2, 3, 1, 0))
    w = jnp.pad(w, ((0, 0), (0, 0), (0, cin_p - Cin), (0, cout_p - Cout)))
    w = w.reshape(KH * KW * cin_p, cout_p).astype(jnp.bfloat16)

    # Conv bias is mathematically cancelled by InstanceNorm's mean subtraction.
    del bias
    g2 = jnp.pad(gamma, (0, cout_p - Cout)).reshape(1, cout_p).astype(jnp.float32)
    bt2 = jnp.pad(beta, (0, cout_p - Cout)).reshape(1, cout_p).astype(jnp.float32)

    kernel = functools.partial(_downblock2d_kernel,
                               eps=eps, H=H, W=W, KH=KH, KW=KW)

    out_nhwc = pl.pallas_call(
        kernel,
        out_shape=jax.ShapeDtypeStruct((N, Ho, Wo, cout_p), jnp.float32),
        grid=(N,),
        in_specs=[
            pl.BlockSpec((1, Hp, Wp, cin_p), lambda n: (n, 0, 0, 0)),
            pl.BlockSpec((KH * KW * cin_p, cout_p), lambda n: (0, 0)),
            pl.BlockSpec((1, cout_p), lambda n: (0, 0)),
            pl.BlockSpec((1, cout_p), lambda n: (0, 0)),
        ],
        out_specs=pl.BlockSpec((1, Ho, Wo, cout_p), lambda n: (n, 0, 0, 0)),
        scratch_shapes=[
            pltpu.VMEM((H * W, KH * KW * cin_p), jnp.bfloat16),   # im2col buffer
            pltpu.VMEM((H * W, cout_p), jnp.float32),             # post-ReLU buffer
        ],
        compiler_params=pltpu.CompilerParams(
            dimension_semantics=("parallel",),
            vmem_limit_bytes=32 * 1024 * 1024,
        ),
    )(x, w, g2, bt2)

    # Drop channel padding, NHWC -> NCHW to match PyTorch output convention.
    return jnp.transpose(out_nhwc[..., :Cout], (0, 3, 1, 2))


def _reference_forward(x_nchw, w_oihw, bias, gamma, beta, eps=1e-5):
    """Plain-JAX reference of DownBlock2d.forward for verification."""
    out = jax.lax.conv_general_dilated(
        x_nchw, w_oihw, window_strides=(1, 1), padding=[(1, 1), (1, 1)],
        dimension_numbers=("NCHW", "OIHW", "NCHW"))
    out = out + bias[None, :, None, None]
    mean = out.mean(axis=(2, 3), keepdims=True)
    var = ((out - mean) ** 2).mean(axis=(2, 3), keepdims=True)
    out = (out - mean) * jax.lax.rsqrt(var + eps)
    out = out * gamma[None, :, None, None] + beta[None, :, None, None]
    out = jnp.maximum(out, 0.0)
    N, C, H, W = out.shape
    out = out.reshape(N, C, H // 2, 2, W // 2, 2).mean(axis=(3, 5))
    return out


if __name__ == "__main__":
    key = jax.random.PRNGKey(0)
    k_x, k_w, k_b, k_g, k_bt = jax.random.split(key, 5)

    N, Cin, Cout, H, W, K = 2, 4, 8, 16, 16, 3

    x = jax.random.normal(k_x, (N, Cin, H, W), dtype=jnp.float32)
    # Deterministic synthetic parameters (no checkpoint load).
    w = jax.random.normal(k_w, (Cout, Cin, K, K), dtype=jnp.float32) * 0.1
    bias = jax.random.normal(k_b, (Cout,), dtype=jnp.float32) * 0.1
    gamma = 1.0 + 0.1 * jax.random.normal(k_g, (Cout,), dtype=jnp.float32)
    beta = 0.1 * jax.random.normal(k_bt, (Cout,), dtype=jnp.float32)

    out = downblock2d_forward(x, w, bias, gamma, beta)
    out = jax.block_until_ready(out)

    # Reference uses the same bf16 quantization of x / w that the MXU path sees
    # (accumulation, norm, ReLU and pooling remain f32 in both).
    x_q = x.astype(jnp.bfloat16).astype(jnp.float32)
    w_q = w.astype(jnp.bfloat16).astype(jnp.float32)
    ref = _reference_forward(x_q, w_q, bias, gamma, beta)

    assert out.shape == (N, Cout, H // 2, W // 2), out.shape
    max_err = float(jnp.max(jnp.abs(out - ref)))
    assert jnp.allclose(out, ref, atol=2e-3, rtol=2e-3), max_err

    print("KERNEL_OK")
</pallas_src>

<mosaic_0001>
module attributes {stable_mosaic.version = 11 : i64} {
  func.func @_downblock2d_kernel(%arg0: i32, %arg1: memref<1x18x18x8xbf16, #tpu.memory_space<vmem>>, %arg2: memref<72x128xbf16, #tpu.memory_space<vmem>>, %arg3: memref<1x128xf32, #tpu.memory_space<vmem>>, %arg4: memref<1x128xf32, #tpu.memory_space<vmem>>, %arg5: memref<1x8x8x128xf32, #tpu.memory_space<vmem>>, %arg6: memref<256x72xbf16, #tpu.memory_space<vmem>>, %arg7: memref<256x128xf32, #tpu.memory_space<vmem>>) attributes {dimension_semantics = [#tpu.dimension_semantics<parallel>], iteration_bounds = array<i64: 2>, scalar_prefetch = 0 : i64, scratch_operands = 2 : i64, tpu.core_type = #tpu.core_type<tc>, window_params = [{transform_indices = @transform_0, window_bounds = array<i64: 1, 18, 18, 8>}, {pipeline_mode = #tpu.pipeline_mode<synchronous>, transform_indices = @transform_1, window_bounds = array<i64: 72, 128>}, {pipeline_mode = #tpu.pipeline_mode<synchronous>, transform_indices = @transform_2, window_bounds = array<i64: 1, 128>}, {pipeline_mode = #tpu.pipeline_mode<synchronous>, transform_indices = @transform_3, window_bounds = array<i64: 1, 128>}, {transform_indices = @transform_4, window_bounds = array<i64: 1, 8, 8, 128>}]} {
    %c0 = arith.constant 0 : index
    %c0_0 = arith.constant 0 : index
    %c0_1 = arith.constant 0 : index
    %c0_2 = arith.constant 0 : index
    %0 = vector.load %arg1[%c0, %c0_0, %c0_1, %c0_2] : memref<1x18x18x8xbf16, #tpu.memory_space<vmem>>, vector<1x16x16x8xbf16>
    %1 = vector.shape_cast %0 : vector<1x16x16x8xbf16> to vector<16x16x8xbf16>
    %2 = vector.shape_cast %1 : vector<16x16x8xbf16> to vector<256x8xbf16>
    %c0_3 = arith.constant 0 : index
    %c0_4 = arith.constant 0 : index
    %3 = vector.load %arg6[%c0_3, %c0_4] : memref<256x72xbf16, #tpu.memory_space<vmem>>, vector<256x8xbf16>
    tpu.vector_store %arg6[%c0_3, %c0_4], %2 {strides = array<i32>} : memref<256x72xbf16, #tpu.memory_space<vmem>>, vector<256x8xbf16>,
    %c0_5 = arith.constant 0 : index
    %c0_6 = arith.constant 0 : index
    %c1 = arith.constant 1 : index
    %c0_7 = arith.constant 0 : index
    %4 = vector.load %arg1[%c0_5, %c0_6, %c1, %c0_7] : memref<1x18x18x8xbf16, #tpu.memory_space<vmem>>, vector<1x16x16x8xbf16>
    %5 = vector.shape_cast %4 : vector<1x16x16x8xbf16> to vector<16x16x8xbf16>
    %6 = vector.shape_cast %5 : vector<16x16x8xbf16> to vector<256x8xbf16>
    %c0_8 = arith.constant 0 : index
    %c8 = arith.constant 8 : index
    %7 = vector.load %arg6[%c0_8, %c8] : memref<256x72xbf16, #tpu.memory_space<vmem>>, vector<256x8xbf16>
    tpu.vector_store %arg6[%c0_8, %c8], %6 {strides = array<i32>} : memref<256x72xbf16, #tpu.memory_space<vmem>>, vector<256x8xbf16>,
    %c0_9 = arith.constant 0 : index
    %c0_10 = arith.constant 0 : index
    %c2 = arith.constant 2 : index
    %c0_11 = arith.constant 0 : index
    %8 = vector.load %arg1[%c0_9, %c0_10, %c2, %c0_11] : memref<1x18x18x8xbf16, #tpu.memory_space<vmem>>, vector<1x16x16x8xbf16>
    %9 = vector.shape_cast %8 : vector<1x16x16x8xbf16> to vector<16x16x8xbf16>
    %10 = vector.shape_cast %9 : vector<16x16x8xbf16> to vector<256x8xbf16>
    %c0_12 = arith.constant 0 : index
    %c16 = arith.constant 16 : index
    %11 = vector.load %arg6[%c0_12, %c16] : memref<256x72xbf16, #tpu.memory_space<vmem>>, vector<256x8xbf16>
    tpu.vector_store %arg6[%c0_12, %c16], %10 {strides = array<i32>} : memref<256x72xbf16, #tpu.memory_space<vmem>>, vector<256x8xbf16>,
    %c0_13 = arith.constant 0 : index
    %c1_14 = arith.constant 1 : index
    %c0_15 = arith.constant 0 : index
    %c0_16 = arith.constant 0 : index
    %12 = vector.load %arg1[%c0_13, %c1_14, %c0_15, %c0_16] : memref<1x18x18x8xbf16, #tpu.memory_space<vmem>>, vector<1x16x16x8xbf16>
    %13 = vector.shape_cast %12 : vector<1x16x16x8xbf16> to vector<16x16x8xbf16>
    %14 = vector.shape_cast %13 : vector<16x16x8xbf16> to vector<256x8xbf16>
    %c0_17 = arith.constant 0 : index
    %c24 = arith.constant 24 : index
    %15 = vector.load %arg6[%c0_17, %c24] : memref<256x72xbf16, #tpu.memory_space<vmem>>, vector<256x8xbf16>
    tpu.vector_store %arg6[%c0_17, %c24], %14 {strides = array<i32>} : memref<256x72xbf16, #tpu.memory_space<vmem>>, vector<256x8xbf16>,
    %c0_18 = arith.constant 0 : index
    %c1_19 = arith.constant 1 : index
    %c1_20 = arith.constant 1 : index
    %c0_21 = arith.constant 0 : index
    %16 = vector.load %arg1[%c0_18, %c1_19, %c1_20, %c0_21] : memref<1x18x18x8xbf16, #tpu.memory_space<vmem>>, vector<1x16x16x8xbf16>
    %17 = vector.shape_cast %16 : vector<1x16x16x8xbf16> to vector<16x16x8xbf16>
    %18 = vector.shape_cast %17 : vector<16x16x8xbf16> to vector<256x8xbf16>
    %c0_22 = arith.constant 0 : index
    %c32 = arith.constant 32 : index
    %19 = vector.load %arg6[%c0_22, %c32] : memref<256x72xbf16, #tpu.memory_space<vmem>>, vector<256x8xbf16>
    tpu.vector_store %arg6[%c0_22, %c32], %18 {strides = array<i32>} : memref<256x72xbf16, #tpu.memory_space<vmem>>, vector<256x8xbf16>,
    %c0_23 = arith.constant 0 : index
    %c1_24 = arith.constant 1 : index
    %c2_25 = arith.constant 2 : index
    %c0_26 = arith.constant 0 : index
    %20 = vector.load %arg1[%c0_23, %c1_24, %c2_25, %c0_26] : memref<1x18x18x8xbf16, #tpu.memory_space<vmem>>, vector<1x16x16x8xbf16>
    %21 = vector.shape_cast %20 : vector<1x16x16x8xbf16> to vector<16x16x8xbf16>
    %22 = vector.shape_cast %21 : vector<16x16x8xbf16> to vector<256x8xbf16>
    %c0_27 = arith.constant 0 : index
    %c40 = arith.constant 40 : index
    %23 = vector.load %arg6[%c0_27, %c40] : memref<256x72xbf16, #tpu.memory_space<vmem>>, vector<256x8xbf16>
    tpu.vector_store %arg6[%c0_27, %c40], %22 {strides = array<i32>} : memref<256x72xbf16, #tpu.memory_space<vmem>>, vector<256x8xbf16>,
    %c0_28 = arith.constant 0 : index
    %c2_29 = arith.constant 2 : index
    %c0_30 = arith.constant 0 : index
    %c0_31 = arith.constant 0 : index
    %24 = vector.load %arg1[%c0_28, %c2_29, %c0_30, %c0_31] : memref<1x18x18x8xbf16, #tpu.memory_space<vmem>>, vector<1x16x16x8xbf16>
    %25 = vector.shape_cast %24 : vector<1x16x16x8xbf16> to vector<16x16x8xbf16>
    %26 = vector.shape_cast %25 : vector<16x16x8xbf16> to vector<256x8xbf16>
    %c0_32 = arith.constant 0 : index
    %c48 = arith.constant 48 : index
    %27 = vector.load %arg6[%c0_32, %c48] : memref<256x72xbf16, #tpu.memory_space<vmem>>, vector<256x8xbf16>
    tpu.vector_store %arg6[%c0_32, %c48], %26 {strides = array<i32>} : memref<256x72xbf16, #tpu.memory_space<vmem>>, vector<256x8xbf16>,
    %c0_33 = arith.constant 0 : index
    %c2_34 = arith.constant 2 : index
    %c1_35 = arith.constant 1 : index
    %c0_36 = arith.constant 0 : index
    %28 = vector.load %arg1[%c0_33, %c2_34, %c1_35, %c0_36] : memref<1x18x18x8xbf16, #tpu.memory_space<vmem>>, vector<1x16x16x8xbf16>
    %29 = vector.shape_cast %28 : vector<1x16x16x8xbf16> to vector<16x16x8xbf16>
    %30 = vector.shape_cast %29 : vector<16x16x8xbf16> to vector<256x8xbf16>
    %c0_37 = arith.constant 0 : index
    %c56 = arith.constant 56 : index
    %31 = vector.load %arg6[%c0_37, %c56] : memref<256x72xbf16, #tpu.memory_space<vmem>>, vector<256x8xbf16>
    tpu.vector_store %arg6[%c0_37, %c56], %30 {strides = array<i32>} : memref<256x72xbf16, #tpu.memory_space<vmem>>, vector<256x8xbf16>,
    %c0_38 = arith.constant 0 : index
    %c2_39 = arith.constant 2 : index
    %c2_40 = arith.constant 2 : index
    %c0_41 = arith.constant 0 : index
    %32 = vector.load %arg1[%c0_38, %c2_39, %c2_40, %c0_41] : memref<1x18x18x8xbf16, #tpu.memory_space<vmem>>, vector<1x16x16x8xbf16>
    %33 = vector.shape_cast %32 : vector<1x16x16x8xbf16> to vector<16x16x8xbf16>
    %34 = vector.shape_cast %33 : vector<16x16x8xbf16> to vector<256x8xbf16>
    %c0_42 = arith.constant 0 : index
    %c64 = arith.constant 64 : index
    %35 = vector.load %arg6[%c0_42, %c64] : memref<256x72xbf16, #tpu.memory_space<vmem>>, vector<256x8xbf16>
    tpu.vector_store %arg6[%c0_42, %c64], %34 {strides = array<i32>} : memref<256x72xbf16, #tpu.memory_space<vmem>>, vector<256x8xbf16>,
    %c0_43 = arith.constant 0 : index
    %c0_44 = arith.constant 0 : index
    %36 = vector.load %arg6[%c0_43, %c0_44] : memref<256x72xbf16, #tpu.memory_space<vmem>>, vector<256x72xbf16>
    %c0_45 = arith.constant 0 : index
    %c0_46 = arith.constant 0 : index
    %37 = vector.load %arg2[%c0_45, %c0_46] : memref<72x128xbf16, #tpu.memory_space<vmem>>, vector<72x128xbf16>
    %cst = arith.constant dense<0.000000e+00> : vector<256x128xf32>
    %38 = tpu.matmul %36, %37, %cst {dimension_numbers = #tpu.dot_dimension_numbers<[1], [0], [0], [1], [0, 0, 1, 1], [], []>} : vector<256x72xbf16>, vector<72x128xbf16>, vector<256x128xf32> -> vector<256x128xf32>
    %cst_47 = arith.constant dense<0.000000e+00> : vector<128xf32>
    %39 = vector.multi_reduction <add>, %38, %cst_47 [0] : vector<256x128xf32> to vector<128xf32>
    %40 = vector.shape_cast %39 : vector<128xf32> to vector<1x128xf32>
    %cst_48 = arith.constant 2.560000e+02 : f32
    %41 = vector.broadcast %cst_48 : f32 to vector<1x128xf32>
    %42 = arith.divf %40, %41 : vector<1x128xf32>
    %43 = vector.broadcast %42 : vector<1x128xf32> to vector<256x128xf32>
    %44 = arith.subf %38, %43 : vector<256x128xf32>
    %45 = arith.mulf %44, %44 : vector<256x128xf32>
    %cst_49 = arith.constant dense<0.000000e+00> : vector<128xf32>
    %46 = vector.multi_reduction <add>, %45, %cst_49 [0] : vector<256x128xf32> to vector<128xf32>
    %47 = vector.shape_cast %46 : vector<128xf32> to vector<1x128xf32>
    %cst_50 = arith.constant 2.560000e+02 : f32
    %48 = vector.broadcast %cst_50 : f32 to vector<1x128xf32>
    %49 = arith.divf %47, %48 : vector<1x128xf32>
    %cst_51 = arith.constant 9.99999974E-6 : f32
    %50 = vector.broadcast %cst_51 : f32 to vector<1x128xf32>
    %51 = arith.addf %49, %50 : vector<1x128xf32>
    %52 = math.rsqrt %51 : vector<1x128xf32>
    %53 = vector.broadcast %52 : vector<1x128xf32> to vector<256x128xf32>
    %54 = arith.mulf %44, %53 : vector<256x128xf32>
    %c0_52 = arith.constant 0 : index
    %c0_53 = arith.constant 0 : index
    %55 = vector.load %arg3[%c0_52, %c0_53] : memref<1x128xf32, #tpu.memory_space<vmem>>, vector<1x128xf32>
    %56 = vector.broadcast %55 : vector<1x128xf32> to vector<256x128xf32>
    %57 = arith.mulf %54, %56 : vector<256x128xf32>
    %c0_54 = arith.constant 0 : index
    %c0_55 = arith.constant 0 : index
    %58 = vector.load %arg4[%c0_54, %c0_55] : memref<1x128xf32, #tpu.memory_space<vmem>>, vector<1x128xf32>
    %59 = vector.broadcast %58 : vector<1x128xf32> to vector<256x128xf32>
    %60 = arith.addf %57, %59 : vector<256x128xf32>
    %cst_56 = arith.constant 0.000000e+00 : f32
    %61 = vector.broadcast %cst_56 : f32 to vector<256x128xf32>
    %62 = arith.maximumf %60, %61 : vector<256x128xf32>
    %c0_57 = arith.constant 0 : index
    %c0_58 = arith.constant 0 : index
    %63 = vector.load %arg7[%c0_57, %c0_58] : memref<256x128xf32, #tpu.memory_space<vmem>>, vector<256x128xf32>
    tpu.vector_store %arg7[%c0_57, %c0_58], %62 {strides = array<i32>} : memref<256x128xf32, #tpu.memory_space<vmem>>, vector<256x128xf32>,
    %c0_59 = arith.constant 0 : index
    %c0_60 = arith.constant 0 : index
    %64 = tpu.strided_load %arg7[%c0_59, %c0_60] {strides = array<i32: 2, 1>} : memref<256x128xf32, #tpu.memory_space<vmem>>, vector<128x128xf32>
    %c1_61 = arith.constant 1 : index
    %c0_62 = arith.constant 0 : index
    %65 = tpu.strided_load %arg7[%c1_61, %c0_62] {strides = array<i32: 2, 1>} : memref<256x128xf32, #tpu.memory_space<vmem>>, vector<128x128xf32>
    %66 = arith.addf %64, %65 : vector<128x128xf32>
    %67 = vector.shape_cast %66 : vector<128x128xf32> to vector<8x16x128xf32>
    %68 = vector.extract_strided_slice %67 {offsets = [0, 0, 0], sizes = [8, 8, 128], strides = [1, 1, 1]} : vector<8x16x128xf32> to vector<8x8x128xf32>
    %69 = vector.extract_strided_slice %67 {offsets = [0, 8, 0], sizes = [8, 8, 128], strides = [1, 1, 1]} : vector<8x16x128xf32> to vector<8x8x128xf32>
    %70 = arith.addf %68, %69 : vector<8x8x128xf32>
    %cst_63 = arith.constant 2.500000e-01 : f32
    %71 = vector.broadcast %cst_63 : f32 to vector<8x8x128xf32>
    %72 = arith.mulf %70, %71 : vector<8x8x128xf32>
    %73 = vector.shape_cast %72 : vector<8x8x128xf32> to vector<1x8x8x128xf32>
    %c0_64 = arith.constant 0 : index
    %c0_65 = arith.constant 0 : index
    %c0_66 = arith.constant 0 : index
    %c0_67 = arith.constant 0 : index
    %74 = vector.load %arg5[%c0_64, %c0_65, %c0_66, %c0_67] : memref<1x8x8x128xf32, #tpu.memory_space<vmem>>, vector<1x8x8x128xf32>
    tpu.vector_store %arg5[%c0_64, %c0_65, %c0_66, %c0_67], %73 {strides = array<i32>} : memref<1x8x8x128xf32, #tpu.memory_space<vmem>>, vector<1x8x8x128xf32>,
    return
  }
  func.func @transform_0(%arg0: i32) -> (i32, i32, i32, i32) {
    %c0_i32 = arith.constant 0 : i32
    %c0_i32_0 = arith.constant 0 : i32
    %c0_i32_1 = arith.constant 0 : i32
    %c0_i32_2 = arith.constant 0 : i32
    return %arg0, %c0_i32, %c0_i32_0, %c0_i32_1 : i32, i32, i32, i32
  }
  func.func @transform_1(%arg0: i32) -> (i32, i32) {
    %c0_i32 = arith.constant 0 : i32
    %c0_i32_0 = arith.constant 0 : i32
    %c0_i32_1 = arith.constant 0 : i32
    return %c0_i32, %c0_i32_0 : i32, i32
  }
  func.func @transform_2(%arg0: i32) -> (i32, i32) {
    %c0_i32 = arith.constant 0 : i32
    %c0_i32_0 = arith.constant 0 : i32
    %c0_i32_1 = arith.constant 0 : i32
    return %c0_i32, %c0_i32_0 : i32, i32
  }
  func.func @transform_3(%arg0: i32) -> (i32, i32) {
    %c0_i32 = arith.constant 0 : i32
    %c0_i32_0 = arith.constant 0 : i32
    %c0_i32_1 = arith.constant 0 : i32
    return %c0_i32, %c0_i32_0 : i32, i32
  }
  func.func @transform_4(%arg0: i32) -> (i32, i32, i32, i32) {
    %c0_i32 = arith.constant 0 : i32
    %c0_i32_0 = arith.constant 0 : i32
    %c0_i32_1 = arith.constant 0 : i32
    %c0_i32_2 = arith.constant 0 : i32
    return %arg0, %c0_i32, %c0_i32_0, %c0_i32_1 : i32, i32, i32, i32
  }
}

</mosaic_0001>

<llo_original>
// kernel: tpu_custom_call.1
$region0: #{tpu_custom_call.1}
  #allocation0 [shape = 'u32[]', space=smem, size = 0x4, offset = 0x4, fixed_abs, tag = 'smem constant byte address 0x4 - core index']
  #allocation1 [shape = 'u32[144,128]{1,0:T(1,128)}', space=vmem, size = 0x12000, scoped, tag = 'internal scratch']
  #allocation2 [shape = 'bf16[256,72]{1,0:T(8,128)(2,1)}', space=vmem, size = 0x10000, scoped, tag = 'scratch operand']
  #allocation3 [shape = 'f32[256,128]{1,0:T(8,128)}', space=vmem, size = 0x20000, scoped, tag = 'scratch operand']
  %s0 = inlined_call_operand.vmem [shape: bf16[2,18,18,8], index: 0, kind: input, shape index: {}]
  %s1 = inlined_call_operand.vmem [shape: bf16[72,128], index: 1, kind: input, shape index: {}]
  %s2 = inlined_call_operand.vmem [shape: f32[1,128], index: 2, kind: input, shape index: {}]
  %s3 = inlined_call_operand.vmem [shape: f32[1,128], index: 3, kind: input, shape index: {}]
  %s4 = inlined_call_operand.hbm [shape: f32[2,8,8,128], index: 4, kind: output, shape index: {}]
  %s5 = sld [smem:[#allocation0]]
  $region49: #{tpu_custom_call.1} parent=0
    _
  %s7 = ssub.s32 1, %s5
  %s8 = scalar_select 0, %s7, %s5
  $region1: #{tpu_custom_call.1} parent=0
    #allocation4 [shape = 'u8[65536]{0}', space=vmem, size = 0x10000, scoped, tag = 'output window, operand 0']
    #allocation5 [shape = 's32[2]{0}', space=sflag, size = 0x8, scoped, tag = 'scoped memory for tpu_custom_call.1']
    %9 = vsyncpa [#allocation5], 0
    %s10 = scalar_lea.sflag [#allocation5], 1
    %11 = vsyncpa %s10, 0
    loop: start=0, step=1, limit=4
    $region2: #{tpu_custom_call.1} parent=1 // loop_pre_header
      _
    $region3: #{tpu_custom_call.1} parent=1 // loop_header
      %s13 = sphi 0, %s17
      %p14 = scmp.ge.s32.totalorder %s13, 4
      %s23 = sphi 0, %s25
      %s26 = sphi 0, %s23
      %s27 = sphi 0, %s26
      %s43 = sphi 0, %s27
      %s47 = sphi 0, %s47
      %s49 = sphi 0, %s47
      %s50 = sphi 0, %s49
      %s64 = sphi 0, %s50
      %s68 = sphi 0, %s68
      %s70 = sphi 0, %s68
      %s71 = sphi 0, %s70
      %s85 = sphi 0, %s71
      %s89 = sphi 0, %s89
      %s91 = sphi 0, %s89
      %s92 = sphi 0, %s91
      %s106 = sphi 0, %s92
      %s112 = sphi 0, %s114
      %s115 = sphi 0, %s112
      %s116 = sphi 0, %s115
      %s132 = sphi 0, %s116
    $region4: #{tpu_custom_call.1} parent=1 // loop_header_branch
      %16 = sbr.rel (%p14) target = $region8
    $region5: #{tpu_custom_call.1} parent=1 // loop_body
      %s18 = ssub.s32 %s13, 1
      %s19 = ssub.s32 %s13, 2
      %s20 = sadd.s32 %s13, 1
      %s21 = ssub.s32 %s13, %s20
      %p22 = scmp.eq.s32.totalorder %s21, 0
      %s24 = sadd.s32 %s23, 1
      %s25 = scalar_select %p22, %s23, %s24
      %p28 = pneg %p22
      %p29 = scmp.eq.s32.totalorder %s13, 1
      %p30 = por %p28, %p29
      %p31 = scmp.ne.s32.totalorder %s23, %s26
      %p32 = scmp.eq.s32.totalorder %s13, 0
      %p33 = por %p31, %p32
      %p34 = scmp.ne.s32.totalorder %s23, %s26
      %p35 = scmp.eq.s32.totalorder %s18, 1
      %p36 = por %p34, %p35
      %p37 = scmp.ne.s32.totalorder %s26, %s27
      %p38 = scmp.eq.s32.totalorder %s18, 0
      %p39 = por %p37, %p38
      %p40 = scmp.ne.s32.totalorder %s26, %s27
      %p41 = scmp.eq.s32.totalorder %s19, 1
      %p42 = por %p40, %p41
      %p44 = scmp.ne.s32.totalorder %s27, %s43
      %p45 = scmp.eq.s32.totalorder %s19, 0
      %p46 = por %p44, %p45
      %s48 = sadd.s32 %s47, 1
      %p51 = scmp.eq.s32.totalorder %s13, 1
      %p52 = scmp.ne.s32.totalorder %s47, %s49
      %p53 = scmp.eq.s32.totalorder %s13, 0
      %p54 = por %p52, %p53
      %p55 = scmp.ne.s32.totalorder %s47, %s49
      %p56 = scmp.eq.s32.totalorder %s18, 1
      %p57 = por %p55, %p56
      %p58 = scmp.ne.s32.totalorder %s49, %s50
      %p59 = scmp.eq.s32.totalorder %s18, 0
      %p60 = por %p58, %p59
      %p61 = scmp.ne.s32.totalorder %s49, %s50
      %p62 = scmp.eq.s32.totalorder %s19, 1
      %p63 = por %p61, %p62
      %p65 = scmp.ne.s32.totalorder %s50, %s64
      %p66 = scmp.eq.s32.totalorder %s19, 0
      %p67 = por %p65, %p66
      %s69 = sadd.s32 %s68, 1
      %p72 = scmp.eq.s32.totalorder %s13, 1
      %p73 = scmp.ne.s32.totalorder %s68, %s70
      %p74 = scmp.eq.s32.totalorder %s13, 0
      %p75 = por %p73, %p74
      %p76 = scmp.ne.s32.totalorder %s68, %s70
      %p77 = scmp.eq.s32.totalorder %s18, 1
      %p78 = por %p76, %p77
      %p79 = scmp.ne.s32.totalorder %s70, %s71
      %p80 = scmp.eq.s32.totalorder %s18, 0
      %p81 = por %p79, %p80
      %p82 = scmp.ne.s32.totalorder %s70, %s71
      %p83 = scmp.eq.s32.totalorder %s19, 1
      %p84 = por %p82, %p83
      %p86 = scmp.ne.s32.totalorder %s71, %s85
      %p87 = scmp.eq.s32.totalorder %s19, 0
      %p88 = por %p86, %p87
      %s90 = sadd.s32 %s89, 1
      %p93 = scmp.eq.s32.totalorder %s13, 1
      %p94 = scmp.ne.s32.totalorder %s89, %s91
      %p95 = scmp.eq.s32.totalorder %s13, 0
      %p96 = por %p94, %p95
      %p97 = scmp.ne.s32.totalorder %s89, %s91
      %p98 = scmp.eq.s32.totalorder %s18, 1
      %p99 = por %p97, %p98
      %p100 = scmp.ne.s32.totalorder %s91, %s92
      %p101 = scmp.eq.s32.totalorder %s18, 0
      %p102 = por %p100, %p101
      %p103 = scmp.ne.s32.totalorder %s91, %s92
      %p104 = scmp.eq.s32.totalorder %s19, 1
      %p105 = por %p103, %p104
      %p107 = scmp.ne.s32.totalorder %s92, %s106
      %p108 = scmp.eq.s32.totalorder %s19, 0
      %p109 = por %p107, %p108
      %s110 = ssub.s32 %s13, %s20
      %p111 = scmp.eq.s32.totalorder %s110, 0
      %s113 = sadd.s32 %s112, 1
      %s114 = scalar_select %p111, %s112, %s113
      %p117 = pneg %p111
      %p118 = scmp.eq.s32.totalorder %s13, 1
      %p119 = por %p117, %p118
      %p120 = scmp.ne.s32.totalorder %s112, %s115
      %p121 = scmp.eq.s32.totalorder %s13, 0
      %p122 = por %p120, %p121
      %p123 = scmp.ne.s32.totalorder %s112, %s115
      %p124 = scmp.eq.s32.totalorder %s18, 1
      %p125 = por %p123, %p124
      %p126 = scmp.ne.s32.totalorder %s115, %s116
      %p127 = scmp.eq.s32.totalorder %s18, 0
      %p128 = por %p126, %p127
      %p129 = scmp.ne.s32.totalorder %s115, %s116
      %p130 = scmp.eq.s32.totalorder %s19, 1
      %p131 = por %p129, %p130
      %p133 = scmp.ne.s32.totalorder %s116, %s132
      %p134 = scmp.eq.s32.totalorder %s19, 0
      %p135 = por %p133, %p134
      %p136 = scmp.le.s32.totalorder 1, %s13
      %p137 = scmp.lt.s32.totalorder %s13, 3
      %p138 = pnand %p136, %p137
      %p139 = pneg %p138
      // Predicated region
      $region9: #{tpu_custom_call.1} parent=5 // pred_check
        _
      $region10: #{tpu_custom_call.1} parent=5 // pred_check_branch
        %141 = sbr.rel (%p138) target = $region12
      $region11: #{tpu_custom_call.1} parent=5 // pred_region
        %s142 = ssub.s32 %s13, 1
        // Predicated region
        $region13: #{tpu_custom_call.1} parent=11 // pred_check
          %p143 = pneg %p60
        $region14: #{tpu_custom_call.1} parent=11 // pred_check_branch
          %145 = sbr.rel (%p143) target = $region16
        $region15: #{tpu_custom_call.1} parent=11 // pred_region
          _
        $region16: #{tpu_custom_call.1} parent=11 // pred_fallthru
          _
        // Predicated region
        $region17: #{tpu_custom_call.1} parent=11 // pred_check
          %p146 = pneg %p81
        $region18: #{tpu_custom_call.1} parent=11 // pred_check_branch
          %148 = sbr.rel (%p146) target = $region20
        $region19: #{tpu_custom_call.1} parent=11 // pred_region
          _
        $region20: #{tpu_custom_call.1} parent=11 // pred_fallthru
          _
        // Predicated region
        $region21: #{tpu_custom_call.1} parent=11 // pred_check
          %p149 = pneg %p102
        $region22: #{tpu_custom_call.1} parent=11 // pred_check_branch
          %151 = sbr.rel (%p149) target = $region24
        $region23: #{tpu_custom_call.1} parent=11 // pred_region
          _
        $region24: #{tpu_custom_call.1} parent=11 // pred_fallthru
          _
      $region12: #{tpu_custom_call.1} parent=5 // pred_fallthru
        _
      %p152 = scmp.lt.s32.totalorder %s13, 2
      // Predicated region
      $region25: #{tpu_custom_call.1} parent=5 // pred_check
        %p153 = pneg %p152
      $region26: #{tpu_custom_call.1} parent=5 // pred_check_branch
        %155 = sbr.rel (%p153) target = $region28
      $region27: #{tpu_custom_call.1} parent=5 // pred_region
        // Predicated region
        $region29: #{tpu_custom_call.1} parent=27 // pred_check
          %p156 = pneg %p33
        $region30: #{tpu_custom_call.1} parent=27 // pred_check_branch
          %158 = sbr.rel (%p156) target = $region32
        $region31: #{tpu_custom_call.1} parent=27 // pred_region
          %p159 = scmp.lt.s32.totalorder %s13, 1
          %s160 = scalar_select %p159, %s13, 1
          %s161 = smul.addr %s160, 54
          %s162 = smul.addr %s161, 4
          %s163 = scalar_lea.vmem %s0, %s162
        $region32: #{tpu_custom_call.1} parent=27 // pred_fallthru
          _
      $region28: #{tpu_custom_call.1} parent=5 // pred_fallthru
        _
      %p164 = scmp.le.s32.totalorder 1, %s13
      %p165 = scmp.lt.s32.totalorder %s13, 3
      %p166 = pnand %p164, %p165
      %p167 = pneg %p166
      // Predicated region
      $region33: #{tpu_custom_call.1} parent=5 // pred_check
        _
      $region34: #{tpu_custom_call.1} parent=5 // pred_check_branch
        %169 = sbr.rel (%p166) target = $region36
      $region35: #{tpu_custom_call.1} parent=5 // pred_region
        %s170 = ssub.s32 %s13, 1
        %p171 = scmp.lt.s32.totalorder %s18, 1
        %s172 = scalar_select %p171, %s18, 1
        %s173 = smul.addr %s172, 54
        %s174 = smul.addr %s173, 4
        %s175 = scalar_lea.vmem %s0, %s174
        %p176 = pneg %p39
        %p177 = pneg %p36
        %p178 = pneg %p60
        %p179 = pneg %p57
        %p180 = pneg %p81
        %p181 = pneg %p78
        %p182 = pneg %p102
        %p183 = pneg %p99
        %p184 = pneg %p128
        %p185 = pneg %p125
        %s186 = sand.u32 %s115, 1
        %s187 = scalar_lea.sflag [#allocation5], %s186
        %s188 = sand.u32 %s115, 1
        %s189 = smul.addr %s188, 64
        %s190 = scalar_lea.vmem [#allocation4], %s189
        %p191 = scmp.lt.s32.totalorder %s18, 1
        %s192 = scalar_select %p191, %s18, 1
        %s193 = smul.addr %s192, 54
        %s194 = smul.addr %s193, 4
        %s195 = scalar_lea.vmem %s0, %s194
        %v197 = vld [vmem:[%s195] sm:$0xf]
        %v198 = vld [vmem:[%s195 + $0x4] sm:$0xf]
        %v199 = vld [vmem:[%s195 + $0xc] sm:$0xf]
        %v200 = vld [vmem:[%s195 + $0x10] sm:$0xf]
        %v201 = vld [vmem:[%s195 + $0x18] sm:$0xf]
        %v202 = vld [vmem:[%s195 + $0x1c] sm:$0xf]
        %v203 = vld [vmem:[%s195 + $0x24] sm:$0xf]
        %v204 = vld [vmem:[%s195 + $0x28] sm:$0xf]
        %v205 = vld [vmem:[%s195 + $0x30] sm:$0xf]
        %v206 = vld [vmem:[%s195 + $0x34] sm:$0xf]
        %v207 = vld [vmem:[%s195 + $0x3c] sm:$0xf]
        %v208 = vld [vmem:[%s195 + $0x40] sm:$0xf]
        %v209 = vld [vmem:[%s195 + $0x48] sm:$0xf]
        %v210 = vld [vmem:[%s195 + $0x4c] sm:$0xf]
        %v211 = vld [vmem:[%s195 + $0x54] sm:$0xf]
        %v212 = vld [vmem:[%s195 + $0x58] sm:$0xf]
        %v213 = vld [vmem:[%s195 + $0x60] sm:$0xf]
        %v214 = vld [vmem:[%s195 + $0x64] sm:$0xf]
        %v215 = vld [vmem:[%s195 + $0x6c] sm:$0xf]
        %v216 = vld [vmem:[%s195 + $0x70] sm:$0xf]
        %v217 = vld [vmem:[%s195 + $0x78] sm:$0xf]
        %v218 = vld [vmem:[%s195 + $0x7c] sm:$0xf]
        %v219 = vld [vmem:[%s195 + $0x84] sm:$0xf]
        %v220 = vld [vmem:[%s195 + $0x88] sm:$0xf]
        %v221 = vld [vmem:[%s195 + $0x90] sm:$0xf]
        %v222 = vld [vmem:[%s195 + $0x94] sm:$0xf]
        %v223 = vld [vmem:[%s195 + $0x9c] sm:$0xf]
        %v224 = vld [vmem:[%s195 + $0xa0] sm:$0xf]
        %v225 = vld [vmem:[%s195 + $0xa8] sm:$0xf]
        %v226 = vld [vmem:[%s195 + $0xac] sm:$0xf]
        %v227 = vld [vmem:[%s195 + $0xb4] sm:$0xf]
        %v228 = vld [vmem:[%s195 + $0xb8] sm:$0xf]
        %vm229 = vcmask 60416
        %230 = vst.msk [vmem:[#allocation2] sm:$0xf] %vm229, %v197
        %231 = vst.msk [vmem:[#allocation2 + $0x4] sm:$0xf] %vm229, %v198
        %232 = vst.msk [vmem:[#allocation2 + $0x8] sm:$0xf] %vm229, %v199
        %233 = vst.msk [vmem:[#allocation2 + $0xc] sm:$0xf] %vm229, %v200
        %234 = vst.msk [vmem:[#allocation2 + $0x10] sm:$0xf] %vm229, %v201
        %235 = vst.msk [vmem:[#allocation2 + $0x14] sm:$0xf] %vm229, %v202
        %236 = vst.msk [vmem:[#allocation2 + $0x18] sm:$0xf] %vm229, %v203
        %237 = vst.msk [vmem:[#allocation2 + $0x1c] sm:$0xf] %vm229, %v204
        %238 = vst.msk [vmem:[#allocation2 + $0x20] sm:$0xf] %vm229, %v205
        %239 = vst.msk [vmem:[#allocation2 + $0x24] sm:$0xf] %vm229, %v206
        %240 = vst.msk [vmem:[#allocation2 + $0x28] sm:$0xf] %vm229, %v207
        %241 = vst.msk [vmem:[#allocation2 + $0x2c] sm:$0xf] %vm229, %v208
        %242 = vst.msk [vmem:[#allocation2 + $0x30] sm:$0xf] %vm229, %v209
        %243 = vst.msk [vmem:[#allocation2 + $0x34] sm:$0xf] %vm229, %v210
        %244 = vst.msk [vmem:[#allocation2 + $0x38] sm:$0xf] %vm229, %v211
        %245 = vst.msk [vmem:[#allocation2 + $0x3c] sm:$0xf] %vm229, %v212
        %246 = vst.msk [vmem:[#allocation2 + $0x40] sm:$0xf] %vm229, %v213
        %247 = vst.msk [vmem:[#allocation2 + $0x44] sm:$0xf] %vm229, %v214
        %248 = vst.msk [vmem:[#allocation2 + $0x48] sm:$0xf] %vm229, %v215
        %249 = vst.msk [vmem:[#allocation2 + $0x4c] sm:$0xf] %vm229, %v216
        %250 = vst.msk [vmem:[#allocation2 + $0x50] sm:$0xf] %vm229, %v217
        %251 = vst.msk [vmem:[#allocation2 + $0x54] sm:$0xf] %vm229, %v218
        %252 = vst.msk [vmem:[#allocation2 + $0x58] sm:$0xf] %vm229, %v219
        %253 = vst.msk [vmem:[#allocation2 + $0x5c] sm:$0xf] %vm229, %v220
        %254 = vst.msk [vmem:[#allocation2 + $0x60] sm:$0xf] %vm229, %v221
        %255 = vst.msk [vmem:[#allocation2 + $0x64] sm:$0xf] %vm229, %v222
        %256 = vst.msk [vmem:[#allocation2 + $0x68] sm:$0xf] %vm229, %v223
        %257 = vst.msk [vmem:[#allocation2 + $0x6c] sm:$0xf] %vm229, %v224
        %258 = vst.msk [vmem:[#allocation2 + $0x70] sm:$0xf] %vm229, %v225
        %259 = vst.msk [vmem:[#allocation2 + $0x74] sm:$0xf] %vm229, %v226
        %260 = vst.msk [vmem:[#allocation2 + $0x78] sm:$0xf] %vm229, %v227
        %261 = vst.msk [vmem:[#allocation2 + $0x7c] sm:$0xf] %vm229, %v228
        %v262 = vld [vmem:[%s195] sm:$0xf]
        %v263 = vld [vmem:[%s195 + $0x4] sm:$0xf]
        %v264 = vld [vmem:[%s195 + $0x8] sm:$0x1]
        %v265 = vld [vmem:[%s195 + $0xc] sm:$0xf]
        %v266 = vld [vmem:[%s195 + $0x10] sm:$0xf]
        %v267 = vld [vmem:[%s195 + $0x14] sm:$0x1]
        %v268 = vld [vmem:[%s195 + $0x18] sm:$0xf]
        %v269 = vld [vmem:[%s195 + $0x1c] sm:$0xf]
        %v270 = vld [vmem:[%s195 + $0x20] sm:$0x1]
        %v271 = vld [vmem:[%s195 + $0x24] sm:$0xf]
        %v272 = vld [vmem:[%s195 + $0x28] sm:$0xf]
        %v273 = vld [vmem:[%s195 + $0x2c] sm:$0x1]
        %v274 = vld [vmem:[%s195 + $0x30] sm:$0xf]
        %v275 = vld [vmem:[%s195 + $0x34] sm:$0xf]
        %v276 = vld [vmem:[%s195 + $0x38] sm:$0x1]
        %v277 = vld [vmem:[%s195 + $0x3c] sm:$0xf]
        %v278 = vld [vmem:[%s195 + $0x40] sm:$0xf]
        %v279 = vld [vmem:[%s195 + $0x44] sm:$0x1]
        %v280 = vld [vmem:[%s195 + $0x48] sm:$0xf]
        %v281 = vld [vmem:[%s195 + $0x4c] sm:$0xf]
        %v282 = vld [vmem:[%s195 + $0x50] sm:$0x1]
        %v283 = vld [vmem:[%s195 + $0x54] sm:$0xf]
        %v284 = vld [vmem:[%s195 + $0x58] sm:$0xf]
        %v285 = vld [vmem:[%s195 + $0x5c] sm:$0x1]
        %v286 = vld [vmem:[%s195 + $0x60] sm:$0xf]
        %v287 = vld [vmem:[%s195 + $0x64] sm:$0xf]
        %v288 = vld [vmem:[%s195 + $0x68] sm:$0x1]
        %v289 = vld [vmem:[%s195 + $0x6c] sm:$0xf]
        %v290 = vld [vmem:[%s195 + $0x70] sm:$0xf]
        %v291 = vld [vmem:[%s195 + $0x74] sm:$0x1]
        %v292 = vld [vmem:[%s195 + $0x78] sm:$0xf]
        %v293 = vld [vmem:[%s195 + $0x7c] sm:$0xf]
        %v294 = vld [vmem:[%s195 + $0x80] sm:$0x1]
        %v295 = vld [vmem:[%s195 + $0x84] sm:$0xf]
        %v296 = vld [vmem:[%s195 + $0x88] sm:$0xf]
        %v297 = vld [vmem:[%s195 + $0x8c] sm:$0x1]
        %v298 = vld [vmem:[%s195 + $0x90] sm:$0xf]
        %v299 = vld [vmem:[%s195 + $0x94] sm:$0xf]
        %v300 = vld [vmem:[%s195 + $0x98] sm:$0x1]
        %v301 = vld [vmem:[%s195 + $0x9c] sm:$0xf]
        %v302 = vld [vmem:[%s195 + $0xa0] sm:$0xf]
        %v303 = vld [vmem:[%s195 + $0xa4] sm:$0x1]
        %v304 = vld [vmem:[%s195 + $0xa8] sm:$0xf]
        %v305 = vld [vmem:[%s195 + $0xac] sm:$0xf]
        %v306 = vld [vmem:[%s195 + $0xb0] sm:$0x1]
        %v307 = vld [vmem:[%s195 + $0xb4] sm:$0xf]
        %v308 = vld [vmem:[%s195 + $0xb8] sm:$0xf]
        %v309 = vld [vmem:[%s195 + $0xbc] sm:$0x1]
        %vm310 = vsmask.f32 3328
        %vm311 = vsmask.f32 7440
        %vm312 = vmor %vm310, %vm311
        %v314 = vshrl.u32 %v262, 16
        %v316 = vrot.slane %v314, 4
        %v317 = vshll.u32 %v262, 16
        %v319 = vrot.slane %v317, 5
        %v320 = vor.u32 %v316, %v319
        %v321 = vrot.slane %v320, 4
        %v323 = vshll.u32 %v263, 16
        %v325 = vrot.slane %v323, 5
        %v326 = vsel %vm312, %v321, %v325
        %v327 = vshrl.u32 %v263, 16
        %v329 = vrot.slane %v327, 4
        %v330 = vor.u32 %v329, %v325
        %v331 = vrot.slane %v330, 4
        %v333 = vshll.u32 %v264, 16
        %v335 = vrot.slane %v333, 5
        %v336 = vsel %vm312, %v331, %v335
        %v338 = vshrl.u32 %v265, 16
        %v340 = vrot.slane %v338, 4
        %v341 = vshll.u32 %v265, 16
        %v343 = vrot.slane %v341, 5
        %v344 = vor.u32 %v340, %v343
        %v345 = vrot.slane %v344, 4
        %v347 = vshll.u32 %v266, 16
        %v349 = vrot.slane %v347, 5
        %v350 = vsel %vm312, %v345, %v349
        %v351 = vshrl.u32 %v266, 16
        %v353 = vrot.slane %v351, 4
        %v354 = vor.u32 %v353, %v349
        %v355 = vrot.slane %v354, 4
        %v357 = vshll.u32 %v267, 16
        %v359 = vrot.slane %v357, 5
        %v360 = vsel %vm312, %v355, %v359
        %v362 = vshrl.u32 %v268, 16
        %v364 = vrot.slane %v362, 4
        %v365 = vshll.u32 %v268, 16
        %v367 = vrot.slane %v365, 5
        %v368 = vor.u32 %v364, %v367
        %v369 = vrot.slane %v368, 4
        %v371 = vshll.u32 %v269, 16
        %v373 = vrot.slane %v371, 5
        %v374 = vsel %vm312, %v369, %v373
        %v375 = vshrl.u32 %v269, 16
        %v377 = vrot.slane %v375, 4
        %v378 = vor.u32 %v377, %v373
        %v379 = vrot.slane %v378, 4
        %v381 = vshll.u32 %v270, 16
        %v383 = vrot.slane %v381, 5
        %v384 = vsel %vm312, %v379, %v383
        %v386 = vshrl.u32 %v271, 16
        %v388 = vrot.slane %v386, 4
        %v389 = vshll.u32 %v271, 16
        %v391 = vrot.slane %v389, 5
        %v392 = vor.u32 %v388, %v391
        %v393 = vrot.slane %v392, 4
        %v395 = vshll.u32 %v272, 16
        %v397 = vrot.slane %v395, 5
        %v398 = vsel %vm312, %v393, %v397
        %v399 = vshrl.u32 %v272, 16
        %v401 = vrot.slane %v399, 4
        %v402 = vor.u32 %v401, %v397
        %v403 = vrot.slane %v402, 4
        %v405 = vshll.u32 %v273, 16
        %v407 = vrot.slane %v405, 5
        %v408 = vsel %vm312, %v403, %v407
        %v410 = vshrl.u32 %v274, 16
        %v412 = vrot.slane %v410, 4
        %v413 = vshll.u32 %v274, 16
        %v415 = vrot.slane %v413, 5
        %v416 = vor.u32 %v412, %v415
        %v417 = vrot.slane %v416, 4
        %v419 = vshll.u32 %v275, 16
        %v421 = vrot.slane %v419, 5
        %v422 = vsel %vm312, %v417, %v421
        %v423 = vshrl.u32 %v275, 16
        %v425 = vrot.slane %v423, 4
        %v426 = vor.u32 %v425, %v421
        %v427 = vrot.slane %v426, 4
        %v429 = vshll.u32 %v276, 16
        %v431 = vrot.slane %v429, 5
        %v432 = vsel %vm312, %v427, %v431
        %v434 = vshrl.u32 %v277, 16
        %v436 = vrot.slane %v434, 4
        %v437 = vshll.u32 %v277, 16
        %v439 = vrot.slane %v437, 5
        %v440 = vor.u32 %v436, %v439
        %v441 = vrot.slane %v440, 4
        %v443 = vshll.u32 %v278, 16
        %v445 = vrot.slane %v443, 5
        %v446 = vsel %vm312, %v441, %v445
        %v447 = vshrl.u32 %v278, 16
        %v449 = vrot.slane %v447, 4
        %v450 = vor.u32 %v449, %v445
        %v451 = vrot.slane %v450, 4
        %v453 = vshll.u32 %v279, 16
        %v455 = vrot.slane %v453, 5
        %v456 = vsel %vm312, %v451, %v455
        %v458 = vshrl.u32 %v280, 16
        %v460 = vrot.slane %v458, 4
        %v461 = vshll.u32 %v280, 16
        %v463 = vrot.slane %v461, 5
        %v464 = vor.u32 %v460, %v463
        %v465 = vrot.slane %v464, 4
        %v467 = vshll.u32 %v281, 16
        %v469 = vrot.slane %v467, 5
        %v470 = vsel %vm312, %v465, %v469
        %v471 = vshrl.u32 %v281, 16
        %v473 = vrot.slane %v471, 4
        %v474 = vor.u32 %v473, %v469
        %v475 = vrot.slane %v474, 4
        %v477 = vshll.u32 %v282, 16
        %v479 = vrot.slane %v477, 5
        %v480 = vsel %vm312, %v475, %v479
        %v482 = vshrl.u32 %v283, 16
        %v484 = vrot.slane %v482, 4
        %v485 = vshll.u32 %v283, 16
        %v487 = vrot.slane %v485, 5
        %v488 = vor.u32 %v484, %v487
        %v489 = vrot.slane %v488, 4
        %v491 = vshll.u32 %v284, 16
        %v493 = vrot.slane %v491, 5
        %v494 = vsel %vm312, %v489, %v493
        %v495 = vshrl.u32 %v284, 16
        %v497 = vrot.slane %v495, 4
        %v498 = vor.u32 %v497, %v493
        %v499 = vrot.slane %v498, 4
        %v501 = vshll.u32 %v285, 16
        %v503 = vrot.slane %v501, 5
        %v504 = vsel %vm312, %v499, %v503
        %v506 = vshrl.u32 %v286, 16
        %v508 = vrot.slane %v506, 4
        %v509 = vshll.u32 %v286, 16
        %v511 = vrot.slane %v509, 5
        %v512 = vor.u32 %v508, %v511
        %v513 = vrot.slane %v512, 4
        %v515 = vshll.u32 %v287, 16
        %v517 = vrot.slane %v515, 5
        %v518 = vsel %vm312, %v513, %v517
        %v519 = vshrl.u32 %v287, 16
        %v521 = vrot.slane %v519, 4
        %v522 = vor.u32 %v521, %v517
        %v523 = vrot.slane %v522, 4
        %v525 = vshll.u32 %v288, 16
        %v527 = vrot.slane %v525, 5
        %v528 = vsel %vm312, %v523, %v527
        %v530 = vshrl.u32 %v289, 16
        %v532 = vrot.slane %v530, 4
        %v533 = vshll.u32 %v289, 16
        %v535 = vrot.slane %v533, 5
        %v536 = vor.u32 %v532, %v535
        %v537 = vrot.slane %v536, 4
        %v539 = vshll.u32 %v290, 16
        %v541 = vrot.slane %v539, 5
        %v542 = vsel %vm312, %v537, %v541
        %v543 = vshrl.u32 %v290, 16
        %v545 = vrot.slane %v543, 4
        %v546 = vor.u32 %v545, %v541
        %v547 = vrot.slane %v546, 4
        %v549 = vshll.u32 %v291, 16
        %v551 = vrot.slane %v549, 5
        %v552 = vsel %vm312, %v547, %v551
        %v554 = vshrl.u32 %v292, 16
        %v556 = vrot.slane %v554, 4
        %v557 = vshll.u32 %v292, 16
        %v559 = vrot.slane %v557, 5
        %v560 = vor.u32 %v556, %v559
        %v561 = vrot.slane %v560, 4
        %v563 = vshll.u32 %v293, 16
        %v565 = vrot.slane %v563, 5
        %v566 = vsel %vm312, %v561, %v565
        %v567 = vshrl.u32 %v293, 16
        %v569 = vrot.slane %v567, 4
        %v570 = vor.u32 %v569, %v565
        %v571 = vrot.slane %v570, 4
        %v573 = vshll.u32 %v294, 16
        %v575 = vrot.slane %v573, 5
        %v576 = vsel %vm312, %v571, %v575
        %v578 = vshrl.u32 %v295, 16
        %v580 = vrot.slane %v578, 4
        %v581 = vshll.u32 %v295, 16
        %v583 = vrot.slane %v581, 5
        %v584 = vor.u32 %v580, %v583
        %v585 = vrot.slane %v584, 4
        %v587 = vshll.u32 %v296, 16
        %v589 = vrot.slane %v587, 5
        %v590 = vsel %vm312, %v585, %v589
        %v591 = vshrl.u32 %v296, 16
        %v593 = vrot.slane %v591, 4
        %v594 = vor.u32 %v593, %v589
        %v595 = vrot.slane %v594, 4
        %v597 = vshll.u32 %v297, 16
        %v599 = vrot.slane %v597, 5
        %v600 = vsel %vm312, %v595, %v599
        %v602 = vshrl.u32 %v298, 16
        %v604 = vrot.slane %v602, 4
        %v605 = vshll.u32 %v298, 16
        %v607 = vrot.slane %v605, 5
        %v608 = vor.u32 %v604, %v607
        %v609 = vrot.slane %v608, 4
        %v611 = vshll.u32 %v299, 16
        %v613 = vrot.slane %v611, 5
        %v614 = vsel %vm312, %v609, %v613
        %v615 = vshrl.u32 %v299, 16
        %v617 = vrot.slane %v615, 4
        %v618 = vor.u32 %v617, %v613
        %v619 = vrot.slane %v618, 4
        %v621 = vshll.u32 %v300, 16
        %v623 = vrot.slane %v621, 5
        %v624 = vsel %vm312, %v619, %v623
        %v626 = vshrl.u32 %v301, 16
        %v628 = vrot.slane %v626, 4
        %v629 = vshll.u32 %v301, 16
        %v631 = vrot.slane %v629, 5
        %v632 = vor.u32 %v628, %v631
        %v633 = vrot.slane %v632, 4
        %v635 = vshll.u32 %v302, 16
        %v637 = vrot.slane %v635, 5
        %v638 = vsel %vm312, %v633, %v637
        %v639 = vshrl.u32 %v302, 16
        %v641 = vrot.slane %v639, 4
        %v642 = vor.u32 %v641, %v637
        %v643 = vrot.slane %v642, 4
        %v645 = vshll.u32 %v303, 16
        %v647 = vrot.slane %v645, 5
        %v648 = vsel %vm312, %v643, %v647
        %v650 = vshrl.u32 %v304, 16
        %v652 = vrot.slane %v650, 4
        %v653 = vshll.u32 %v304, 16
        %v655 = vrot.slane %v653, 5
        %v656 = vor.u32 %v652, %v655
        %v657 = vrot.slane %v656, 4
        %v659 = vshll.u32 %v305, 16
        %v661 = vrot.slane %v659, 5
        %v662 = vsel %vm312, %v657, %v661
        %v663 = vshrl.u32 %v305, 16
        %v665 = vrot.slane %v663, 4
        %v666 = vor.u32 %v665, %v661
        %v667 = vrot.slane %v666, 4
        %v669 = vshll.u32 %v306, 16
        %v671 = vrot.slane %v669, 5
        %v672 = vsel %vm312, %v667, %v671
        %v674 = vshrl.u32 %v307, 16
        %v676 = vrot.slane %v674, 4
        %v677 = vshll.u32 %v307, 16
        %v679 = vrot.slane %v677, 5
        %v680 = vor.u32 %v676, %v679
        %v681 = vrot.slane %v680, 4
        %v683 = vshll.u32 %v308, 16
        %v685 = vrot.slane %v683, 5
        %v686 = vsel %vm312, %v681, %v685
        %v687 = vshrl.u32 %v308, 16
        %v689 = vrot.slane %v687, 4
        %v690 = vor.u32 %v689, %v685
        %v691 = vrot.slane %v690, 4
        %v693 = vshll.u32 %v309, 16
        %v695 = vrot.slane %v693, 5
        %v696 = vsel %vm312, %v691, %v695
        %697 = vrot.lane.b32.xlu0 %v326, 8
        %v698 = vpop.permute.xlu0 %697
        %699 = vrot.lane.b32.xlu0 %v336, 8
        %v700 = vpop.permute.xlu0 %699
        %701 = vrot.lane.b32.xlu0 %v350, 8
        %v702 = vpop.permute.xlu0 %701
        %703 = vrot.lane.b32.xlu0 %v360, 8
        %v704 = vpop.permute.xlu0 %703
        %705 = vrot.lane.b32.xlu0 %v374, 8
        %v706 = vpop.permute.xlu0 %705
        %707 = vrot.lane.b32.xlu0 %v384, 8
        %v708 = vpop.permute.xlu0 %707
        %709 = vrot.lane.b32.xlu0 %v398, 8
        %v710 = vpop.permute.xlu0 %709
        %711 = vrot.lane.b32.xlu0 %v408, 8
        %v712 = vpop.permute.xlu0 %711
        %713 = vrot.lane.b32.xlu0 %v422, 8
        %v714 = vpop.permute.xlu0 %713
        %715 = vrot.lane.b32.xlu0 %v432, 8
        %v716 = vpop.permute.xlu0 %715
        %717 = vrot.lane.b32.xlu0 %v446, 8
        %v718 = vpop.permute.xlu0 %717
        %719 = vrot.lane.b32.xlu0 %v456, 8
        %v720 = vpop.permute.xlu0 %719
        %721 = vrot.lane.b32.xlu0 %v470, 8
        %v722 = vpop.permute.xlu0 %721
        %723 = vrot.lane.b32.xlu0 %v480, 8
        %v724 = vpop.permute.xlu0 %723
        %725 = vrot.lane.b32.xlu0 %v494, 8
        %v726 = vpop.permute.xlu0 %725
        %727 = vrot.lane.b32.xlu0 %v504, 8
        %v728 = vpop.permute.xlu0 %727
        %729 = vrot.lane.b32.xlu0 %v518, 8
        %v730 = vpop.permute.xlu0 %729
        %731 = vrot.lane.b32.xlu0 %v528, 8
        %v732 = vpop.permute.xlu0 %731
        %733 = vrot.lane.b32.xlu0 %v542, 8
        %v734 = vpop.permute.xlu0 %733
        %735 = vrot.lane.b32.xlu0 %v552, 8
        %v736 = vpop.permute.xlu0 %735
        %737 = vrot.lane.b32.xlu0 %v566, 8
        %v738 = vpop.permute.xlu0 %737
        %739 = vrot.lane.b32.xlu0 %v576, 8
        %v740 = vpop.permute.xlu0 %739
        %741 = vrot.lane.b32.xlu0 %v590, 8
        %v742 = vpop.permute.xlu0 %741
        %743 = vrot.lane.b32.xlu0 %v600, 8
        %v744 = vpop.permute.xlu0 %743
        %745 = vrot.lane.b32.xlu0 %v614, 8
        %v746 = vpop.permute.xlu0 %745
        %747 = vrot.lane.b32.xlu0 %v624, 8
        %v748 = vpop.permute.xlu0 %747
        %749 = vrot.lane.b32.xlu0 %v638, 8
        %v750 = vpop.permute.xlu0 %749
        %751 = vrot.lane.b32.xlu0 %v648, 8
        %v752 = vpop.permute.xlu0 %751
        %753 = vrot.lane.b32.xlu0 %v662, 8
        %v754 = vpop.permute.xlu0 %753
        %755 = vrot.lane.b32.xlu0 %v672, 8
        %v756 = vpop.permute.xlu0 %755
        %757 = vrot.lane.b32.xlu0 %v686, 8
        %v758 = vpop.permute.xlu0 %757
        %759 = vrot.lane.b32.xlu0 %v696, 8
        %v760 = vpop.permute.xlu0 %759
        %vm793 = vcmask 126016
        %794 = vst.msk [vmem:[#allocation2] sm:$0xf] %vm793, %v698
        %795 = vst.msk [vmem:[#allocation2 + $0x4] sm:$0xf] %vm793, %v700
        %796 = vst.msk [vmem:[#allocation2 + $0x8] sm:$0xf] %vm793, %v702
        %797 = vst.msk [vmem:[#allocation2 + $0xc] sm:$0xf] %vm793, %v704
        %798 = vst.msk [vmem:[#allocation2 + $0x10] sm:$0xf] %vm793, %v706
        %799 = vst.msk [vmem:[#allocation2 + $0x14] sm:$0xf] %vm793, %v708
        %800 = vst.msk [vmem:[#allocation2 + $0x18] sm:$0xf] %vm793, %v710
        %801 = vst.msk [vmem:[#allocation2 + $0x1c] sm:$0xf] %vm793, %v712
        %802 = vst.msk [vmem:[#allocation2 + $0x20] sm:$0xf] %vm793, %v714
        %803 = vst.msk [vmem:[#allocation2 + $0x24] sm:$0xf] %vm793, %v716
        %804 = vst.msk [vmem:[#allocation2 + $0x28] sm:$0xf] %vm793, %v718
        %805 = vst.msk [vmem:[#allocation2 + $0x2c] sm:$0xf] %vm793, %v720
        %806 = vst.msk [vmem:[#allocation2 + $0x30] sm:$0xf] %vm793, %v722
        %807 = vst.msk [vmem:[#allocation2 + $0x34] sm:$0xf] %vm793, %v724
        %808 = vst.msk [vmem:[#allocation2 + $0x38] sm:$0xf] %vm793, %v726
        %809 = vst.msk [vmem:[#allocation2 + $0x3c] sm:$0xf] %vm793, %v728
        %810 = vst.msk [vmem:[#allocation2 + $0x40] sm:$0xf] %vm793, %v730
        %811 = vst.msk [vmem:[#allocation2 + $0x44] sm:$0xf] %vm793, %v732
        %812 = vst.msk [vmem:[#allocation2 + $0x48] sm:$0xf] %vm793, %v734
        %813 = vst.msk [vmem:[#allocation2 + $0x4c] sm:$0xf] %vm793, %v736
        %814 = vst.msk [vmem:[#allocation2 + $0x50] sm:$0xf] %vm793, %v738
        %815 = vst.msk [vmem:[#allocation2 + $0x54] sm:$0xf] %vm793, %v740
        %816 = vst.msk [vmem:[#allocation2 + $0x58] sm:$0xf] %vm793, %v742
        %817 = vst.msk [vmem:[#allocation2 + $0x5c] sm:$0xf] %vm793, %v744
        %818 = vst.msk [vmem:[#allocation2 + $0x60] sm:$0xf] %vm793, %v746
        %819 = vst.msk [vmem:[#allocation2 + $0x64] sm:$0xf] %vm793, %v748
        %820 = vst.msk [vmem:[#allocation2 + $0x68] sm:$0xf] %vm793, %v750
        %821 = vst.msk [vmem:[#allocation2 + $0x6c] sm:$0xf] %vm793, %v752
        %822 = vst.msk [vmem:[#allocation2 + $0x70] sm:$0xf] %vm793, %v754
        %823 = vst.msk [vmem:[#allocation2 + $0x74] sm:$0xf] %vm793, %v756
        %824 = vst.msk [vmem:[#allocation2 + $0x78] sm:$0xf] %vm793, %v758
        %825 = vst.msk [vmem:[#allocation2 + $0x7c] sm:$0xf] %vm793, %v760
        %v826 = vld [vmem:[%s195] sm:$0xe]
        %v827 = vld [vmem:[%s195 + $0x4] sm:$0xf]
        %v828 = vld [vmem:[%s195 + $0x8] sm:$0x1]
        %v829 = vld [vmem:[%s195 + $0xc] sm:$0xe]
        %v830 = vld [vmem:[%s195 + $0x10] sm:$0xf]
        %v831 = vld [vmem:[%s195 + $0x14] sm:$0x1]
        %v832 = vld [vmem:[%s195 + $0x18] sm:$0xe]
        %v833 = vld [vmem:[%s195 + $0x1c] sm:$0xf]
        %v834 = vld [vmem:[%s195 + $0x20] sm:$0x1]
        %v835 = vld [vmem:[%s195 + $0x24] sm:$0xe]
        %v836 = vld [vmem:[%s195 + $0x28] sm:$0xf]
        %v837 = vld [vmem:[%s195 + $0x2c] sm:$0x1]
        %v838 = vld [vmem:[%s195 + $0x30] sm:$0xe]
        %v839 = vld [vmem:[%s195 + $0x34] sm:$0xf]
        %v840 = vld [vmem:[%s195 + $0x38] sm:$0x1]
        %v841 = vld [vmem:[%s195 + $0x3c] sm:$0xe]
        %v842 = vld [vmem:[%s195 + $0x40] sm:$0xf]
        %v843 = vld [vmem:[%s195 + $0x44] sm:$0x1]
        %v844 = vld [vmem:[%s195 + $0x48] sm:$0xe]
        %v845 = vld [vmem:[%s195 + $0x4c] sm:$0xf]
        %v846 = vld [vmem:[%s195 + $0x50] sm:$0x1]
        %v847 = vld [vmem:[%s195 + $0x54] sm:$0xe]
        %v848 = vld [vmem:[%s195 + $0x58] sm:$0xf]
        %v849 = vld [vmem:[%s195 + $0x5c] sm:$0x1]
        %v850 = vld [vmem:[%s195 + $0x60] sm:$0xe]
        %v851 = vld [vmem:[%s195 + $0x64] sm:$0xf]
        %v852 = vld [vmem:[%s195 + $0x68] sm:$0x1]
        %v853 = vld [vmem:[%s195 + $0x6c] sm:$0xe]
        %v854 = vld [vmem:[%s195 + $0x70] sm:$0xf]
        %v855 = vld [vmem:[%s195 + $0x74] sm:$0x1]
        %v856 = vld [vmem:[%s195 + $0x78] sm:$0xe]
        %v857 = vld [vmem:[%s195 + $0x7c] sm:$0xf]
        %v858 = vld [vmem:[%s195 + $0x80] sm:$0x1]
        %v859 = vld [vmem:[%s195 + $0x84] sm:$0xe]
        %v860 = vld [vmem:[%s195 + $0x88] sm:$0xf]
        %v861 = vld [vmem:[%s195 + $0x8c] sm:$0x1]
        %v862 = vld [vmem:[%s195 + $0x90] sm:$0xe]
        %v863 = vld [vmem:[%s195 + $0x94] sm:$0xf]
        %v864 = vld [vmem:[%s195 + $0x98] sm:$0x1]
        %v865 = vld [vmem:[%s195 + $0x9c] sm:$0xe]
        %v866 = vld [vmem:[%s195 + $0xa0] sm:$0xf]
        %v867 = vld [vmem:[%s195 + $0xa4] sm:$0x1]
        %v868 = vld [vmem:[%s195 + $0xa8] sm:$0xe]
        %v869 = vld [vmem:[%s195 + $0xac] sm:$0xf]
        %v870 = vld [vmem:[%s195 + $0xb0] sm:$0x1]
        %v871 = vld [vmem:[%s195 + $0xb4] sm:$0xe]
        %v872 = vld [vmem:[%s195 + $0xb8] sm:$0xf]
        %v873 = vld [vmem:[%s195 + $0xbc] sm:$0x1]
        %vm922 = vcmask 1042432
        %vm923 = vcmask 1046532
        %vm924 = vmor %vm922, %vm923
        %v925 = vrot.slane %v826, 5
        %v926 = vrot.slane %v925, 4
        %v927 = vrot.slane %v827, 5
        %v928 = vsel %vm924, %v926, %v927
        %v929 = vrot.slane %v927, 4
        %v930 = vrot.slane %v828, 5
        %v931 = vsel %vm924, %v929, %v930
        %v932 = vrot.slane %v829, 5
        %v933 = vrot.slane %v932, 4
        %v934 = vrot.slane %v830, 5
        %v935 = vsel %vm924, %v933, %v934
        %v936 = vrot.slane %v934, 4
        %v937 = vrot.slane %v831, 5
        %v938 = vsel %vm924, %v936, %v937
        %v939 = vrot.slane %v832, 5
        %v940 = vrot.slane %v939, 4
        %v941 = vrot.slane %v833, 5
        %v942 = vsel %vm924, %v940, %v941
        %v943 = vrot.slane %v941, 4
        %v944 = vrot.slane %v834, 5
        %v945 = vsel %vm924, %v943, %v944
        %v946 = vrot.slane %v835, 5
        %v947 = vrot.slane %v946, 4
        %v948 = vrot.slane %v836, 5
        %v949 = vsel %vm924, %v947, %v948
        %v950 = vrot.slane %v948, 4
        %v951 = vrot.slane %v837, 5
        %v952 = vsel %vm924, %v950, %v951
        %v953 = vrot.slane %v838, 5
        %v954 = vrot.slane %v953, 4
        %v955 = vrot.slane %v839, 5
        %v956 = vsel %vm924, %v954, %v955
        %v957 = vrot.slane %v955, 4
        %v958 = vrot.slane %v840, 5
        %v959 = vsel %vm924, %v957, %v958
        %v960 = vrot.slane %v841, 5
        %v961 = vrot.slane %v960, 4
        %v962 = vrot.slane %v842, 5
        %v963 = vsel %vm924, %v961, %v962
        %v964 = vrot.slane %v962, 4
        %v965 = vrot.slane %v843, 5
        %v966 = vsel %vm924, %v964, %v965
        %v967 = vrot.slane %v844, 5
        %v968 = vrot.slane %v967, 4
        %v969 = vrot.slane %v845, 5
        %v970 = vsel %vm924, %v968, %v969
        %v971 = vrot.slane %v969, 4
        %v972 = vrot.slane %v846, 5
        %v973 = vsel %vm924, %v971, %v972
        %v974 = vrot.slane %v847, 5
        %v975 = vrot.slane %v974, 4
        %v976 = vrot.slane %v848, 5
        %v977 = vsel %vm924, %v975, %v976
        %v978 = vrot.slane %v976, 4
        %v979 = vrot.slane %v849, 5
        %v980 = vsel %vm924, %v978, %v979
        %v981 = vrot.slane %v850, 5
        %v982 = vrot.slane %v981, 4
        %v983 = vrot.slane %v851, 5
        %v984 = vsel %vm924, %v982, %v983
        %v985 = vrot.slane %v983, 4
        %v986 = vrot.slane %v852, 5
        %v987 = vsel %vm924, %v985, %v986
        %v988 = vrot.slane %v853, 5
        %v989 = vrot.slane %v988, 4
        %v990 = vrot.slane %v854, 5
        %v991 = vsel %vm924, %v989, %v990
        %v992 = vrot.slane %v990, 4
        %v993 = vrot.slane %v855, 5
        %v994 = vsel %vm924, %v992, %v993
        %v995 = vrot.slane %v856, 5
        %v996 = vrot.slane %v995, 4
        %v997 = vrot.slane %v857, 5
        %v998 = vsel %vm924, %v996, %v997
        %v999 = vrot.slane %v997, 4
        %v1000 = vrot.slane %v858, 5
        %v1001 = vsel %vm924, %v999, %v1000
        %v1002 = vrot.slane %v859, 5
        %v1003 = vrot.slane %v1002, 4
        %v1004 = vrot.slane %v860, 5
        %v1005 = vsel %vm924, %v1003, %v1004
        %v1006 = vrot.slane %v1004, 4
        %v1007 = vrot.slane %v861, 5
        %v1008 = vsel %vm924, %v1006, %v1007
        %v1009 = vrot.slane %v862, 5
        %v1010 = vrot.slane %v1009, 4
        %v1011 = vrot.slane %v863, 5
        %v1012 = vsel %vm924, %v1010, %v1011
        %v1013 = vrot.slane %v1011, 4
        %v1014 = vrot.slane %v864, 5
        %v1015 = vsel %vm924, %v1013, %v1014
        %v1016 = vrot.slane %v865, 5
        %v1017 = vrot.slane %v1016, 4
        %v1018 = vrot.slane %v866, 5
        %v1019 = vsel %vm924, %v1017, %v1018
        %v1020 = vrot.slane %v1018, 4
        %v1021 = vrot.slane %v867, 5
        %v1022 = vsel %vm924, %v1020, %v1021
        %v1023 = vrot.slane %v868, 5
        %v1024 = vrot.slane %v1023, 4
        %v1025 = vrot.slane %v869, 5
        %v1026 = vsel %vm924, %v1024, %v1025
        %v1027 = vrot.slane %v1025, 4
        %v1028 = vrot.slane %v870, 5
        %v1029 = vsel %vm924, %v1027, %v1028
        %v1030 = vrot.slane %v871, 5
        %v1031 = vrot.slane %v1030, 4
        %v1032 = vrot.slane %v872, 5
        %v1033 = vsel %vm924, %v1031, %v1032
        %v1034 = vrot.slane %v1032, 4
        %v1035 = vrot.slane %v873, 5
        %v1036 = vsel %vm924, %v1034, %v1035
        %1037 = vrot.lane.b32.xlu0 %v928, 16
        %v1038 = vpop.permute.xlu0 %1037
        %1039 = vrot.lane.b32.xlu0 %v931, 16
        %v1040 = vpop.permute.xlu0 %1039
        %1041 = vrot.lane.b32.xlu0 %v935, 16
        %v1042 = vpop.permute.xlu0 %1041
        %1043 = vrot.lane.b32.xlu0 %v938, 16
        %v1044 = vpop.permute.xlu0 %1043
        %1045 = vrot.lane.b32.xlu0 %v942, 16
        %v1046 = vpop.permute.xlu0 %1045
        %1047 = vrot.lane.b32.xlu0 %v945, 16
        %v1048 = vpop.permute.xlu0 %1047
        %1049 = vrot.lane.b32.xlu0 %v949, 16
        %v1050 = vpop.permute.xlu0 %1049
        %1051 = vrot.lane.b32.xlu0 %v952, 16
        %v1052 = vpop.permute.xlu0 %1051
        %1053 = vrot.lane.b32.xlu0 %v956, 16
        %v1054 = vpop.permute.xlu0 %1053
        %1055 = vrot.lane.b32.xlu0 %v959, 16
        %v1056 = vpop.permute.xlu0 %1055
        %1057 = vrot.lane.b32.xlu0 %v963, 16
        %v1058 = vpop.permute.xlu0 %1057
        %1059 = vrot.lane.b32.xlu0 %v966, 16
        %v1060 = vpop.permute.xlu0 %1059
        %1061 = vrot.lane.b32.xlu0 %v970, 16
        %v1062 = vpop.permute.xlu0 %1061
        %1063 = vrot.lane.b32.xlu0 %v973, 16
        %v1064 = vpop.permute.xlu0 %1063
        %1065 = vrot.lane.b32.xlu0 %v977, 16
        %v1066 = vpop.permute.xlu0 %1065
        %1067 = vrot.lane.b32.xlu0 %v980, 16
        %v1068 = vpop.permute.xlu0 %1067
        %1069 = vrot.lane.b32.xlu0 %v984, 16
        %v1070 = vpop.permute.xlu0 %1069
        %1071 = vrot.lane.b32.xlu0 %v987, 16
        %v1072 = vpop.permute.xlu0 %1071
        %1073 = vrot.lane.b32.xlu0 %v991, 16
        %v1074 = vpop.permute.xlu0 %1073
        %1075 = vrot.lane.b32.xlu0 %v994, 16
        %v1076 = vpop.permute.xlu0 %1075
        %1077 = vrot.lane.b32.xlu0 %v998, 16
        %v1078 = vpop.permute.xlu0 %1077
        %1079 = vrot.lane.b32.xlu0 %v1001, 16
        %v1080 = vpop.permute.xlu0 %1079
        %1081 = vrot.lane.b32.xlu0 %v1005, 16
        %v1082 = vpop.permute.xlu0 %1081
        %1083 = vrot.lane.b32.xlu0 %v1008, 16
        %v1084 = vpop.permute.xlu0 %1083
        %1085 = vrot.lane.b32.xlu0 %v1012, 16
        %v1086 = vpop.permute.xlu0 %1085
        %1087 = vrot.lane.b32.xlu0 %v1015, 16
        %v1088 = vpop.permute.xlu0 %1087
        %1089 = vrot.lane.b32.xlu0 %v1019, 16
        %v1090 = vpop.permute.xlu0 %1089
        %1091 = vrot.lane.b32.xlu0 %v1022, 16
        %v1092 = vpop.permute.xlu0 %1091
        %1093 = vrot.lane.b32.xlu0 %v1026, 16
        %v1094 = vpop.permute.xlu0 %1093
        %1095 = vrot.lane.b32.xlu0 %v1029, 16
        %v1096 = vpop.permute.xlu0 %1095
        %1097 = vrot.lane.b32.xlu0 %v1033, 16
        %v1098 = vpop.permute.xlu0 %1097
        %1099 = vrot.lane.b32.xlu0 %v1036, 16
        %v1100 = vpop.permute.xlu0 %1099
        %vm1133 = vcmask 191616
        %1134 = vst.msk [vmem:[#allocation2] sm:$0xf] %vm1133, %v1038
        %1135 = vst.msk [vmem:[#allocation2 + $0x4] sm:$0xf] %vm1133, %v1040
        %1136 = vst.msk [vmem:[#allocation2 + $0x8] sm:$0xf] %vm1133, %v1042
        %1137 = vst.msk [vmem:[#allocation2 + $0xc] sm:$0xf] %vm1133, %v1044
        %1138 = vst.msk [vmem:[#allocation2 + $0x10] sm:$0xf] %vm1133, %v1046
        %1139 = vst.msk [vmem:[#allocation2 + $0x14] sm:$0xf] %vm1133, %v1048
        %1140 = vst.msk [vmem:[#allocation2 + $0x18] sm:$0xf] %vm1133, %v1050
        %1141 = vst.msk [vmem:[#allocation2 + $0x1c] sm:$0xf] %vm1133, %v1052
        %1142 = vst.msk [vmem:[#allocation2 + $0x20] sm:$0xf] %vm1133, %v1054
        %1143 = vst.msk [vmem:[#allocation2 + $0x24] sm:$0xf] %vm1133, %v1056
        %1144 = vst.msk [vmem:[#allocation2 + $0x28] sm:$0xf] %vm1133, %v1058
        %1145 = vst.msk [vmem:[#allocation2 + $0x2c] sm:$0xf] %vm1133, %v1060
        %1146 = vst.msk [vmem:[#allocation2 + $0x30] sm:$0xf] %vm1133, %v1062
        %1147 = vst.msk [vmem:[#allocation2 + $0x34] sm:$0xf] %vm1133, %v1064
        %1148 = vst.msk [vmem:[#allocation2 + $0x38] sm:$0xf] %vm1133, %v1066
        %1149 = vst.msk [vmem:[#allocation2 + $0x3c] sm:$0xf] %vm1133, %v1068
        %1150 = vst.msk [vmem:[#allocation2 + $0x40] sm:$0xf] %vm1133, %v1070
        %1151 = vst.msk [vmem:[#allocation2 + $0x44] sm:$0xf] %vm1133, %v1072
        %1152 = vst.msk [vmem:[#allocation2 + $0x48] sm:$0xf] %vm1133, %v1074
        %1153 = vst.msk [vmem:[#allocation2 + $0x4c] sm:$0xf] %vm1133, %v1076
        %1154 = vst.msk [vmem:[#allocation2 + $0x50] sm:$0xf] %vm1133, %v1078
        %1155 = vst.msk [vmem:[#allocation2 + $0x54] sm:$0xf] %vm1133, %v1080
        %1156 = vst.msk [vmem:[#allocation2 + $0x58] sm:$0xf] %vm1133, %v1082
        %1157 = vst.msk [vmem:[#allocation2 + $0x5c] sm:$0xf] %vm1133, %v1084
        %1158 = vst.msk [vmem:[#allocation2 + $0x60] sm:$0xf] %vm1133, %v1086
        %1159 = vst.msk [vmem:[#allocation2 + $0x64] sm:$0xf] %vm1133, %v1088
        %1160 = vst.msk [vmem:[#allocation2 + $0x68] sm:$0xf] %vm1133, %v1090
        %1161 = vst.msk [vmem:[#allocation2 + $0x6c] sm:$0xf] %vm1133, %v1092
        %1162 = vst.msk [vmem:[#allocation2 + $0x70] sm:$0xf] %vm1133, %v1094
        %1163 = vst.msk [vmem:[#allocation2 + $0x74] sm:$0xf] %vm1133, %v1096
        %1164 = vst.msk [vmem:[#allocation2 + $0x78] sm:$0xf] %vm1133, %v1098
        %1165 = vst.msk [vmem:[#allocation2 + $0x7c] sm:$0xf] %vm1133, %v1100
        %s1166 = scalar_lea.vmem %s195, 12
        %v1167 = vld [vmem:[%s1166] sm:$0xf]
        %v1168 = vld [vmem:[%s1166 + $0x4] sm:$0xf]
        %v1169 = vld [vmem:[%s1166 + $0xc] sm:$0xf]
        %v1170 = vld [vmem:[%s1166 + $0x10] sm:$0xf]
        %v1171 = vld [vmem:[%s1166 + $0x18] sm:$0xf]
        %v1172 = vld [vmem:[%s1166 + $0x1c] sm:$0xf]
        %v1173 = vld [vmem:[%s1166 + $0x24] sm:$0xf]
        %v1174 = vld [vmem:[%s1166 + $0x28] sm:$0xf]
        %v1175 = vld [vmem:[%s1166 + $0x30] sm:$0xf]
        %v1176 = vld [vmem:[%s1166 + $0x34] sm:$0xf]
        %v1177 = vld [vmem:[%s1166 + $0x3c] sm:$0xf]
        %v1178 = vld [vmem:[%s1166 + $0x40] sm:$0xf]
        %v1179 = vld [vmem:[%s1166 + $0x48] sm:$0xf]
        %v1180 = vld [vmem:[%s1166 + $0x4c] sm:$0xf]
        %v1181 = vld [vmem:[%s1166 + $0x54] sm:$0xf]
        %v1182 = vld [vmem:[%s1166 + $0x58] sm:$0xf]
        %v1183 = vld [vmem:[%s1166 + $0x60] sm:$0xf]
        %v1184 = vld [vmem:[%s1166 + $0x64] sm:$0xf]
        %v1185 = vld [vmem:[%s1166 + $0x6c] sm:$0xf]
        %v1186 = vld [vmem:[%s1166 + $0x70] sm:$0xf]
        %v1187 = vld [vmem:[%s1166 + $0x78] sm:$0xf]
        %v1188 = vld [vmem:[%s1166 + $0x7c] sm:$0xf]
        %v1189 = vld [vmem:[%s1166 + $0x84] sm:$0xf]
        %v1190 = vld [vmem:[%s1166 + $0x88] sm:$0xf]
        %v1191 = vld [vmem:[%s1166 + $0x90] sm:$0xf]
        %v1192 = vld [vmem:[%s1166 + $0x94] sm:$0xf]
        %v1193 = vld [vmem:[%s1166 + $0x9c] sm:$0xf]
        %v1194 = vld [vmem:[%s1166 + $0xa0] sm:$0xf]
        %v1195 = vld [vmem:[%s1166 + $0xa8] sm:$0xf]
        %v1196 = vld [vmem:[%s1166 + $0xac] sm:$0xf]
        %v1197 = vld [vmem:[%s1166 + $0xb4] sm:$0xf]
        %v1198 = vld [vmem:[%s1166 + $0xb8] sm:$0xf]
        %1231 = vrot.lane.b32.xlu0 %v1167, 24
        %v1232 = vpop.permute.xlu0 %1231
        %1233 = vrot.lane.b32.xlu0 %v1168, 24
        %v1234 = vpop.permute.xlu0 %1233
        %1235 = vrot.lane.b32.xlu0 %v1169, 24
        %v1236 = vpop.permute.xlu0 %1235
        %1237 = vrot.lane.b32.xlu0 %v1170, 24
        %v1238 = vpop.permute.xlu0 %1237
        %1239 = vrot.lane.b32.xlu0 %v1171, 24
        %v1240 = vpop.permute.xlu0 %1239
        %1241 = vrot.lane.b32.xlu0 %v1172, 24
        %v1242 = vpop.permute.xlu0 %1241
        %1243 = vrot.lane.b32.xlu0 %v1173, 24
        %v1244 = vpop.permute.xlu0 %1243
        %1245 = vrot.lane.b32.xlu0 %v1174, 24
        %v1246 = vpop.permute.xlu0 %1245
        %1247 = vrot.lane.b32.xlu0 %v1175, 24
        %v1248 = vpop.permute.xlu0 %1247
        %1249 = vrot.lane.b32.xlu0 %v1176, 24
        %v1250 = vpop.permute.xlu0 %1249
        %1251 = vrot.lane.b32.xlu0 %v1177, 24
        %v1252 = vpop.permute.xlu0 %1251
        %1253 = vrot.lane.b32.xlu0 %v1178, 24
        %v1254 = vpop.permute.xlu0 %1253
        %1255 = vrot.lane.b32.xlu0 %v1179, 24
        %v1256 = vpop.permute.xlu0 %1255
        %1257 = vrot.lane.b32.xlu0 %v1180, 24
        %v1258 = vpop.permute.xlu0 %1257
        %1259 = vrot.lane.b32.xlu0 %v1181, 24
        %v1260 = vpop.permute.xlu0 %1259
        %1261 = vrot.lane.b32.xlu0 %v1182, 24
        %v1262 = vpop.permute.xlu0 %1261
        %1263 = vrot.lane.b32.xlu0 %v1183, 24
        %v1264 = vpop.permute.xlu0 %1263
        %1265 = vrot.lane.b32.xlu0 %v1184, 24
        %v1266 = vpop.permute.xlu0 %1265
        %1267 = vrot.lane.b32.xlu0 %v1185, 24
        %v1268 = vpop.permute.xlu0 %1267
        %1269 = vrot.lane.b32.xlu0 %v1186, 24
        %v1270 = vpop.permute.xlu0 %1269
        %1271 = vrot.lane.b32.xlu0 %v1187, 24
        %v1272 = vpop.permute.xlu0 %1271
        %1273 = vrot.lane.b32.xlu0 %v1188, 24
        %v1274 = vpop.permute.xlu0 %1273
        %1275 = vrot.lane.b32.xlu0 %v1189, 24
        %v1276 = vpop.permute.xlu0 %1275
        %1277 = vrot.lane.b32.xlu0 %v1190, 24
        %v1278 = vpop.permute.xlu0 %1277
        %1279 = vrot.lane.b32.xlu0 %v1191, 24
        %v1280 = vpop.permute.xlu0 %1279
        %1281 = vrot.lane.b32.xlu0 %v1192, 24
        %v1282 = vpop.permute.xlu0 %1281
        %1283 = vrot.lane.b32.xlu0 %v1193, 24
        %v1284 = vpop.permute.xlu0 %1283
        %1285 = vrot.lane.b32.xlu0 %v1194, 24
        %v1286 = vpop.permute.xlu0 %1285
        %1287 = vrot.lane.b32.xlu0 %v1195, 24
        %v1288 = vpop.permute.xlu0 %1287
        %1289 = vrot.lane.b32.xlu0 %v1196, 24
        %v1290 = vpop.permute.xlu0 %1289
        %1291 = vrot.lane.b32.xlu0 %v1197, 24
        %v1292 = vpop.permute.xlu0 %1291
        %1293 = vrot.lane.b32.xlu0 %v1198, 24
        %v1294 = vpop.permute.xlu0 %1293
        %vm1327 = vcmask 257216
        %1328 = vst.msk [vmem:[#allocation2] sm:$0xf] %vm1327, %v1232
        %1329 = vst.msk [vmem:[#allocation2 + $0x4] sm:$0xf] %vm1327, %v1234
        %1330 = vst.msk [vmem:[#allocation2 + $0x8] sm:$0xf] %vm1327, %v1236
        %1331 = vst.msk [vmem:[#allocation2 + $0xc] sm:$0xf] %vm1327, %v1238
        %1332 = vst.msk [vmem:[#allocation2 + $0x10] sm:$0xf] %vm1327, %v1240
        %1333 = vst.msk [vmem:[#allocation2 + $0x14] sm:$0xf] %vm1327, %v1242
        %1334 = vst.msk [vmem:[#allocation2 + $0x18] sm:$0xf] %vm1327, %v1244
        %1335 = vst.msk [vmem:[#allocation2 + $0x1c] sm:$0xf] %vm1327, %v1246
        %1336 = vst.msk [vmem:[#allocation2 + $0x20] sm:$0xf] %vm1327, %v1248
        %1337 = vst.msk [vmem:[#allocation2 + $0x24] sm:$0xf] %vm1327, %v1250
        %1338 = vst.msk [vmem:[#allocation2 + $0x28] sm:$0xf] %vm1327, %v1252
        %1339 = vst.msk [vmem:[#allocation2 + $0x2c] sm:$0xf] %vm1327, %v1254
        %1340 = vst.msk [vmem:[#allocation2 + $0x30] sm:$0xf] %vm1327, %v1256
        %1341 = vst.msk [vmem:[#allocation2 + $0x34] sm:$0xf] %vm1327, %v1258
        %1342 = vst.msk [vmem:[#allocation2 + $0x38] sm:$0xf] %vm1327, %v1260
        %1343 = vst.msk [vmem:[#allocation2 + $0x3c] sm:$0xf] %vm1327, %v1262
        %1344 = vst.msk [vmem:[#allocation2 + $0x40] sm:$0xf] %vm1327, %v1264
        %1345 = vst.msk [vmem:[#allocation2 + $0x44] sm:$0xf] %vm1327, %v1266
        %1346 = vst.msk [vmem:[#allocation2 + $0x48] sm:$0xf] %vm1327, %v1268
        %1347 = vst.msk [vmem:[#allocation2 + $0x4c] sm:$0xf] %vm1327, %v1270
        %1348 = vst.msk [vmem:[#allocation2 + $0x50] sm:$0xf] %vm1327, %v1272
        %1349 = vst.msk [vmem:[#allocation2 + $0x54] sm:$0xf] %vm1327, %v1274
        %1350 = vst.msk [vmem:[#allocation2 + $0x58] sm:$0xf] %vm1327, %v1276
        %1351 = vst.msk [vmem:[#allocation2 + $0x5c] sm:$0xf] %vm1327, %v1278
        %1352 = vst.msk [vmem:[#allocation2 + $0x60] sm:$0xf] %vm1327, %v1280
        %1353 = vst.msk [vmem:[#allocation2 + $0x64] sm:$0xf] %vm1327, %v1282
        %1354 = vst.msk [vmem:[#allocation2 + $0x68] sm:$0xf] %vm1327, %v1284
        %1355 = vst.msk [vmem:[#allocation2 + $0x6c] sm:$0xf] %vm1327, %v1286
        %1356 = vst.msk [vmem:[#allocation2 + $0x70] sm:$0xf] %vm1327, %v1288
        %1357 = vst.msk [vmem:[#allocation2 + $0x74] sm:$0xf] %vm1327, %v1290
        %1358 = vst.msk [vmem:[#allocation2 + $0x78] sm:$0xf] %vm1327, %v1292
        %1359 = vst.msk [vmem:[#allocation2 + $0x7c] sm:$0xf] %vm1327, %v1294
        %v1360 = vld [vmem:[%s1166] sm:$0xf]
        %v1361 = vld [vmem:[%s1166 + $0x4] sm:$0xf]
        %v1362 = vld [vmem:[%s1166 + $0x8] sm:$0x1]
        %v1363 = vld [vmem:[%s1166 + $0xc] sm:$0xf]
        %v1364 = vld [vmem:[%s1166 + $0x10] sm:$0xf]
        %v1365 = vld [vmem:[%s1166 + $0x14] sm:$0x1]
        %v1366 = vld [vmem:[%s1166 + $0x18] sm:$0xf]
        %v1367 = vld [vmem:[%s1166 + $0x1c] sm:$0xf]
        %v1368 = vld [vmem:[%s1166 + $0x20] sm:$0x1]
        %v1369 = vld [vmem:[%s1166 + $0x24] sm:$0xf]
        %v1370 = vld [vmem:[%s1166 + $0x28] sm:$0xf]
        %v1371 = vld [vmem:[%s1166 + $0x2c] sm:$0x1]
        %v1372 = vld [vmem:[%s1166 + $0x30] sm:$0xf]
        %v1373 = vld [vmem:[%s1166 + $0x34] sm:$0xf]
        %v1374 = vld [vmem:[%s1166 + $0x38] sm:$0x1]
        %v1375 = vld [vmem:[%s1166 + $0x3c] sm:$0xf]
        %v1376 = vld [vmem:[%s1166 + $0x40] sm:$0xf]
        %v1377 = vld [vmem:[%s1166 + $0x44] sm:$0x1]
        %v1378 = vld [vmem:[%s1166 + $0x48] sm:$0xf]
        %v1379 = vld [vmem:[%s1166 + $0x4c] sm:$0xf]
        %v1380 = vld [vmem:[%s1166 + $0x50] sm:$0x1]
        %v1381 = vld [vmem:[%s1166 + $0x54] sm:$0xf]
        %v1382 = vld [vmem:[%s1166 + $0x58] sm:$0xf]
        %v1383 = vld [vmem:[%s1166 + $0x5c] sm:$0x1]
        %v1384 = vld [vmem:[%s1166 + $0x60] sm:$0xf]
        %v1385 = vld [vmem:[%s1166 + $0x64] sm:$0xf]
        %v1386 = vld [vmem:[%s1166 + $0x68] sm:$0x1]
        %v1387 = vld [vmem:[%s1166 + $0x6c] sm:$0xf]
        %v1388 = vld [vmem:[%s1166 + $0x70] sm:$0xf]
        %v1389 = vld [vmem:[%s1166 + $0x74] sm:$0x1]
        %v1390 = vld [vmem:[%s1166 + $0x78] sm:$0xf]
        %v1391 = vld [vmem:[%s1166 + $0x7c] sm:$0xf]
        %v1392 = vld [vmem:[%s1166 + $0x80] sm:$0x1]
        %v1393 = vld [vmem:[%s1166 + $0x84] sm:$0xf]
        %v1394 = vld [vmem:[%s1166 + $0x88] sm:$0xf]
        %v1395 = vld [vmem:[%s1166 + $0x8c] sm:$0x1]
        %v1396 = vld [vmem:[%s1166 + $0x90] sm:$0xf]
        %v1397 = vld [vmem:[%s1166 + $0x94] sm:$0xf]
        %v1398 = vld [vmem:[%s1166 + $0x98] sm:$0x1]
        %v1399 = vld [vmem:[%s1166 + $0x9c] sm:$0xf]
        %v1400 = vld [vmem:[%s1166 + $0xa0] sm:$0xf]
        %v1401 = vld [vmem:[%s1166 + $0xa4] sm:$0x1]
        %v1402 = vld [vmem:[%s1166 + $0xa8] sm:$0xf]
        %v1403 = vld [vmem:[%s1166 + $0xac] sm:$0xf]
        %v1404 = vld [vmem:[%s1166 + $0xb0] sm:$0x1]
        %v1405 = vld [vmem:[%s1166 + $0xb4] sm:$0xf]
        %v1406 = vld [vmem:[%s1166 + $0xb8] sm:$0xf]
        %v1407 = vld [vmem:[%s1166 + $0xbc] sm:$0x1]
        %v1409 = vshrl.u32 %v1360, 16
        %v1411 = vrot.slane %v1409, 4
        %v1412 = vshll.u32 %v1360, 16
        %v1414 = vrot.slane %v1412, 5
        %v1415 = vor.u32 %v1411, %v1414
        %v1416 = vrot.slane %v1415, 4
        %v1418 = vshll.u32 %v1361, 16
        %v1420 = vrot.slane %v1418, 5
        %v1421 = vsel %vm312, %v1416, %v1420
        %v1422 = vshrl.u32 %v1361, 16
        %v1424 = vrot.slane %v1422, 4
        %v1425 = vor.u32 %v1424, %v1420
        %v1426 = vrot.slane %v1425, 4
        %v1428 = vshll.u32 %v1362, 16
        %v1430 = vrot.slane %v1428, 5
        %v1431 = vsel %vm312, %v1426, %v1430
        %v1433 = vshrl.u32 %v1363, 16
        %v1435 = vrot.slane %v1433, 4
        %v1436 = vshll.u32 %v1363, 16
        %v1438 = vrot.slane %v1436, 5
        %v1439 = vor.u32 %v1435, %v1438
        %v1440 = vrot.slane %v1439, 4
        %v1442 = vshll.u32 %v1364, 16
        %v1444 = vrot.slane %v1442, 5
        %v1445 = vsel %vm312, %v1440, %v1444
        %v1446 = vshrl.u32 %v1364, 16
        %v1448 = vrot.slane %v1446, 4
        %v1449 = vor.u32 %v1448, %v1444
        %v1450 = vrot.slane %v1449, 4
        %v1452 = vshll.u32 %v1365, 16
        %v1454 = vrot.slane %v1452, 5
        %v1455 = vsel %vm312, %v1450, %v1454
        %v1457 = vshrl.u32 %v1366, 16
        %v1459 = vrot.slane %v1457, 4
        %v1460 = vshll.u32 %v1366, 16
        %v1462 = vrot.slane %v1460, 5
        %v1463 = vor.u32 %v1459, %v1462
        %v1464 = vrot.slane %v1463, 4
        %v1466 = vshll.u32 %v1367, 16
        %v1468 = vrot.slane %v1466, 5
        %v1469 = vsel %vm312, %v1464, %v1468
        %v1470 = vshrl.u32 %v1367, 16
        %v1472 = vrot.slane %v1470, 4
        %v1473 = vor.u32 %v1472, %v1468
        %v1474 = vrot.slane %v1473, 4
        %v1476 = vshll.u32 %v1368, 16
        %v1478 = vrot.slane %v1476, 5
        %v1479 = vsel %vm312, %v1474, %v1478
        %v1481 = vshrl.u32 %v1369, 16
        %v1483 = vrot.slane %v1481, 4
        %v1484 = vshll.u32 %v1369, 16
        %v1486 = vrot.slane %v1484, 5
        %v1487 = vor.u32 %v1483, %v1486
        %v1488 = vrot.slane %v1487, 4
        %v1490 = vshll.u32 %v1370, 16
        %v1492 = vrot.slane %v1490, 5
        %v1493 = vsel %vm312, %v1488, %v1492
        %v1494 = vshrl.u32 %v1370, 16
        %v1496 = vrot.slane %v1494, 4
        %v1497 = vor.u32 %v1496, %v1492
        %v1498 = vrot.slane %v1497, 4
        %v1500 = vshll.u32 %v1371, 16
        %v1502 = vrot.slane %v1500, 5
        %v1503 = vsel %vm312, %v1498, %v1502
        %v1505 = vshrl.u32 %v1372, 16
        %v1507 = vrot.slane %v1505, 4
        %v1508 = vshll.u32 %v1372, 16
        %v1510 = vrot.slane %v1508, 5
        %v1511 = vor.u32 %v1507, %v1510
        %v1512 = vrot.slane %v1511, 4
        %v1514 = vshll.u32 %v1373, 16
        %v1516 = vrot.slane %v1514, 5
        %v1517 = vsel %vm312, %v1512, %v1516
        %v1518 = vshrl.u32 %v1373, 16
        %v1520 = vrot.slane %v1518, 4
        %v1521 = vor.u32 %v1520, %v1516
        %v1522 = vrot.slane %v1521, 4
        %v1524 = vshll.u32 %v1374, 16
        %v1526 = vrot.slane %v1524, 5
        %v1527 = vsel %vm312, %v1522, %v1526
        %v1529 = vshrl.u32 %v1375, 16
        %v1531 = vrot.slane %v1529, 4
        %v1532 = vshll.u32 %v1375, 16
        %v1534 = vrot.slane %v1532, 5
        %v1535 = vor.u32 %v1531, %v1534
        %v1536 = vrot.slane %v1535, 4
        %v1538 = vshll.u32 %v1376, 16
        %v1540 = vrot.slane %v1538, 5
        %v1541 = vsel %vm312, %v1536, %v1540
        %v1542 = vshrl.u32 %v1376, 16
        %v1544 = vrot.slane %v1542, 4
        %v1545 = vor.u32 %v1544, %v1540
        %v1546 = vrot.slane %v1545, 4
        %v1548 = vshll.u32 %v1377, 16
        %v1550 = vrot.slane %v1548, 5
        %v1551 = vsel %vm312, %v1546, %v1550
        %v1553 = vshrl.u32 %v1378, 16
        %v1555 = vrot.slane %v1553, 4
        %v1556 = vshll.u32 %v1378, 16
        %v1558 = vrot.slane %v1556, 5
        %v1559 = vor.u32 %v1555, %v1558
        %v1560 = vrot.slane %v1559, 4
        %v1562 = vshll.u32 %v1379, 16
        %v1564 = vrot.slane %v1562, 5
        %v1565 = vsel %vm312, %v1560, %v1564
        %v1566 = vshrl.u32 %v1379, 16
        %v1568 = vrot.slane %v1566, 4
        %v1569 = vor.u32 %v1568, %v1564
        %v1570 = vrot.slane %v1569, 4
        %v1572 = vshll.u32 %v1380, 16
        %v1574 = vrot.slane %v1572, 5
        %v1575 = vsel %vm312, %v1570, %v1574
        %v1577 = vshrl.u32 %v1381, 16
        %v1579 = vrot.slane %v1577, 4
        %v1580 = vshll.u32 %v1381, 16
        %v1582 = vrot.slane %v1580, 5
        %v1583 = vor.u32 %v1579, %v1582
        %v1584 = vrot.slane %v1583, 4
        %v1586 = vshll.u32 %v1382, 16
        %v1588 = vrot.slane %v1586, 5
        %v1589 = vsel %vm312, %v1584, %v1588
        %v1590 = vshrl.u32 %v1382, 16
        %v1592 = vrot.slane %v1590, 4
        %v1593 = vor.u32 %v1592, %v1588
        %v1594 = vrot.slane %v1593, 4
        %v1596 = vshll.u32 %v1383, 16
        %v1598 = vrot.slane %v1596, 5
        %v1599 = vsel %vm312, %v1594, %v1598
        %v1601 = vshrl.u32 %v1384, 16
        %v1603 = vrot.slane %v1601, 4
        %v1604 = vshll.u32 %v1384, 16
        %v1606 = vrot.slane %v1604, 5
        %v1607 = vor.u32 %v1603, %v1606
        %v1608 = vrot.slane %v1607, 4
        %v1610 = vshll.u32 %v1385, 16
        %v1612 = vrot.slane %v1610, 5
        %v1613 = vsel %vm312, %v1608, %v1612
        %v1614 = vshrl.u32 %v1385, 16
        %v1616 = vrot.slane %v1614, 4
        %v1617 = vor.u32 %v1616, %v1612
        %v1618 = vrot.slane %v1617, 4
        %v1620 = vshll.u32 %v1386, 16
        %v1622 = vrot.slane %v1620, 5
        %v1623 = vsel %vm312, %v1618, %v1622
        %v1625 = vshrl.u32 %v1387, 16
        %v1627 = vrot.slane %v1625, 4
        %v1628 = vshll.u32 %v1387, 16
        %v1630 = vrot.slane %v1628, 5
        %v1631 = vor.u32 %v1627, %v1630
        %v1632 = vrot.slane %v1631, 4
        %v1634 = vshll.u32 %v1388, 16
        %v1636 = vrot.slane %v1634, 5
        %v1637 = vsel %vm312, %v1632, %v1636
        %v1638 = vshrl.u32 %v1388, 16
        %v1640 = vrot.slane %v1638, 4
        %v1641 = vor.u32 %v1640, %v1636
        %v1642 = vrot.slane %v1641, 4
        %v1644 = vshll.u32 %v1389, 16
        %v1646 = vrot.slane %v1644, 5
        %v1647 = vsel %vm312, %v1642, %v1646
        %v1649 = vshrl.u32 %v1390, 16
        %v1651 = vrot.slane %v1649, 4
        %v1652 = vshll.u32 %v1390, 16
        %v1654 = vrot.slane %v1652, 5
        %v1655 = vor.u32 %v1651, %v1654
        %v1656 = vrot.slane %v1655, 4
        %v1658 = vshll.u32 %v1391, 16
        %v1660 = vrot.slane %v1658, 5
        %v1661 = vsel %vm312, %v1656, %v1660
        %v1662 = vshrl.u32 %v1391, 16
        %v1664 = vrot.slane %v1662, 4
        %v1665 = vor.u32 %v1664, %v1660
        %v1666 = vrot.slane %v1665, 4
        %v1668 = vshll.u32 %v1392, 16
        %v1670 = vrot.slane %v1668, 5
        %v1671 = vsel %vm312, %v1666, %v1670
        %v1673 = vshrl.u32 %v1393, 16
        %v1675 = vrot.slane %v1673, 4
        %v1676 = vshll.u32 %v1393, 16
        %v1678 = vrot.slane %v1676, 5
        %v1679 = vor.u32 %v1675, %v1678
        %v1680 = vrot.slane %v1679, 4
        %v1682 = vshll.u32 %v1394, 16
        %v1684 = vrot.slane %v1682, 5
        %v1685 = vsel %vm312, %v1680, %v1684
        %v1686 = vshrl.u32 %v1394, 16
        %v1688 = vrot.slane %v1686, 4
        %v1689 = vor.u32 %v1688, %v1684
        %v1690 = vrot.slane %v1689, 4
        %v1692 = vshll.u32 %v1395, 16
        %v1694 = vrot.slane %v1692, 5
        %v1695 = vsel %vm312, %v1690, %v1694
        %v1697 = vshrl.u32 %v1396, 16
        %v1699 = vrot.slane %v1697, 4
        %v1700 = vshll.u32 %v1396, 16
        %v1702 = vrot.slane %v1700, 5
        %v1703 = vor.u32 %v1699, %v1702
        %v1704 = vrot.slane %v1703, 4
        %v1706 = vshll.u32 %v1397, 16
        %v1708 = vrot.slane %v1706, 5
        %v1709 = vsel %vm312, %v1704, %v1708
        %v1710 = vshrl.u32 %v1397, 16
        %v1712 = vrot.slane %v1710, 4
        %v1713 = vor.u32 %v1712, %v1708
        %v1714 = vrot.slane %v1713, 4
        %v1716 = vshll.u32 %v1398, 16
        %v1718 = vrot.slane %v1716, 5
        %v1719 = vsel %vm312, %v1714, %v1718
        %v1721 = vshrl.u32 %v1399, 16
        %v1723 = vrot.slane %v1721, 4
        %v1724 = vshll.u32 %v1399, 16
        %v1726 = vrot.slane %v1724, 5
        %v1727 = vor.u32 %v1723, %v1726
        %v1728 = vrot.slane %v1727, 4
        %v1730 = vshll.u32 %v1400, 16
        %v1732 = vrot.slane %v1730, 5
        %v1733 = vsel %vm312, %v1728, %v1732
        %v1734 = vshrl.u32 %v1400, 16
        %v1736 = vrot.slane %v1734, 4
        %v1737 = vor.u32 %v1736, %v1732
        %v1738 = vrot.slane %v1737, 4
        %v1740 = vshll.u32 %v1401, 16
        %v1742 = vrot.slane %v1740, 5
        %v1743 = vsel %vm312, %v1738, %v1742
        %v1745 = vshrl.u32 %v1402, 16
        %v1747 = vrot.slane %v1745, 4
        %v1748 = vshll.u32 %v1402, 16
        %v1750 = vrot.slane %v1748, 5
        %v1751 = vor.u32 %v1747, %v1750
        %v1752 = vrot.slane %v1751, 4
        %v1754 = vshll.u32 %v1403, 16
        %v1756 = vrot.slane %v1754, 5
        %v1757 = vsel %vm312, %v1752, %v1756
        %v1758 = vshrl.u32 %v1403, 16
        %v1760 = vrot.slane %v1758, 4
        %v1761 = vor.u32 %v1760, %v1756
        %v1762 = vrot.slane %v1761, 4
        %v1764 = vshll.u32 %v1404, 16
        %v1766 = vrot.slane %v1764, 5
        %v1767 = vsel %vm312, %v1762, %v1766
        %v1769 = vshrl.u32 %v1405, 16
        %v1771 = vrot.slane %v1769, 4
        %v1772 = vshll.u32 %v1405, 16
        %v1774 = vrot.slane %v1772, 5
        %v1775 = vor.u32 %v1771, %v1774
        %v1776 = vrot.slane %v1775, 4
        %v1778 = vshll.u32 %v1406, 16
        %v1780 = vrot.slane %v1778, 5
        %v1781 = vsel %vm312, %v1776, %v1780
        %v1782 = vshrl.u32 %v1406, 16
        %v1784 = vrot.slane %v1782, 4
        %v1785 = vor.u32 %v1784, %v1780
        %v1786 = vrot.slane %v1785, 4
        %v1788 = vshll.u32 %v1407, 16
        %v1790 = vrot.slane %v1788, 5
        %v1791 = vsel %vm312, %v1786, %v1790
        %1792 = vrot.lane.b32.xlu0 %v1421, 32
        %v1793 = vpop.permute.xlu0 %1792
        %1794 = vrot.lane.b32.xlu0 %v1431, 32
        %v1795 = vpop.permute.xlu0 %1794
        %1796 = vrot.lane.b32.xlu0 %v1445, 32
        %v1797 = vpop.permute.xlu0 %1796
        %1798 = vrot.lane.b32.xlu0 %v1455, 32
        %v1799 = vpop.permute.xlu0 %1798
        %1800 = vrot.lane.b32.xlu0 %v1469, 32
        %v1801 = vpop.permute.xlu0 %1800
        %1802 = vrot.lane.b32.xlu0 %v1479, 32
        %v1803 = vpop.permute.xlu0 %1802
        %1804 = vrot.lane.b32.xlu0 %v1493, 32
        %v1805 = vpop.permute.xlu0 %1804
        %1806 = vrot.lane.b32.xlu0 %v1503, 32
        %v1807 = vpop.permute.xlu0 %1806
        %1808 = vrot.lane.b32.xlu0 %v1517, 32
        %v1809 = vpop.permute.xlu0 %1808
        %1810 = vrot.lane.b32.xlu0 %v1527, 32
        %v1811 = vpop.permute.xlu0 %1810
        %1812 = vrot.lane.b32.xlu0 %v1541, 32
        %v1813 = vpop.permute.xlu0 %1812
        %1814 = vrot.lane.b32.xlu0 %v1551, 32
        %v1815 = vpop.permute.xlu0 %1814
        %1816 = vrot.lane.b32.xlu0 %v1565, 32
        %v1817 = vpop.permute.xlu0 %1816
        %1818 = vrot.lane.b32.xlu0 %v1575, 32
        %v1819 = vpop.permute.xlu0 %1818
        %1820 = vrot.lane.b32.xlu0 %v1589, 32
        %v1821 = vpop.permute.xlu0 %1820
        %1822 = vrot.lane.b32.xlu0 %v1599, 32
        %v1823 = vpop.permute.xlu0 %1822
        %1824 = vrot.lane.b32.xlu0 %v1613, 32
        %v1825 = vpop.permute.xlu0 %1824
        %1826 = vrot.lane.b32.xlu0 %v1623, 32
        %v1827 = vpop.permute.xlu0 %1826
        %1828 = vrot.lane.b32.xlu0 %v1637, 32
        %v1829 = vpop.permute.xlu0 %1828
        %1830 = vrot.lane.b32.xlu0 %v1647, 32
        %v1831 = vpop.permute.xlu0 %1830
        %1832 = vrot.lane.b32.xlu0 %v1661, 32
        %v1833 = vpop.permute.xlu0 %1832
        %1834 = vrot.lane.b32.xlu0 %v1671, 32
        %v1835 = vpop.permute.xlu0 %1834
        %1836 = vrot.lane.b32.xlu0 %v1685, 32
        %v1837 = vpop.permute.xlu0 %1836
        %1838 = vrot.lane.b32.xlu0 %v1695, 32
        %v1839 = vpop.permute.xlu0 %1838
        %1840 = vrot.lane.b32.xlu0 %v1709, 32
        %v1841 = vpop.permute.xlu0 %1840
        %1842 = vrot.lane.b32.xlu0 %v1719, 32
        %v1843 = vpop.permute.xlu0 %1842
        %1844 = vrot.lane.b32.xlu0 %v1733, 32
        %v1845 = vpop.permute.xlu0 %1844
        %1846 = vrot.lane.b32.xlu0 %v1743, 32
        %v1847 = vpop.permute.xlu0 %1846
        %1848 = vrot.lane.b32.xlu0 %v1757, 32
        %v1849 = vpop.permute.xlu0 %1848
        %1850 = vrot.lane.b32.xlu0 %v1767, 32
        %v1851 = vpop.permute.xlu0 %1850
        %1852 = vrot.lane.b32.xlu0 %v1781, 32
        %v1853 = vpop.permute.xlu0 %1852
        %1854 = vrot.lane.b32.xlu0 %v1791, 32
        %v1855 = vpop.permute.xlu0 %1854
        %vm1888 = vcmask 322816
        %1889 = vst.msk [vmem:[#allocation2] sm:$0xf] %vm1888, %v1793
        %1890 = vst.msk [vmem:[#allocation2 + $0x4] sm:$0xf] %vm1888, %v1795
        %1891 = vst.msk [vmem:[#allocation2 + $0x8] sm:$0xf] %vm1888, %v1797
        %1892 = vst.msk [vmem:[#allocation2 + $0xc] sm:$0xf] %vm1888, %v1799
        %1893 = vst.msk [vmem:[#allocation2 + $0x10] sm:$0xf] %vm1888, %v1801
        %1894 = vst.msk [vmem:[#allocation2 + $0x14] sm:$0xf] %vm1888, %v1803
        %1895 = vst.msk [vmem:[#allocation2 + $0x18] sm:$0xf] %vm1888, %v1805
        %1896 = vst.msk [vmem:[#allocation2 + $0x1c] sm:$0xf] %vm1888, %v1807
        %1897 = vst.msk [vmem:[#allocation2 + $0x20] sm:$0xf] %vm1888, %v1809
        %1898 = vst.msk [vmem:[#allocation2 + $0x24] sm:$0xf] %vm1888, %v1811
        %1899 = vst.msk [vmem:[#allocation2 + $0x28] sm:$0xf] %vm1888, %v1813
        %1900 = vst.msk [vmem:[#allocation2 + $0x2c] sm:$0xf] %vm1888, %v1815
        %1901 = vst.msk [vmem:[#allocation2 + $0x30] sm:$0xf] %vm1888, %v1817
        %1902 = vst.msk [vmem:[#allocation2 + $0x34] sm:$0xf] %vm1888, %v1819
        %1903 = vst.msk [vmem:[#allocation2 + $0x38] sm:$0xf] %vm1888, %v1821
        %1904 = vst.msk [vmem:[#allocation2 + $0x3c] sm:$0xf] %vm1888, %v1823
        %1905 = vst.msk [vmem:[#allocation2 + $0x40] sm:$0xf] %vm1888, %v1825
        %1906 = vst.msk [vmem:[#allocation2 + $0x44] sm:$0xf] %vm1888, %v1827
        %1907 = vst.msk [vmem:[#allocation2 + $0x48] sm:$0xf] %vm1888, %v1829
        %1908 = vst.msk [vmem:[#allocation2 + $0x4c] sm:$0xf] %vm1888, %v1831
        %1909 = vst.msk [vmem:[#allocation2 + $0x50] sm:$0xf] %vm1888, %v1833
        %1910 = vst.msk [vmem:[#allocation2 + $0x54] sm:$0xf] %vm1888, %v1835
        %1911 = vst.msk [vmem:[#allocation2 + $0x58] sm:$0xf] %vm1888, %v1837
        %1912 = vst.msk [vmem:[#allocation2 + $0x5c] sm:$0xf] %vm1888, %v1839
        %1913 = vst.msk [vmem:[#allocation2 + $0x60] sm:$0xf] %vm1888, %v1841
        %1914 = vst.msk [vmem:[#allocation2 + $0x64] sm:$0xf] %vm1888, %v1843
        %1915 = vst.msk [vmem:[#allocation2 + $0x68] sm:$0xf] %vm1888, %v1845
        %1916 = vst.msk [vmem:[#allocation2 + $0x6c] sm:$0xf] %vm1888, %v1847
        %1917 = vst.msk [vmem:[#allocation2 + $0x70] sm:$0xf] %vm1888, %v1849
        %1918 = vst.msk [vmem:[#allocation2 + $0x74] sm:$0xf] %vm1888, %v1851
        %1919 = vst.msk [vmem:[#allocation2 + $0x78] sm:$0xf] %vm1888, %v1853
        %1920 = vst.msk [vmem:[#allocation2 + $0x7c] sm:$0xf] %vm1888, %v1855
        %v1921 = vld [vmem:[%s1166] sm:$0xe]
        %v1922 = vld [vmem:[%s1166 + $0x4] sm:$0xf]
        %v1923 = vld [vmem:[%s1166 + $0x8] sm:$0x1]
        %v1924 = vld [vmem:[%s1166 + $0xc] sm:$0xe]
        %v1925 = vld [vmem:[%s1166 + $0x10] sm:$0xf]
        %v1926 = vld [vmem:[%s1166 + $0x14] sm:$0x1]
        %v1927 = vld [vmem:[%s1166 + $0x18] sm:$0xe]
        %v1928 = vld [vmem:[%s1166 + $0x1c] sm:$0xf]
        %v1929 = vld [vmem:[%s1166 + $0x20] sm:$0x1]
        %v1930 = vld [vmem:[%s1166 + $0x24] sm:$0xe]
        %v1931 = vld [vmem:[%s1166 + $0x28] sm:$0xf]
        %v1932 = vld [vmem:[%s1166 + $0x2c] sm:$0x1]
        %v1933 = vld [vmem:[%s1166 + $0x30] sm:$0xe]
        %v1934 = vld [vmem:[%s1166 + $0x34] sm:$0xf]
        %v1935 = vld [vmem:[%s1166 + $0x38] sm:$0x1]
        %v1936 = vld [vmem:[%s1166 + $0x3c] sm:$0xe]
        %v1937 = vld [vmem:[%s1166 + $0x40] sm:$0xf]
        %v1938 = vld [vmem:[%s1166 + $0x44] sm:$0x1]
        %v1939 = vld [vmem:[%s1166 + $0x48] sm:$0xe]
        %v1940 = vld [vmem:[%s1166 + $0x4c] sm:$0xf]
        %v1941 = vld [vmem:[%s1166 + $0x50] sm:$0x1]
        %v1942 = vld [vmem:[%s1166 + $0x54] sm:$0xe]
        %v1943 = vld [vmem:[%s1166 + $0x58] sm:$0xf]
        %v1944 = vld [vmem:[%s1166 + $0x5c] sm:$0x1]
        %v1945 = vld [vmem:[%s1166 + $0x60] sm:$0xe]
        %v1946 = vld [vmem:[%s1166 + $0x64] sm:$0xf]
        %v1947 = vld [vmem:[%s1166 + $0x68] sm:$0x1]
        %v1948 = vld [vmem:[%s1166 + $0x6c] sm:$0xe]
        %v1949 = vld [vmem:[%s1166 + $0x70] sm:$0xf]
        %v1950 = vld [vmem:[%s1166 + $0x74] sm:$0x1]
        %v1951 = vld [vmem:[%s1166 + $0x78] sm:$0xe]
        %v1952 = vld [vmem:[%s1166 + $0x7c] sm:$0xf]
        %v1953 = vld [vmem:[%s1166 + $0x80] sm:$0x1]
        %v1954 = vld [vmem:[%s1166 + $0x84] sm:$0xe]
        %v1955 = vld [vmem:[%s1166 + $0x88] sm:$0xf]
        %v1956 = vld [vmem:[%s1166 + $0x8c] sm:$0x1]
        %v1957 = vld [vmem:[%s1166 + $0x90] sm:$0xe]
        %v1958 = vld [vmem:[%s1166 + $0x94] sm:$0xf]
        %v1959 = vld [vmem:[%s1166 + $0x98] sm:$0x1]
        %v1960 = vld [vmem:[%s1166 + $0x9c] sm:$0xe]
        %v1961 = vld [vmem:[%s1166 + $0xa0] sm:$0xf]
        %v1962 = vld [vmem:[%s1166 + $0xa4] sm:$0x1]
        %v1963 = vld [vmem:[%s1166 + $0xa8] sm:$0xe]
        %v1964 = vld [vmem:[%s1166 + $0xac] sm:$0xf]
        %v1965 = vld [vmem:[%s1166 + $0xb0] sm:$0x1]
        %v1966 = vld [vmem:[%s1166 + $0xb4] sm:$0xe]
        %v1967 = vld [vmem:[%s1166 + $0xb8] sm:$0xf]
        %v1968 = vld [vmem:[%s1166 + $0xbc] sm:$0x1]
        %v2017 = vrot.slane %v1921, 5
        %v2018 = vrot.slane %v2017, 4
        %v2019 = vrot.slane %v1922, 5
        %v2020 = vsel %vm924, %v2018, %v2019
        %v2021 = vrot.slane %v2019, 4
        %v2022 = vrot.slane %v1923, 5
        %v2023 = vsel %vm924, %v2021, %v2022
        %v2024 = vrot.slane %v1924, 5
        %v2025 = vrot.slane %v2024, 4
        %v2026 = vrot.slane %v1925, 5
        %v2027 = vsel %vm924, %v2025, %v2026
        %v2028 = vrot.slane %v2026, 4
        %v2029 = vrot.slane %v1926, 5
        %v2030 = vsel %vm924, %v2028, %v2029
        %v2031 = vrot.slane %v1927, 5
        %v2032 = vrot.slane %v2031, 4
        %v2033 = vrot.slane %v1928, 5
        %v2034 = vsel %vm924, %v2032, %v2033
        %v2035 = vrot.slane %v2033, 4
        %v2036 = vrot.slane %v1929, 5
        %v2037 = vsel %vm924, %v2035, %v2036
        %v2038 = vrot.slane %v1930, 5
        %v2039 = vrot.slane %v2038, 4
        %v2040 = vrot.slane %v1931, 5
        %v2041 = vsel %vm924, %v2039, %v2040
        %v2042 = vrot.slane %v2040, 4
        %v2043 = vrot.slane %v1932, 5
        %v2044 = vsel %vm924, %v2042, %v2043
        %v2045 = vrot.slane %v1933, 5
        %v2046 = vrot.slane %v2045, 4
        %v2047 = vrot.slane %v1934, 5
        %v2048 = vsel %vm924, %v2046, %v2047
        %v2049 = vrot.slane %v2047, 4
        %v2050 = vrot.slane %v1935, 5
        %v2051 = vsel %vm924, %v2049, %v2050
        %v2052 = vrot.slane %v1936, 5
        %v2053 = vrot.slane %v2052, 4
        %v2054 = vrot.slane %v1937, 5
        %v2055 = vsel %vm924, %v2053, %v2054
        %v2056 = vrot.slane %v2054, 4
        %v2057 = vrot.slane %v1938, 5
        %v2058 = vsel %vm924, %v2056, %v2057
        %v2059 = vrot.slane %v1939, 5
        %v2060 = vrot.slane %v2059, 4
        %v2061 = vrot.slane %v1940, 5
        %v2062 = vsel %vm924, %v2060, %v2061
        %v2063 = vrot.slane %v2061, 4
        %v2064 = vrot.slane %v1941, 5
        %v2065 = vsel %vm924, %v2063, %v2064
        %v2066 = vrot.slane %v1942, 5
        %v2067 = vrot.slane %v2066, 4
        %v2068 = vrot.slane %v1943, 5
        %v2069 = vsel %vm924, %v2067, %v2068
        %v2070 = vrot.slane %v2068, 4
        %v2071 = vrot.slane %v1944, 5
        %v2072 = vsel %vm924, %v2070, %v2071
        %v2073 = vrot.slane %v1945, 5
        %v2074 = vrot.slane %v2073, 4
        %v2075 = vrot.slane %v1946, 5
        %v2076 = vsel %vm924, %v2074, %v2075
        %v2077 = vrot.slane %v2075, 4
        %v2078 = vrot.slane %v1947, 5
        %v2079 = vsel %vm924, %v2077, %v2078
        %v2080 = vrot.slane %v1948, 5
        %v2081 = vrot.slane %v2080, 4
        %v2082 = vrot.slane %v1949, 5
        %v2083 = vsel %vm924, %v2081, %v2082
        %v2084 = vrot.slane %v2082, 4
        %v2085 = vrot.slane %v1950, 5
        %v2086 = vsel %vm924, %v2084, %v2085
        %v2087 = vrot.slane %v1951, 5
        %v2088 = vrot.slane %v2087, 4
        %v2089 = vrot.slane %v1952, 5
        %v2090 = vsel %vm924, %v2088, %v2089
        %v2091 = vrot.slane %v2089, 4
        %v2092 = vrot.slane %v1953, 5
        %v2093 = vsel %vm924, %v2091, %v2092
        %v2094 = vrot.slane %v1954, 5
        %v2095 = vrot.slane %v2094, 4
        %v2096 = vrot.slane %v1955, 5
        %v2097 = vsel %vm924, %v2095, %v2096
        %v2098 = vrot.slane %v2096, 4
        %v2099 = vrot.slane %v1956, 5
        %v2100 = vsel %vm924, %v2098, %v2099
        %v2101 = vrot.slane %v1957, 5
        %v2102 = vrot.slane %v2101, 4
        %v2103 = vrot.slane %v1958, 5
        %v2104 = vsel %vm924, %v2102, %v2103
        %v2105 = vrot.slane %v2103, 4
        %v2106 = vrot.slane %v1959, 5
        %v2107 = vsel %vm924, %v2105, %v2106
        %v2108 = vrot.slane %v1960, 5
        %v2109 = vrot.slane %v2108, 4
        %v2110 = vrot.slane %v1961, 5
        %v2111 = vsel %vm924, %v2109, %v2110
        %v2112 = vrot.slane %v2110, 4
        %v2113 = vrot.slane %v1962, 5
        %v2114 = vsel %vm924, %v2112, %v2113
        %v2115 = vrot.slane %v1963, 5
        %v2116 = vrot.slane %v2115, 4
        %v2117 = vrot.slane %v1964, 5
        %v2118 = vsel %vm924, %v2116, %v2117
        %v2119 = vrot.slane %v2117, 4
        %v2120 = vrot.slane %v1965, 5
        %v2121 = vsel %vm924, %v2119, %v2120
        %v2122 = vrot.slane %v1966, 5
        %v2123 = vrot.slane %v2122, 4
        %v2124 = vrot.slane %v1967, 5
        %v2125 = vsel %vm924, %v2123, %v2124
        %v2126 = vrot.slane %v2124, 4
        %v2127 = vrot.slane %v1968, 5
        %v2128 = vsel %vm924, %v2126, %v2127
        %2129 = vrot.lane.b32.xlu0 %v2020, 40
        %v2130 = vpop.permute.xlu0 %2129
        %2131 = vrot.lane.b32.xlu0 %v2023, 40
        %v2132 = vpop.permute.xlu0 %2131
        %2133 = vrot.lane.b32.xlu0 %v2027, 40
        %v2134 = vpop.permute.xlu0 %2133
        %2135 = vrot.lane.b32.xlu0 %v2030, 40
        %v2136 = vpop.permute.xlu0 %2135
        %2137 = vrot.lane.b32.xlu0 %v2034, 40
        %v2138 = vpop.permute.xlu0 %2137
        %2139 = vrot.lane.b32.xlu0 %v2037, 40
        %v2140 = vpop.permute.xlu0 %2139
        %2141 = vrot.lane.b32.xlu0 %v2041, 40
        %v2142 = vpop.permute.xlu0 %2141
        %2143 = vrot.lane.b32.xlu0 %v2044, 40
        %v2144 = vpop.permute.xlu0 %2143
        %2145 = vrot.lane.b32.xlu0 %v2048, 40
        %v2146 = vpop.permute.xlu0 %2145
        %2147 = vrot.lane.b32.xlu0 %v2051, 40
        %v2148 = vpop.permute.xlu0 %2147
        %2149 = vrot.lane.b32.xlu0 %v2055, 40
        %v2150 = vpop.permute.xlu0 %2149
        %2151 = vrot.lane.b32.xlu0 %v2058, 40
        %v2152 = vpop.permute.xlu0 %2151
        %2153 = vrot.lane.b32.xlu0 %v2062, 40
        %v2154 = vpop.permute.xlu0 %2153
        %2155 = vrot.lane.b32.xlu0 %v2065, 40
        %v2156 = vpop.permute.xlu0 %2155
        %2157 = vrot.lane.b32.xlu0 %v2069, 40
        %v2158 = vpop.permute.xlu0 %2157
        %2159 = vrot.lane.b32.xlu0 %v2072, 40
        %v2160 = vpop.permute.xlu0 %2159
        %2161 = vrot.lane.b32.xlu0 %v2076, 40
        %v2162 = vpop.permute.xlu0 %2161
        %2163 = vrot.lane.b32.xlu0 %v2079, 40
        %v2164 = vpop.permute.xlu0 %2163
        %2165 = vrot.lane.b32.xlu0 %v2083, 40
        %v2166 = vpop.permute.xlu0 %2165
        %2167 = vrot.lane.b32.xlu0 %v2086, 40
        %v2168 = vpop.permute.xlu0 %2167
        %2169 = vrot.lane.b32.xlu0 %v2090, 40
        %v2170 = vpop.permute.xlu0 %2169
        %2171 = vrot.lane.b32.xlu0 %v2093, 40
        %v2172 = vpop.permute.xlu0 %2171
        %2173 = vrot.lane.b32.xlu0 %v2097, 40
        %v2174 = vpop.permute.xlu0 %2173
        %2175 = vrot.lane.b32.xlu0 %v2100, 40
        %v2176 = vpop.permute.xlu0 %2175
        %2177 = vrot.lane.b32.xlu0 %v2104, 40
        %v2178 = vpop.permute.xlu0 %2177
        %2179 = vrot.lane.b32.xlu0 %v2107, 40
        %v2180 = vpop.permute.xlu0 %2179
        %2181 = vrot.lane.b32.xlu0 %v2111, 40
        %v2182 = vpop.permute.xlu0 %2181
        %2183 = vrot.lane.b32.xlu0 %v2114, 40
        %v2184 = vpop.permute.xlu0 %2183
        %2185 = vrot.lane.b32.xlu0 %v2118, 40
        %v2186 = vpop.permute.xlu0 %2185
        %2187 = vrot.lane.b32.xlu0 %v2121, 40
        %v2188 = vpop.permute.xlu0 %2187
        %2189 = vrot.lane.b32.xlu0 %v2125, 40
        %v2190 = vpop.permute.xlu0 %2189
        %2191 = vrot.lane.b32.xlu0 %v2128, 40
        %v2192 = vpop.permute.xlu0 %2191
        %vm2225 = vcmask 388416
        %2226 = vst.msk [vmem:[#allocation2] sm:$0xf] %vm2225, %v2130
        %2227 = vst.msk [vmem:[#allocation2 + $0x4] sm:$0xf] %vm2225, %v2132
        %2228 = vst.msk [vmem:[#allocation2 + $0x8] sm:$0xf] %vm2225, %v2134
        %2229 = vst.msk [vmem:[#allocation2 + $0xc] sm:$0xf] %vm2225, %v2136
        %2230 = vst.msk [vmem:[#allocation2 + $0x10] sm:$0xf] %vm2225, %v2138
        %2231 = vst.msk [vmem:[#allocation2 + $0x14] sm:$0xf] %vm2225, %v2140
        %2232 = vst.msk [vmem:[#allocation2 + $0x18] sm:$0xf] %vm2225, %v2142
        %2233 = vst.msk [vmem:[#allocation2 + $0x1c] sm:$0xf] %vm2225, %v2144
        %2234 = vst.msk [vmem:[#allocation2 + $0x20] sm:$0xf] %vm2225, %v2146
        %2235 = vst.msk [vmem:[#allocation2 + $0x24] sm:$0xf] %vm2225, %v2148
        %2236 = vst.msk [vmem:[#allocation2 + $0x28] sm:$0xf] %vm2225, %v2150
        %2237 = vst.msk [vmem:[#allocation2 + $0x2c] sm:$0xf] %vm2225, %v2152
        %2238 = vst.msk [vmem:[#allocation2 + $0x30] sm:$0xf] %vm2225, %v2154
        %2239 = vst.msk [vmem:[#allocation2 + $0x34] sm:$0xf] %vm2225, %v2156
        %2240 = vst.msk [vmem:[#allocation2 + $0x38] sm:$0xf] %vm2225, %v2158
        %2241 = vst.msk [vmem:[#allocation2 + $0x3c] sm:$0xf] %vm2225, %v2160
        %2242 = vst.msk [vmem:[#allocation2 + $0x40] sm:$0xf] %vm2225, %v2162
        %2243 = vst.msk [vmem:[#allocation2 + $0x44] sm:$0xf] %vm2225, %v2164
        %2244 = vst.msk [vmem:[#allocation2 + $0x48] sm:$0xf] %vm2225, %v2166
        %2245 = vst.msk [vmem:[#allocation2 + $0x4c] sm:$0xf] %vm2225, %v2168
        %2246 = vst.msk [vmem:[#allocation2 + $0x50] sm:$0xf] %vm2225, %v2170
        %2247 = vst.msk [vmem:[#allocation2 + $0x54] sm:$0xf] %vm2225, %v2172
        %2248 = vst.msk [vmem:[#allocation2 + $0x58] sm:$0xf] %vm2225, %v2174
        %2249 = vst.msk [vmem:[#allocation2 + $0x5c] sm:$0xf] %vm2225, %v2176
        %2250 = vst.msk [vmem:[#allocation2 + $0x60] sm:$0xf] %vm2225, %v2178
        %2251 = vst.msk [vmem:[#allocation2 + $0x64] sm:$0xf] %vm2225, %v2180
        %2252 = vst.msk [vmem:[#allocation2 + $0x68] sm:$0xf] %vm2225, %v2182
        %2253 = vst.msk [vmem:[#allocation2 + $0x6c] sm:$0xf] %vm2225, %v2184
        %2254 = vst.msk [vmem:[#allocation2 + $0x70] sm:$0xf] %vm2225, %v2186
        %2255 = vst.msk [vmem:[#allocation2 + $0x74] sm:$0xf] %vm2225, %v2188
        %2256 = vst.msk [vmem:[#allocation2 + $0x78] sm:$0xf] %vm2225, %v2190
        %2257 = vst.msk [vmem:[#allocation2 + $0x7c] sm:$0xf] %vm2225, %v2192
        %s2258 = scalar_lea.vmem %s195, 24
        %v2259 = vld [vmem:[%s2258] sm:$0xf]
        %v2260 = vld [vmem:[%s2258 + $0x4] sm:$0xf]
        %v2261 = vld [vmem:[%s2258 + $0xc] sm:$0xf]
        %v2262 = vld [vmem:[%s2258 + $0x10] sm:$0xf]
        %v2263 = vld [vmem:[%s2258 + $0x18] sm:$0xf]
        %v2264 = vld [vmem:[%s2258 + $0x1c] sm:$0xf]
        %v2265 = vld [vmem:[%s2258 + $0x24] sm:$0xf]
        %v2266 = vld [vmem:[%s2258 + $0x28] sm:$0xf]
        %v2267 = vld [vmem:[%s2258 + $0x30] sm:$0xf]
        %v2268 = vld [vmem:[%s2258 + $0x34] sm:$0xf]
        %v2269 = vld [vmem:[%s2258 + $0x3c] sm:$0xf]
        %v2270 = vld [vmem:[%s2258 + $0x40] sm:$0xf]
        %v2271 = vld [vmem:[%s2258 + $0x48] sm:$0xf]
        %v2272 = vld [vmem:[%s2258 + $0x4c] sm:$0xf]
        %v2273 = vld [vmem:[%s2258 + $0x54] sm:$0xf]
        %v2274 = vld [vmem:[%s2258 + $0x58] sm:$0xf]
        %v2275 = vld [vmem:[%s2258 + $0x60] sm:$0xf]
        %v2276 = vld [vmem:[%s2258 + $0x64] sm:$0xf]
        %v2277 = vld [vmem:[%s2258 + $0x6c] sm:$0xf]
        %v2278 = vld [vmem:[%s2258 + $0x70] sm:$0xf]
        %v2279 = vld [vmem:[%s2258 + $0x78] sm:$0xf]
        %v2280 = vld [vmem:[%s2258 + $0x7c] sm:$0xf]
        %v2281 = vld [vmem:[%s2258 + $0x84] sm:$0xf]
        %v2282 = vld [vmem:[%s2258 + $0x88] sm:$0xf]
        %v2283 = vld [vmem:[%s2258 + $0x90] sm:$0xf]
        %v2284 = vld [vmem:[%s2258 + $0x94] sm:$0xf]
        %v2285 = vld [vmem:[%s2258 + $0x9c] sm:$0xf]
        %v2286 = vld [vmem:[%s2258 + $0xa0] sm:$0xf]
        %v2287 = vld [vmem:[%s2258 + $0xa8] sm:$0xf]
        %v2288 = vld [vmem:[%s2258 + $0xac] sm:$0xf]
        %v2289 = vld [vmem:[%s2258 + $0xb4] sm:$0xf]
        %v2290 = vld [vmem:[%s2258 + $0xb8] sm:$0xf]
        %2323 = vrot.lane.b32.xlu0 %v2259, 48
        %v2324 = vpop.permute.xlu0 %2323
        %2325 = vrot.lane.b32.xlu0 %v2260, 48
        %v2326 = vpop.permute.xlu0 %2325
        %2327 = vrot.lane.b32.xlu0 %v2261, 48
        %v2328 = vpop.permute.xlu0 %2327
        %2329 = vrot.lane.b32.xlu0 %v2262, 48
        %v2330 = vpop.permute.xlu0 %2329
        %2331 = vrot.lane.b32.xlu0 %v2263, 48
        %v2332 = vpop.permute.xlu0 %2331
        %2333 = vrot.lane.b32.xlu0 %v2264, 48
        %v2334 = vpop.permute.xlu0 %2333
        %2335 = vrot.lane.b32.xlu0 %v2265, 48
        %v2336 = vpop.permute.xlu0 %2335
        %2337 = vrot.lane.b32.xlu0 %v2266, 48
        %v2338 = vpop.permute.xlu0 %2337
        %2339 = vrot.lane.b32.xlu0 %v2267, 48
        %v2340 = vpop.permute.xlu0 %2339
        %2341 = vrot.lane.b32.xlu0 %v2268, 48
        %v2342 = vpop.permute.xlu0 %2341
        %2343 = vrot.lane.b32.xlu0 %v2269, 48
        %v2344 = vpop.permute.xlu0 %2343
        %2345 = vrot.lane.b32.xlu0 %v2270, 48
        %v2346 = vpop.permute.xlu0 %2345
        %2347 = vrot.lane.b32.xlu0 %v2271, 48
        %v2348 = vpop.permute.xlu0 %2347
        %2349 = vrot.lane.b32.xlu0 %v2272, 48
        %v2350 = vpop.permute.xlu0 %2349
        %2351 = vrot.lane.b32.xlu0 %v2273, 48
        %v2352 = vpop.permute.xlu0 %2351
        %2353 = vrot.lane.b32.xlu0 %v2274, 48
        %v2354 = vpop.permute.xlu0 %2353
        %2355 = vrot.lane.b32.xlu0 %v2275, 48
        %v2356 = vpop.permute.xlu0 %2355
        %2357 = vrot.lane.b32.xlu0 %v2276, 48
        %v2358 = vpop.permute.xlu0 %2357
        %2359 = vrot.lane.b32.xlu0 %v2277, 48
        %v2360 = vpop.permute.xlu0 %2359
        %2361 = vrot.lane.b32.xlu0 %v2278, 48
        %v2362 = vpop.permute.xlu0 %2361
        %2363 = vrot.lane.b32.xlu0 %v2279, 48
        %v2364 = vpop.permute.xlu0 %2363
        %2365 = vrot.lane.b32.xlu0 %v2280, 48
        %v2366 = vpop.permute.xlu0 %2365
        %2367 = vrot.lane.b32.xlu0 %v2281, 48
        %v2368 = vpop.permute.xlu0 %2367
        %2369 = vrot.lane.b32.xlu0 %v2282, 48
        %v2370 = vpop.permute.xlu0 %2369
        %2371 = vrot.lane.b32.xlu0 %v2283, 48
        %v2372 = vpop.permute.xlu0 %2371
        %2373 = vrot.lane.b32.xlu0 %v2284, 48
        %v2374 = vpop.permute.xlu0 %2373
        %2375 = vrot.lane.b32.xlu0 %v2285, 48
        %v2376 = vpop.permute.xlu0 %2375
        %2377 = vrot.lane.b32.xlu0 %v2286, 48
        %v2378 = vpop.permute.xlu0 %2377
        %2379 = vrot.lane.b32.xlu0 %v2287, 48
        %v2380 = vpop.permute.xlu0 %2379
        %2381 = vrot.lane.b32.xlu0 %v2288, 48
        %v2382 = vpop.permute.xlu0 %2381
        %2383 = vrot.lane.b32.xlu0 %v2289, 48
        %v2384 = vpop.permute.xlu0 %2383
        %2385 = vrot.lane.b32.xlu0 %v2290, 48
        %v2386 = vpop.permute.xlu0 %2385
        %vm2419 = vcmask 454016
        %2420 = vst.msk [vmem:[#allocation2] sm:$0xf] %vm2419, %v2324
        %2421 = vst.msk [vmem:[#allocation2 + $0x4] sm:$0xf] %vm2419, %v2326
        %2422 = vst.msk [vmem:[#allocation2 + $0x8] sm:$0xf] %vm2419, %v2328
        %2423 = vst.msk [vmem:[#allocation2 + $0xc] sm:$0xf] %vm2419, %v2330
        %2424 = vst.msk [vmem:[#allocation2 + $0x10] sm:$0xf] %vm2419, %v2332
        %2425 = vst.msk [vmem:[#allocation2 + $0x14] sm:$0xf] %vm2419, %v2334
        %2426 = vst.msk [vmem:[#allocation2 + $0x18] sm:$0xf] %vm2419, %v2336
        %2427 = vst.msk [vmem:[#allocation2 + $0x1c] sm:$0xf] %vm2419, %v2338
        %2428 = vst.msk [vmem:[#allocation2 + $0x20] sm:$0xf] %vm2419, %v2340
        %2429 = vst.msk [vmem:[#allocation2 + $0x24] sm:$0xf] %vm2419, %v2342
        %2430 = vst.msk [vmem:[#allocation2 + $0x28] sm:$0xf] %vm2419, %v2344
        %2431 = vst.msk [vmem:[#allocation2 + $0x2c] sm:$0xf] %vm2419, %v2346
        %2432 = vst.msk [vmem:[#allocation2 + $0x30] sm:$0xf] %vm2419, %v2348
        %2433 = vst.msk [vmem:[#allocation2 + $0x34] sm:$0xf] %vm2419, %v2350
        %2434 = vst.msk [vmem:[#allocation2 + $0x38] sm:$0xf] %vm2419, %v2352
        %2435 = vst.msk [vmem:[#allocation2 + $0x3c] sm:$0xf] %vm2419, %v2354
        %2436 = vst.msk [vmem:[#allocation2 + $0x40] sm:$0xf] %vm2419, %v2356
        %2437 = vst.msk [vmem:[#allocation2 + $0x44] sm:$0xf] %vm2419, %v2358
        %2438 = vst.msk [vmem:[#allocation2 + $0x48] sm:$0xf] %vm2419, %v2360
        %2439 = vst.msk [vmem:[#allocation2 + $0x4c] sm:$0xf] %vm2419, %v2362
        %2440 = vst.msk [vmem:[#allocation2 + $0x50] sm:$0xf] %vm2419, %v2364
        %2441 = vst.msk [vmem:[#allocation2 + $0x54] sm:$0xf] %vm2419, %v2366
        %2442 = vst.msk [vmem:[#allocation2 + $0x58] sm:$0xf] %vm2419, %v2368
        %2443 = vst.msk [vmem:[#allocation2 + $0x5c] sm:$0xf] %vm2419, %v2370
        %2444 = vst.msk [vmem:[#allocation2 + $0x60] sm:$0xf] %vm2419, %v2372
        %2445 = vst.msk [vmem:[#allocation2 + $0x64] sm:$0xf] %vm2419, %v2374
        %2446 = vst.msk [vmem:[#allocation2 + $0x68] sm:$0xf] %vm2419, %v2376
        %2447 = vst.msk [vmem:[#allocation2 + $0x6c] sm:$0xf] %vm2419, %v2378
        %2448 = vst.msk [vmem:[#allocation2 + $0x70] sm:$0xf] %vm2419, %v2380
        %2449 = vst.msk [vmem:[#allocation2 + $0x74] sm:$0xf] %vm2419, %v2382
        %2450 = vst.msk [vmem:[#allocation2 + $0x78] sm:$0xf] %vm2419, %v2384
        %2451 = vst.msk [vmem:[#allocation2 + $0x7c] sm:$0xf] %vm2419, %v2386
        %v2452 = vld [vmem:[%s2258] sm:$0xf]
        %v2453 = vld [vmem:[%s2258 + $0x4] sm:$0xf]
        %v2454 = vld [vmem:[%s2258 + $0x8] sm:$0x1]
        %v2455 = vld [vmem:[%s2258 + $0xc] sm:$0xf]
        %v2456 = vld [vmem:[%s2258 + $0x10] sm:$0xf]
        %v2457 = vld [vmem:[%s2258 + $0x14] sm:$0x1]
        %v2458 = vld [vmem:[%s2258 + $0x18] sm:$0xf]
        %v2459 = vld [vmem:[%s2258 + $0x1c] sm:$0xf]
        %v2460 = vld [vmem:[%s2258 + $0x20] sm:$0x1]
        %v2461 = vld [vmem:[%s2258 + $0x24] sm:$0xf]
        %v2462 = vld [vmem:[%s2258 + $0x28] sm:$0xf]
        %v2463 = vld [vmem:[%s2258 + $0x2c] sm:$0x1]
        %v2464 = vld [vmem:[%s2258 + $0x30] sm:$0xf]
        %v2465 = vld [vmem:[%s2258 + $0x34] sm:$0xf]
        %v2466 = vld [vmem:[%s2258 + $0x38] sm:$0x1]
        %v2467 = vld [vmem:[%s2258 + $0x3c] sm:$0xf]
        %v2468 = vld [vmem:[%s2258 + $0x40] sm:$0xf]
        %v2469 = vld [vmem:[%s2258 + $0x44] sm:$0x1]
        %v2470 = vld [vmem:[%s2258 + $0x48] sm:$0xf]
        %v2471 = vld [vmem:[%s2258 + $0x4c] sm:$0xf]
        %v2472 = vld [vmem:[%s2258 + $0x50] sm:$0x1]
        %v2473 = vld [vmem:[%s2258 + $0x54] sm:$0xf]
        %v2474 = vld [vmem:[%s2258 + $0x58] sm:$0xf]
        %v2475 = vld [vmem:[%s2258 + $0x5c] sm:$0x1]
        %v2476 = vld [vmem:[%s2258 + $0x60] sm:$0xf]
        %v2477 = vld [vmem:[%s2258 + $0x64] sm:$0xf]
        %v2478 = vld [vmem:[%s2258 + $0x68] sm:$0x1]
        %v2479 = vld [vmem:[%s2258 + $0x6c] sm:$0xf]
        %v2480 = vld [vmem:[%s2258 + $0x70] sm:$0xf]
        %v2481 = vld [vmem:[%s2258 + $0x74] sm:$0x1]
        %v2482 = vld [vmem:[%s2258 + $0x78] sm:$0xf]
        %v2483 = vld [vmem:[%s2258 + $0x7c] sm:$0xf]
        %v2484 = vld [vmem:[%s2258 + $0x80] sm:$0x1]
        %v2485 = vld [vmem:[%s2258 + $0x84] sm:$0xf]
        %v2486 = vld [vmem:[%s2258 + $0x88] sm:$0xf]
        %v2487 = vld [vmem:[%s2258 + $0x8c] sm:$0x1]
        %v2488 = vld [vmem:[%s2258 + $0x90] sm:$0xf]
        %v2489 = vld [vmem:[%s2258 + $0x94] sm:$0xf]
        %v2490 = vld [vmem:[%s2258 + $0x98] sm:$0x1]
        %v2491 = vld [vmem:[%s2258 + $0x9c] sm:$0xf]
        %v2492 = vld [vmem:[%s2258 + $0xa0] sm:$0xf]
        %v2493 = vld [vmem:[%s2258 + $0xa4] sm:$0x1]
        %v2494 = vld [vmem:[%s2258 + $0xa8] sm:$0xf]
        %v2495 = vld [vmem:[%s2258 + $0xac] sm:$0xf]
        %v2496 = vld [vmem:[%s2258 + $0xb0] sm:$0x1]
        %v2497 = vld [vmem:[%s2258 + $0xb4] sm:$0xf]
        %v2498 = vld [vmem:[%s2258 + $0xb8] sm:$0xf]
        %v2499 = vld [vmem:[%s2258 + $0xbc] sm:$0x1]
        %v2501 = vshrl.u32 %v2452, 16
        %v2503 = vrot.slane %v2501, 4
        %v2504 = vshll.u32 %v2452, 16
        %v2506 = vrot.slane %v2504, 5
        %v2507 = vor.u32 %v2503, %v2506
        %v2508 = vrot.slane %v2507, 4
        %v2510 = vshll.u32 %v2453, 16
        %v2512 = vrot.slane %v2510, 5
        %v2513 = vsel %vm312, %v2508, %v2512
        %v2514 = vshrl.u32 %v2453, 16
        %v2516 = vrot.slane %v2514, 4
        %v2517 = vor.u32 %v2516, %v2512
        %v2518 = vrot.slane %v2517, 4
        %v2520 = vshll.u32 %v2454, 16
        %v2522 = vrot.slane %v2520, 5
        %v2523 = vsel %vm312, %v2518, %v2522
        %v2525 = vshrl.u32 %v2455, 16
        %v2527 = vrot.slane %v2525, 4
        %v2528 = vshll.u32 %v2455, 16
        %v2530 = vrot.slane %v2528, 5
        %v2531 = vor.u32 %v2527, %v2530
        %v2532 = vrot.slane %v2531, 4
        %v2534 = vshll.u32 %v2456, 16
        %v2536 = vrot.slane %v2534, 5
        %v2537 = vsel %vm312, %v2532, %v2536
        %v2538 = vshrl.u32 %v2456, 16
        %v2540 = vrot.slane %v2538, 4
        %v2541 = vor.u32 %v2540, %v2536
        %v2542 = vrot.slane %v2541, 4
        %v2544 = vshll.u32 %v2457, 16
        %v2546 = vrot.slane %v2544, 5
        %v2547 = vsel %vm312, %v2542, %v2546
        %v2549 = vshrl.u32 %v2458, 16
        %v2551 = vrot.slane %v2549, 4
        %v2552 = vshll.u32 %v2458, 16
        %v2554 = vrot.slane %v2552, 5
        %v2555 = vor.u32 %v2551, %v2554
        %v2556 = vrot.slane %v2555, 4
        %v2558 = vshll.u32 %v2459, 16
        %v2560 = vrot.slane %v2558, 5
        %v2561 = vsel %vm312, %v2556, %v2560
        %v2562 = vshrl.u32 %v2459, 16
        %v2564 = vrot.slane %v2562, 4
        %v2565 = vor.u32 %v2564, %v2560
        %v2566 = vrot.slane %v2565, 4
        %v2568 = vshll.u32 %v2460, 16
        %v2570 = vrot.slane %v2568, 5
        %v2571 = vsel %vm312, %v2566, %v2570
        %v2573 = vshrl.u32 %v2461, 16
        %v2575 = vrot.slane %v2573, 4
        %v2576 = vshll.u32 %v2461, 16
        %v2578 = vrot.slane %v2576, 5
        %v2579 = vor.u32 %v2575, %v2578
        %v2580 = vrot.slane %v2579, 4
        %v2582 = vshll.u32 %v2462, 16
        %v2584 = vrot.slane %v2582, 5
        %v2585 = vsel %vm312, %v2580, %v2584
        %v2586 = vshrl.u32 %v2462, 16
        %v2588 = vrot.slane %v2586, 4
        %v2589 = vor.u32 %v2588, %v2584
        %v2590 = vrot.slane %v2589, 4
        %v2592 = vshll.u32 %v2463, 16
        %v2594 = vrot.slane %v2592, 5
        %v2595 = vsel %vm312, %v2590, %v2594
        %v2597 = vshrl.u32 %v2464, 16
        %v2599 = vrot.slane %v2597, 4
        %v2600 = vshll.u32 %v2464, 16
        %v2602 = vrot.slane %v2600, 5
        %v2603 = vor.u32 %v2599, %v2602
        %v2604 = vrot.slane %v2603, 4
        %v2606 = vshll.u32 %v2465, 16
        %v2608 = vrot.slane %v2606, 5
        %v2609 = vsel %vm312, %v2604, %v2608
        %v2610 = vshrl.u32 %v2465, 16
        %v2612 = vrot.slane %v2610, 4
        %v2613 = vor.u32 %v2612, %v2608
        %v2614 = vrot.slane %v2613, 4
        %v2616 = vshll.u32 %v2466, 16
        %v2618 = vrot.slane %v2616, 5
        %v2619 = vsel %vm312, %v2614, %v2618
        %v2621 = vshrl.u32 %v2467, 16
        %v2623 = vrot.slane %v2621, 4
        %v2624 = vshll.u32 %v2467, 16
        %v2626 = vrot.slane %v2624, 5
        %v2627 = vor.u32 %v2623, %v2626
        %v2628 = vrot.slane %v2627, 4
        %v2630 = vshll.u32 %v2468, 16
        %v2632 = vrot.slane %v2630, 5
        %v2633 = vsel %vm312, %v2628, %v2632
        %v2634 = vshrl.u32 %v2468, 16
        %v2636 = vrot.slane %v2634, 4
        %v2637 = vor.u32 %v2636, %v2632
        %v2638 = vrot.slane %v2637, 4
        %v2640 = vshll.u32 %v2469, 16
        %v2642 = vrot.slane %v2640, 5
        %v2643 = vsel %vm312, %v2638, %v2642
        %v2645 = vshrl.u32 %v2470, 16
        %v2647 = vrot.slane %v2645, 4
        %v2648 = vshll.u32 %v2470, 16
        %v2650 = vrot.slane %v2648, 5
        %v2651 = vor.u32 %v2647, %v2650
        %v2652 = vrot.slane %v2651, 4
        %v2654 = vshll.u32 %v2471, 16
        %v2656 = vrot.slane %v2654, 5
        %v2657 = vsel %vm312, %v2652, %v2656
        %v2658 = vshrl.u32 %v2471, 16
        %v2660 = vrot.slane %v2658, 4
        %v2661 = vor.u32 %v2660, %v2656
        %v2662 = vrot.slane %v2661, 4
        %v2664 = vshll.u32 %v2472, 16
        %v2666 = vrot.slane %v2664, 5
        %v2667 = vsel %vm312, %v2662, %v2666
        %v2669 = vshrl.u32 %v2473, 16
        %v2671 = vrot.slane %v2669, 4
        %v2672 = vshll.u32 %v2473, 16
        %v2674 = vrot.slane %v2672, 5
        %v2675 = vor.u32 %v2671, %v2674
        %v2676 = vrot.slane %v2675, 4
        %v2678 = vshll.u32 %v2474, 16
        %v2680 = vrot.slane %v2678, 5
        %v2681 = vsel %vm312, %v2676, %v2680
        %v2682 = vshrl.u32 %v2474, 16
        %v2684 = vrot.slane %v2682, 4
        %v2685 = vor.u32 %v2684, %v2680
        %v2686 = vrot.slane %v2685, 4
        %v2688 = vshll.u32 %v2475, 16
        %v2690 = vrot.slane %v2688, 5
        %v2691 = vsel %vm312, %v2686, %v2690
        %v2693 = vshrl.u32 %v2476, 16
        %v2695 = vrot.slane %v2693, 4
        %v2696 = vshll.u32 %v2476, 16
        %v2698 = vrot.slane %v2696, 5
        %v2699 = vor.u32 %v2695, %v2698
        %v2700 = vrot.slane %v2699, 4
        %v2702 = vshll.u32 %v2477, 16
        %v2704 = vrot.slane %v2702, 5
        %v2705 = vsel %vm312, %v2700, %v2704
        %v2706 = vshrl.u32 %v2477, 16
        %v2708 = vrot.slane %v2706, 4
        %v2709 = vor.u32 %v2708, %v2704
        %v2710 = vrot.slane %v2709, 4
        %v2712 = vshll.u32 %v2478, 16
        %v2714 = vrot.slane %v2712, 5
        %v2715 = vsel %vm312, %v2710, %v2714
        %v2717 = vshrl.u32 %v2479, 16
        %v2719 = vrot.slane %v2717, 4
        %v2720 = vshll.u32 %v2479, 16
        %v2722 = vrot.slane %v2720, 5
        %v2723 = vor.u32 %v2719, %v2722
        %v2724 = vrot.slane %v2723, 4
        %v2726 = vshll.u32 %v2480, 16
        %v2728 = vrot.slane %v2726, 5
        %v2729 = vsel %vm312, %v2724, %v2728
        %v2730 = vshrl.u32 %v2480, 16
        %v2732 = vrot.slane %v2730, 4
        %v2733 = vor.u32 %v2732, %v2728
        %v2734 = vrot.slane %v2733, 4
        %v2736 = vshll.u32 %v2481, 16
        %v2738 = vrot.slane %v2736, 5
        %v2739 = vsel %vm312, %v2734, %v2738
        %v2741 = vshrl.u32 %v2482, 16
        %v2743 = vrot.slane %v2741, 4
        %v2744 = vshll.u32 %v2482, 16
        %v2746 = vrot.slane %v2744, 5
        %v2747 = vor.u32 %v2743, %v2746
        %v2748 = vrot.slane %v2747, 4
        %v2750 = vshll.u32 %v2483, 16
        %v2752 = vrot.slane %v2750, 5
        %v2753 = vsel %vm312, %v2748, %v2752
        %v2754 = vshrl.u32 %v2483, 16
        %v2756 = vrot.slane %v2754, 4
        %v2757 = vor.u32 %v2756, %v2752
        %v2758 = vrot.slane %v2757, 4
        %v2760 = vshll.u32 %v2484, 16
        %v2762 = vrot.slane %v2760, 5
        %v2763 = vsel %vm312, %v2758, %v2762
        %v2765 = vshrl.u32 %v2485, 16
        %v2767 = vrot.slane %v2765, 4
        %v2768 = vshll.u32 %v2485, 16
        %v2770 = vrot.slane %v2768, 5
        %v2771 = vor.u32 %v2767, %v2770
        %v2772 = vrot.slane %v2771, 4
        %v2774 = vshll.u32 %v2486, 16
        %v2776 = vrot.slane %v2774, 5
        %v2777 = vsel %vm312, %v2772, %v2776
        %v2778 = vshrl.u32 %v2486, 16
        %v2780 = vrot.slane %v2778, 4
        %v2781 = vor.u32 %v2780, %v2776
        %v2782 = vrot.slane %v2781, 4
        %v2784 = vshll.u32 %v2487, 16
        %v2786 = vrot.slane %v2784, 5
        %v2787 = vsel %vm312, %v2782, %v2786
        %v2789 = vshrl.u32 %v2488, 16
        %v2791 = vrot.slane %v2789, 4
        %v2792 = vshll.u32 %v2488, 16
        %v2794 = vrot.slane %v2792, 5
        %v2795 = vor.u32 %v2791, %v2794
        %v2796 = vrot.slane %v2795, 4
        %v2798 = vshll.u32 %v2489, 16
        %v2800 = vrot.slane %v2798, 5
        %v2801 = vsel %vm312, %v2796, %v2800
        %v2802 = vshrl.u32 %v2489, 16
        %v2804 = vrot.slane %v2802, 4
        %v2805 = vor.u32 %v2804, %v2800
        %v2806 = vrot.slane %v2805, 4
        %v2808 = vshll.u32 %v2490, 16
        %v2810 = vrot.slane %v2808, 5
        %v2811 = vsel %vm312, %v2806, %v2810
        %v2813 = vshrl.u32 %v2491, 16
        %v2815 = vrot.slane %v2813, 4
        %v2816 = vshll.u32 %v2491, 16
        %v2818 = vrot.slane %v2816, 5
        %v2819 = vor.u32 %v2815, %v2818
        %v2820 = vrot.slane %v2819, 4
        %v2822 = vshll.u32 %v2492, 16
        %v2824 = vrot.slane %v2822, 5
        %v2825 = vsel %vm312, %v2820, %v2824
        %v2826 = vshrl.u32 %v2492, 16
        %v2828 = vrot.slane %v2826, 4
        %v2829 = vor.u32 %v2828, %v2824
        %v2830 = vrot.slane %v2829, 4
        %v2832 = vshll.u32 %v2493, 16
        %v2834 = vrot.slane %v2832, 5
        %v2835 = vsel %vm312, %v2830, %v2834
        %v2837 = vshrl.u32 %v2494, 16
        %v2839 = vrot.slane %v2837, 4
        %v2840 = vshll.u32 %v2494, 16
        %v2842 = vrot.slane %v2840, 5
        %v2843 = vor.u32 %v2839, %v2842
        %v2844 = vrot.slane %v2843, 4
        %v2846 = vshll.u32 %v2495, 16
        %v2848 = vrot.slane %v2846, 5
        %v2849 = vsel %vm312, %v2844, %v2848
        %v2850 = vshrl.u32 %v2495, 16
        %v2852 = vrot.slane %v2850, 4
        %v2853 = vor.u32 %v2852, %v2848
        %v2854 = vrot.slane %v2853, 4
        %v2856 = vshll.u32 %v2496, 16
        %v2858 = vrot.slane %v2856, 5
        %v2859 = vsel %vm312, %v2854, %v2858
        %v2861 = vshrl.u32 %v2497, 16
        %v2863 = vrot.slane %v2861, 4
        %v2864 = vshll.u32 %v2497, 16
        %v2866 = vrot.slane %v2864, 5
        %v2867 = vor.u32 %v2863, %v2866
        %v2868 = vrot.slane %v2867, 4
        %v2870 = vshll.u32 %v2498, 16
        %v2872 = vrot.slane %v2870, 5
        %v2873 = vsel %vm312, %v2868, %v2872
        %v2874 = vshrl.u32 %v2498, 16
        %v2876 = vrot.slane %v2874, 4
        %v2877 = vor.u32 %v2876, %v2872
        %v2878 = vrot.slane %v2877, 4
        %v2880 = vshll.u32 %v2499, 16
        %v2882 = vrot.slane %v2880, 5
        %v2883 = vsel %vm312, %v2878, %v2882
        %2884 = vrot.lane.b32.xlu0 %v2513, 56
        %v2885 = vpop.permute.xlu0 %2884
        %2886 = vrot.lane.b32.xlu0 %v2523, 56
        %v2887 = vpop.permute.xlu0 %2886
        %2888 = vrot.lane.b32.xlu0 %v2537, 56
        %v2889 = vpop.permute.xlu0 %2888
        %2890 = vrot.lane.b32.xlu0 %v2547, 56
        %v2891 = vpop.permute.xlu0 %2890
        %2892 = vrot.lane.b32.xlu0 %v2561, 56
        %v2893 = vpop.permute.xlu0 %2892
        %2894 = vrot.lane.b32.xlu0 %v2571, 56
        %v2895 = vpop.permute.xlu0 %2894
        %2896 = vrot.lane.b32.xlu0 %v2585, 56
        %v2897 = vpop.permute.xlu0 %2896
        %2898 = vrot.lane.b32.xlu0 %v2595, 56
        %v2899 = vpop.permute.xlu0 %2898
        %2900 = vrot.lane.b32.xlu0 %v2609, 56
        %v2901 = vpop.permute.xlu0 %2900
        %2902 = vrot.lane.b32.xlu0 %v2619, 56
        %v2903 = vpop.permute.xlu0 %2902
        %2904 = vrot.lane.b32.xlu0 %v2633, 56
        %v2905 = vpop.permute.xlu0 %2904
        %2906 = vrot.lane.b32.xlu0 %v2643, 56
        %v2907 = vpop.permute.xlu0 %2906
        %2908 = vrot.lane.b32.xlu0 %v2657, 56
        %v2909 = vpop.permute.xlu0 %2908
        %2910 = vrot.lane.b32.xlu0 %v2667, 56
        %v2911 = vpop.permute.xlu0 %2910
        %2912 = vrot.lane.b32.xlu0 %v2681, 56
        %v2913 = vpop.permute.xlu0 %2912
        %2914 = vrot.lane.b32.xlu0 %v2691, 56
        %v2915 = vpop.permute.xlu0 %2914
        %2916 = vrot.lane.b32.xlu0 %v2705, 56
        %v2917 = vpop.permute.xlu0 %2916
        %2918 = vrot.lane.b32.xlu0 %v2715, 56
        %v2919 = vpop.permute.xlu0 %2918
        %2920 = vrot.lane.b32.xlu0 %v2729, 56
        %v2921 = vpop.permute.xlu0 %2920
        %2922 = vrot.lane.b32.xlu0 %v2739, 56
        %v2923 = vpop.permute.xlu0 %2922
        %2924 = vrot.lane.b32.xlu0 %v2753, 56
        %v2925 = vpop.permute.xlu0 %2924
        %2926 = vrot.lane.b32.xlu0 %v2763, 56
        %v2927 = vpop.permute.xlu0 %2926
        %2928 = vrot.lane.b32.xlu0 %v2777, 56
        %v2929 = vpop.permute.xlu0 %2928
        %2930 = vrot.lane.b32.xlu0 %v2787, 56
        %v2931 = vpop.permute.xlu0 %2930
        %2932 = vrot.lane.b32.xlu0 %v2801, 56
        %v2933 = vpop.permute.xlu0 %2932
        %2934 = vrot.lane.b32.xlu0 %v2811, 56
        %v2935 = vpop.permute.xlu0 %2934
        %2936 = vrot.lane.b32.xlu0 %v2825, 56
        %v2937 = vpop.permute.xlu0 %2936
        %2938 = vrot.lane.b32.xlu0 %v2835, 56
        %v2939 = vpop.permute.xlu0 %2938
        %2940 = vrot.lane.b32.xlu0 %v2849, 56
        %v2941 = vpop.permute.xlu0 %2940
        %2942 = vrot.lane.b32.xlu0 %v2859, 56
        %v2943 = vpop.permute.xlu0 %2942
        %2944 = vrot.lane.b32.xlu0 %v2873, 56
        %v2945 = vpop.permute.xlu0 %2944
        %2946 = vrot.lane.b32.xlu0 %v2883, 56
        %v2947 = vpop.permute.xlu0 %2946
        %vm2980 = vcmask 519616
        %2981 = vst.msk [vmem:[#allocation2] sm:$0xf] %vm2980, %v2885
        %2982 = vst.msk [vmem:[#allocation2 + $0x4] sm:$0xf] %vm2980, %v2887
        %2983 = vst.msk [vmem:[#allocation2 + $0x8] sm:$0xf] %vm2980, %v2889
        %2984 = vst.msk [vmem:[#allocation2 + $0xc] sm:$0xf] %vm2980, %v2891
        %2985 = vst.msk [vmem:[#allocation2 + $0x10] sm:$0xf] %vm2980, %v2893
        %2986 = vst.msk [vmem:[#allocation2 + $0x14] sm:$0xf] %vm2980, %v2895
        %2987 = vst.msk [vmem:[#allocation2 + $0x18] sm:$0xf] %vm2980, %v2897
        %2988 = vst.msk [vmem:[#allocation2 + $0x1c] sm:$0xf] %vm2980, %v2899
        %2989 = vst.msk [vmem:[#allocation2 + $0x20] sm:$0xf] %vm2980, %v2901
        %2990 = vst.msk [vmem:[#allocation2 + $0x24] sm:$0xf] %vm2980, %v2903
        %2991 = vst.msk [vmem:[#allocation2 + $0x28] sm:$0xf] %vm2980, %v2905
        %2992 = vst.msk [vmem:[#allocation2 + $0x2c] sm:$0xf] %vm2980, %v2907
        %2993 = vst.msk [vmem:[#allocation2 + $0x30] sm:$0xf] %vm2980, %v2909
        %2994 = vst.msk [vmem:[#allocation2 + $0x34] sm:$0xf] %vm2980, %v2911
        %2995 = vst.msk [vmem:[#allocation2 + $0x38] sm:$0xf] %vm2980, %v2913
        %2996 = vst.msk [vmem:[#allocation2 + $0x3c] sm:$0xf] %vm2980, %v2915
        %2997 = vst.msk [vmem:[#allocation2 + $0x40] sm:$0xf] %vm2980, %v2917
        %2998 = vst.msk [vmem:[#allocation2 + $0x44] sm:$0xf] %vm2980, %v2919
        %2999 = vst.msk [vmem:[#allocation2 + $0x48] sm:$0xf] %vm2980, %v2921
        %3000 = vst.msk [vmem:[#allocation2 + $0x4c] sm:$0xf] %vm2980, %v2923
        %3001 = vst.msk [vmem:[#allocation2 + $0x50] sm:$0xf] %vm2980, %v2925
        %3002 = vst.msk [vmem:[#allocation2 + $0x54] sm:$0xf] %vm2980, %v2927
        %3003 = vst.msk [vmem:[#allocation2 + $0x58] sm:$0xf] %vm2980, %v2929
        %3004 = vst.msk [vmem:[#allocation2 + $0x5c] sm:$0xf] %vm2980, %v2931
        %3005 = vst.msk [vmem:[#allocation2 + $0x60] sm:$0xf] %vm2980, %v2933
        %3006 = vst.msk [vmem:[#allocation2 + $0x64] sm:$0xf] %vm2980, %v2935
        %3007 = vst.msk [vmem:[#allocation2 + $0x68] sm:$0xf] %vm2980, %v2937
        %3008 = vst.msk [vmem:[#allocation2 + $0x6c] sm:$0xf] %vm2980, %v2939
        %3009 = vst.msk [vmem:[#allocation2 + $0x70] sm:$0xf] %vm2980, %v2941
        %3010 = vst.msk [vmem:[#allocation2 + $0x74] sm:$0xf] %vm2980, %v2943
        %3011 = vst.msk [vmem:[#allocation2 + $0x78] sm:$0xf] %vm2980, %v2945
        %3012 = vst.msk [vmem:[#allocation2 + $0x7c] sm:$0xf] %vm2980, %v2947
        %v3013 = vld [vmem:[%s2258] sm:$0xe]
        %v3014 = vld [vmem:[%s2258 + $0x4] sm:$0xf]
        %v3015 = vld [vmem:[%s2258 + $0x8] sm:$0x1]
        %v3016 = vld [vmem:[%s2258 + $0xc] sm:$0xe]
        %v3017 = vld [vmem:[%s2258 + $0x10] sm:$0xf]
        %v3018 = vld [vmem:[%s2258 + $0x14] sm:$0x1]
        %v3019 = vld [vmem:[%s2258 + $0x18] sm:$0xe]
        %v3020 = vld [vmem:[%s2258 + $0x1c] sm:$0xf]
        %v3021 = vld [vmem:[%s2258 + $0x20] sm:$0x1]
        %v3022 = vld [vmem:[%s2258 + $0x24] sm:$0xe]
        %v3023 = vld [vmem:[%s2258 + $0x28] sm:$0xf]
        %v3024 = vld [vmem:[%s2258 + $0x2c] sm:$0x1]
        %v3025 = vld [vmem:[%s2258 + $0x30] sm:$0xe]
        %v3026 = vld [vmem:[%s2258 + $0x34] sm:$0xf]
        %v3027 = vld [vmem:[%s2258 + $0x38] sm:$0x1]
        %v3028 = vld [vmem:[%s2258 + $0x3c] sm:$0xe]
        %v3029 = vld [vmem:[%s2258 + $0x40] sm:$0xf]
        %v3030 = vld [vmem:[%s2258 + $0x44] sm:$0x1]
        %v3031 = vld [vmem:[%s2258 + $0x48] sm:$0xe]
        %v3032 = vld [vmem:[%s2258 + $0x4c] sm:$0xf]
        %v3033 = vld [vmem:[%s2258 + $0x50] sm:$0x1]
        %v3034 = vld [vmem:[%s2258 + $0x54] sm:$0xe]
        %v3035 = vld [vmem:[%s2258 + $0x58] sm:$0xf]
        %v3036 = vld [vmem:[%s2258 + $0x5c] sm:$0x1]
        %v3037 = vld [vmem:[%s2258 + $0x60] sm:$0xe]
        %v3038 = vld [vmem:[%s2258 + $0x64] sm:$0xf]
        %v3039 = vld [vmem:[%s2258 + $0x68] sm:$0x1]
        %v3040 = vld [vmem:[%s2258 + $0x6c] sm:$0xe]
        %v3041 = vld [vmem:[%s2258 + $0x70] sm:$0xf]
        %v3042 = vld [vmem:[%s2258 + $0x74] sm:$0x1]
        %v3043 = vld [vmem:[%s2258 + $0x78] sm:$0xe]
        %v3044 = vld [vmem:[%s2258 + $0x7c] sm:$0xf]
        %v3045 = vld [vmem:[%s2258 + $0x80] sm:$0x1]
        %v3046 = vld [vmem:[%s2258 + $0x84] sm:$0xe]
        %v3047 = vld [vmem:[%s2258 + $0x88] sm:$0xf]
        %v3048 = vld [vmem:[%s2258 + $0x8c] sm:$0x1]
        %v3049 = vld [vmem:[%s2258 + $0x90] sm:$0xe]
        %v3050 = vld [vmem:[%s2258 + $0x94] sm:$0xf]
        %v3051 = vld [vmem:[%s2258 + $0x98] sm:$0x1]
        %v3052 = vld [vmem:[%s2258 + $0x9c] sm:$0xe]
        %v3053 = vld [vmem:[%s2258 + $0xa0] sm:$0xf]
        %v3054 = vld [vmem:[%s2258 + $0xa4] sm:$0x1]
        %v3055 = vld [vmem:[%s2258 + $0xa8] sm:$0xe]
        %v3056 = vld [vmem:[%s2258 + $0xac] sm:$0xf]
        %v3057 = vld [vmem:[%s2258 + $0xb0] sm:$0x1]
        %v3058 = vld [vmem:[%s2258 + $0xb4] sm:$0xe]
        %v3059 = vld [vmem:[%s2258 + $0xb8] sm:$0xf]
        %v3060 = vld [vmem:[%s2258 + $0xbc] sm:$0x1]
        %v3109 = vrot.slane %v3013, 5
        %v3110 = vrot.slane %v3109, 4
        %v3111 = vrot.slane %v3014, 5
        %v3112 = vsel %vm924, %v3110, %v3111
        %v3113 = vrot.slane %v3111, 4
        %v3114 = vrot.slane %v3015, 5
        %v3115 = vsel %vm924, %v3113, %v3114
        %v3116 = vrot.slane %v3016, 5
        %v3117 = vrot.slane %v3116, 4
        %v3118 = vrot.slane %v3017, 5
        %v3119 = vsel %vm924, %v3117, %v3118
        %v3120 = vrot.slane %v3118, 4
        %v3121 = vrot.slane %v3018, 5
        %v3122 = vsel %vm924, %v3120, %v3121
        %v3123 = vrot.slane %v3019, 5
        %v3124 = vrot.slane %v3123, 4
        %v3125 = vrot.slane %v3020, 5
        %v3126 = vsel %vm924, %v3124, %v3125
        %v3127 = vrot.slane %v3125, 4
        %v3128 = vrot.slane %v3021, 5
        %v3129 = vsel %vm924, %v3127, %v3128
        %v3130 = vrot.slane %v3022, 5
        %v3131 = vrot.slane %v3130, 4
        %v3132 = vrot.slane %v3023, 5
        %v3133 = vsel %vm924, %v3131, %v3132
        %v3134 = vrot.slane %v3132, 4
        %v3135 = vrot.slane %v3024, 5
        %v3136 = vsel %vm924, %v3134, %v3135
        %v3137 = vrot.slane %v3025, 5
        %v3138 = vrot.slane %v3137, 4
        %v3139 = vrot.slane %v3026, 5
        %v3140 = vsel %vm924, %v3138, %v3139
        %v3141 = vrot.slane %v3139, 4
        %v3142 = vrot.slane %v3027, 5
        %v3143 = vsel %vm924, %v3141, %v3142
        %v3144 = vrot.slane %v3028, 5
        %v3145 = vrot.slane %v3144, 4
        %v3146 = vrot.slane %v3029, 5
        %v3147 = vsel %vm924, %v3145, %v3146
        %v3148 = vrot.slane %v3146, 4
        %v3149 = vrot.slane %v3030, 5
        %v3150 = vsel %vm924, %v3148, %v3149
        %v3151 = vrot.slane %v3031, 5
        %v3152 = vrot.slane %v3151, 4
        %v3153 = vrot.slane %v3032, 5
        %v3154 = vsel %vm924, %v3152, %v3153
        %v3155 = vrot.slane %v3153, 4
        %v3156 = vrot.slane %v3033, 5
        %v3157 = vsel %vm924, %v3155, %v3156
        %v3158 = vrot.slane %v3034, 5
        %v3159 = vrot.slane %v3158, 4
        %v3160 = vrot.slane %v3035, 5
        %v3161 = vsel %vm924, %v3159, %v3160
        %v3162 = vrot.slane %v3160, 4
        %v3163 = vrot.slane %v3036, 5
        %v3164 = vsel %vm924, %v3162, %v3163
        %v3165 = vrot.slane %v3037, 5
        %v3166 = vrot.slane %v3165, 4
        %v3167 = vrot.slane %v3038, 5
        %v3168 = vsel %vm924, %v3166, %v3167
        %v3169 = vrot.slane %v3167, 4
        %v3170 = vrot.slane %v3039, 5
        %v3171 = vsel %vm924, %v3169, %v3170
        %v3172 = vrot.slane %v3040, 5
        %v3173 = vrot.slane %v3172, 4
        %v3174 = vrot.slane %v3041, 5
        %v3175 = vsel %vm924, %v3173, %v3174
        %v3176 = vrot.slane %v3174, 4
        %v3177 = vrot.slane %v3042, 5
        %v3178 = vsel %vm924, %v3176, %v3177
        %v3179 = vrot.slane %v3043, 5
        %v3180 = vrot.slane %v3179, 4
        %v3181 = vrot.slane %v3044, 5
        %v3182 = vsel %vm924, %v3180, %v3181
        %v3183 = vrot.slane %v3181, 4
        %v3184 = vrot.slane %v3045, 5
        %v3185 = vsel %vm924, %v3183, %v3184
        %v3186 = vrot.slane %v3046, 5
        %v3187 = vrot.slane %v3186, 4
        %v3188 = vrot.slane %v3047, 5
        %v3189 = vsel %vm924, %v3187, %v3188
        %v3190 = vrot.slane %v3188, 4
        %v3191 = vrot.slane %v3048, 5
        %v3192 = vsel %vm924, %v3190, %v3191
        %v3193 = vrot.slane %v3049, 5
        %v3194 = vrot.slane %v3193, 4
        %v3195 = vrot.slane %v3050, 5
        %v3196 = vsel %vm924, %v3194, %v3195
        %v3197 = vrot.slane %v3195, 4
        %v3198 = vrot.slane %v3051, 5
        %v3199 = vsel %vm924, %v3197, %v3198
        %v3200 = vrot.slane %v3052, 5
        %v3201 = vrot.slane %v3200, 4
        %v3202 = vrot.slane %v3053, 5
        %v3203 = vsel %vm924, %v3201, %v3202
        %v3204 = vrot.slane %v3202, 4
        %v3205 = vrot.slane %v3054, 5
        %v3206 = vsel %vm924, %v3204, %v3205
        %v3207 = vrot.slane %v3055, 5
        %v3208 = vrot.slane %v3207, 4
        %v3209 = vrot.slane %v3056, 5
        %v3210 = vsel %vm924, %v3208, %v3209
        %v3211 = vrot.slane %v3209, 4
        %v3212 = vrot.slane %v3057, 5
        %v3213 = vsel %vm924, %v3211, %v3212
        %v3214 = vrot.slane %v3058, 5
        %v3215 = vrot.slane %v3214, 4
        %v3216 = vrot.slane %v3059, 5
        %v3217 = vsel %vm924, %v3215, %v3216
        %v3218 = vrot.slane %v3216, 4
        %v3219 = vrot.slane %v3060, 5
        %v3220 = vsel %vm924, %v3218, %v3219
        %3221 = vrot.lane.b32.xlu0 %v3112, 64
        %v3222 = vpop.permute.xlu0 %3221
        %3223 = vrot.lane.b32.xlu0 %v3115, 64
        %v3224 = vpop.permute.xlu0 %3223
        %3225 = vrot.lane.b32.xlu0 %v3119, 64
        %v3226 = vpop.permute.xlu0 %3225
        %3227 = vrot.lane.b32.xlu0 %v3122, 64
        %v3228 = vpop.permute.xlu0 %3227
        %3229 = vrot.lane.b32.xlu0 %v3126, 64
        %v3230 = vpop.permute.xlu0 %3229
        %3231 = vrot.lane.b32.xlu0 %v3129, 64
        %v3232 = vpop.permute.xlu0 %3231
        %3233 = vrot.lane.b32.xlu0 %v3133, 64
        %v3234 = vpop.permute.xlu0 %3233
        %3235 = vrot.lane.b32.xlu0 %v3136, 64
        %v3236 = vpop.permute.xlu0 %3235
        %3237 = vrot.lane.b32.xlu0 %v3140, 64
        %v3238 = vpop.permute.xlu0 %3237
        %3239 = vrot.lane.b32.xlu0 %v3143, 64
        %v3240 = vpop.permute.xlu0 %3239
        %3241 = vrot.lane.b32.xlu0 %v3147, 64
        %v3242 = vpop.permute.xlu0 %3241
        %3243 = vrot.lane.b32.xlu0 %v3150, 64
        %v3244 = vpop.permute.xlu0 %3243
        %3245 = vrot.lane.b32.xlu0 %v3154, 64
        %v3246 = vpop.permute.xlu0 %3245
        %3247 = vrot.lane.b32.xlu0 %v3157, 64
        %v3248 = vpop.permute.xlu0 %3247
        %3249 = vrot.lane.b32.xlu0 %v3161, 64
        %v3250 = vpop.permute.xlu0 %3249
        %3251 = vrot.lane.b32.xlu0 %v3164, 64
        %v3252 = vpop.permute.xlu0 %3251
        %3253 = vrot.lane.b32.xlu0 %v3168, 64
        %v3254 = vpop.permute.xlu0 %3253
        %3255 = vrot.lane.b32.xlu0 %v3171, 64
        %v3256 = vpop.permute.xlu0 %3255
        %3257 = vrot.lane.b32.xlu0 %v3175, 64
        %v3258 = vpop.permute.xlu0 %3257
        %3259 = vrot.lane.b32.xlu0 %v3178, 64
        %v3260 = vpop.permute.xlu0 %3259
        %3261 = vrot.lane.b32.xlu0 %v3182, 64
        %v3262 = vpop.permute.xlu0 %3261
        %3263 = vrot.lane.b32.xlu0 %v3185, 64
        %v3264 = vpop.permute.xlu0 %3263
        %3265 = vrot.lane.b32.xlu0 %v3189, 64
        %v3266 = vpop.permute.xlu0 %3265
        %3267 = vrot.lane.b32.xlu0 %v3192, 64
        %v3268 = vpop.permute.xlu0 %3267
        %3269 = vrot.lane.b32.xlu0 %v3196, 64
        %v3270 = vpop.permute.xlu0 %3269
        %3271 = vrot.lane.b32.xlu0 %v3199, 64
        %v3272 = vpop.permute.xlu0 %3271
        %3273 = vrot.lane.b32.xlu0 %v3203, 64
        %v3274 = vpop.permute.xlu0 %3273
        %3275 = vrot.lane.b32.xlu0 %v3206, 64
        %v3276 = vpop.permute.xlu0 %3275
        %3277 = vrot.lane.b32.xlu0 %v3210, 64
        %v3278 = vpop.permute.xlu0 %3277
        %3279 = vrot.lane.b32.xlu0 %v3213, 64
        %v3280 = vpop.permute.xlu0 %3279
        %3281 = vrot.lane.b32.xlu0 %v3217, 64
        %v3282 = vpop.permute.xlu0 %3281
        %3283 = vrot.lane.b32.xlu0 %v3220, 64
        %v3284 = vpop.permute.xlu0 %3283
        %vm3317 = vcmask 585216
        %3318 = vst.msk [vmem:[#allocation2] sm:$0xf] %vm3317, %v3222
        %3319 = vst.msk [vmem:[#allocation2 + $0x4] sm:$0xf] %vm3317, %v3224
        %3320 = vst.msk [vmem:[#allocation2 + $0x8] sm:$0xf] %vm3317, %v3226
        %3321 = vst.msk [vmem:[#allocation2 + $0xc] sm:$0xf] %vm3317, %v3228
        %3322 = vst.msk [vmem:[#allocation2 + $0x10] sm:$0xf] %vm3317, %v3230
        %3323 = vst.msk [vmem:[#allocation2 + $0x14] sm:$0xf] %vm3317, %v3232
        %3324 = vst.msk [vmem:[#allocation2 + $0x18] sm:$0xf] %vm3317, %v3234
        %3325 = vst.msk [vmem:[#allocation2 + $0x1c] sm:$0xf] %vm3317, %v3236
        %3326 = vst.msk [vmem:[#allocation2 + $0x20] sm:$0xf] %vm3317, %v3238
        %3327 = vst.msk [vmem:[#allocation2 + $0x24] sm:$0xf] %vm3317, %v3240
        %3328 = vst.msk [vmem:[#allocation2 + $0x28] sm:$0xf] %vm3317, %v3242
        %3329 = vst.msk [vmem:[#allocation2 + $0x2c] sm:$0xf] %vm3317, %v3244
        %3330 = vst.msk [vmem:[#allocation2 + $0x30] sm:$0xf] %vm3317, %v3246
        %3331 = vst.msk [vmem:[#allocation2 + $0x34] sm:$0xf] %vm3317, %v3248
        %3332 = vst.msk [vmem:[#allocation2 + $0x38] sm:$0xf] %vm3317, %v3250
        %3333 = vst.msk [vmem:[#allocation2 + $0x3c] sm:$0xf] %vm3317, %v3252
        %3334 = vst.msk [vmem:[#allocation2 + $0x40] sm:$0xf] %vm3317, %v3254
        %3335 = vst.msk [vmem:[#allocation2 + $0x44] sm:$0xf] %vm3317, %v3256
        %3336 = vst.msk [vmem:[#allocation2 + $0x48] sm:$0xf] %vm3317, %v3258
        %3337 = vst.msk [vmem:[#allocation2 + $0x4c] sm:$0xf] %vm3317, %v3260
        %3338 = vst.msk [vmem:[#allocation2 + $0x50] sm:$0xf] %vm3317, %v3262
        %3339 = vst.msk [vmem:[#allocation2 + $0x54] sm:$0xf] %vm3317, %v3264
        %3340 = vst.msk [vmem:[#allocation2 + $0x58] sm:$0xf] %vm3317, %v3266
        %3341 = vst.msk [vmem:[#allocation2 + $0x5c] sm:$0xf] %vm3317, %v3268
        %3342 = vst.msk [vmem:[#allocation2 + $0x60] sm:$0xf] %vm3317, %v3270
        %3343 = vst.msk [vmem:[#allocation2 + $0x64] sm:$0xf] %vm3317, %v3272
        %3344 = vst.msk [vmem:[#allocation2 + $0x68] sm:$0xf] %vm3317, %v3274
        %3345 = vst.msk [vmem:[#allocation2 + $0x6c] sm:$0xf] %vm3317, %v3276
        %3346 = vst.msk [vmem:[#allocation2 + $0x70] sm:$0xf] %vm3317, %v3278
        %3347 = vst.msk [vmem:[#allocation2 + $0x74] sm:$0xf] %vm3317, %v3280
        %3348 = vst.msk [vmem:[#allocation2 + $0x78] sm:$0xf] %vm3317, %v3282
        %3349 = vst.msk [vmem:[#allocation2 + $0x7c] sm:$0xf] %vm3317, %v3284
        %v3350 = vld [vmem:[#allocation2] sm:$0xf]
        %v3351 = vld [vmem:[#allocation2 + $0x4] sm:$0xf]
        %v3352 = vld [vmem:[#allocation2 + $0x8] sm:$0xf]
        %v3353 = vld [vmem:[#allocation2 + $0xc] sm:$0xf]
        %v3354 = vld [vmem:[#allocation2 + $0x10] sm:$0xf]
        %v3355 = vld [vmem:[#allocation2 + $0x14] sm:$0xf]
        %v3356 = vld [vmem:[#allocation2 + $0x18] sm:$0xf]
        %v3357 = vld [vmem:[#allocation2 + $0x1c] sm:$0xf]
        %v3358 = vld [vmem:[#allocation2 + $0x20] sm:$0xf]
        %v3359 = vld [vmem:[#allocation2 + $0x24] sm:$0xf]
        %v3360 = vld [vmem:[#allocation2 + $0x28] sm:$0xf]
        %v3361 = vld [vmem:[#allocation2 + $0x2c] sm:$0xf]
        %v3362 = vld [vmem:[#allocation2 + $0x30] sm:$0xf]
        %v3363 = vld [vmem:[#allocation2 + $0x34] sm:$0xf]
        %v3364 = vld [vmem:[#allocation2 + $0x38] sm:$0xf]
        %v3365 = vld [vmem:[#allocation2 + $0x3c] sm:$0xf]
        %v3366 = vld [vmem:[#allocation2 + $0x40] sm:$0xf]
        %v3367 = vld [vmem:[#allocation2 + $0x44] sm:$0xf]
        %v3368 = vld [vmem:[#allocation2 + $0x48] sm:$0xf]
        %v3369 = vld [vmem:[#allocation2 + $0x4c] sm:$0xf]
        %v3370 = vld [vmem:[#allocation2 + $0x50] sm:$0xf]
        %v3371 = vld [vmem:[#allocation2 + $0x54] sm:$0xf]
        %v3372 = vld [vmem:[#allocation2 + $0x58] sm:$0xf]
        %v3373 = vld [vmem:[#allocation2 + $0x5c] sm:$0xf]
        %v3374 = vld [vmem:[#allocation2 + $0x60] sm:$0xf]
        %v3375 = vld [vmem:[#allocation2 + $0x64] sm:$0xf]
        %v3376 = vld [vmem:[#allocation2 + $0x68] sm:$0xf]
        %v3377 = vld [vmem:[#allocation2 + $0x6c] sm:$0xf]
        %v3378 = vld [vmem:[#allocation2 + $0x70] sm:$0xf]
        %v3379 = vld [vmem:[#allocation2 + $0x74] sm:$0xf]
        %v3380 = vld [vmem:[#allocation2 + $0x78] sm:$0xf]
        %v3381 = vld [vmem:[#allocation2 + $0x7c] sm:$0xf]
        %v3382 = vld [vmem:[%s1] sm:$0xf]
        %v3383 = vld [vmem:[%s1 + $0x4] sm:$0xf]
        %v3384 = vld [vmem:[%s1 + $0x8] sm:$0xf]
        %v3385 = vld [vmem:[%s1 + $0xc] sm:$0xf]
        %v3386 = vld [vmem:[%s1 + $0x10] sm:$0xf]
        %v3387 = vld [vmem:[%s1 + $0x14] sm:$0xf]
        %v3388 = vld [vmem:[%s1 + $0x18] sm:$0xf]
        %v3389 = vld [vmem:[%s1 + $0x1c] sm:$0xf]
        %v3390 = vld [vmem:[%s1 + $0x20] sm:$0xf]
        %v3423 = vunpack.c.l.b16 %v3350
        %v3424 = vunpack.c.l.b16 %v3351
        %v3425 = vunpack.c.l.b16 %v3352
        %v3426 = vunpack.c.l.b16 %v3353
        %v3427 = vunpack.c.l.b16 %v3354
        %v3428 = vunpack.c.l.b16 %v3355
        %v3429 = vunpack.c.l.b16 %v3356
        %v3430 = vunpack.c.l.b16 %v3357
        %v3431 = vunpack.c.l.b16 %v3358
        %v3432 = vunpack.c.l.b16 %v3359
        %v3433 = vunpack.c.l.b16 %v3360
        %v3434 = vunpack.c.l.b16 %v3361
        %v3435 = vunpack.c.l.b16 %v3362
        %v3436 = vunpack.c.l.b16 %v3363
        %v3437 = vunpack.c.l.b16 %v3364
        %v3438 = vunpack.c.l.b16 %v3365
        %v3439 = vunpack.c.l.b16 %v3366
        %v3440 = vunpack.c.l.b16 %v3367
        %v3441 = vunpack.c.l.b16 %v3368
        %v3442 = vunpack.c.l.b16 %v3369
        %v3443 = vunpack.c.l.b16 %v3370
        %v3444 = vunpack.c.l.b16 %v3371
        %v3445 = vunpack.c.l.b16 %v3372
        %v3446 = vunpack.c.l.b16 %v3373
        %v3447 = vunpack.c.l.b16 %v3374
        %v3448 = vunpack.c.l.b16 %v3375
        %v3449 = vunpack.c.l.b16 %v3376
        %v3450 = vunpack.c.l.b16 %v3377
        %v3451 = vunpack.c.l.b16 %v3378
        %v3452 = vunpack.c.l.b16 %v3379
        %v3453 = vunpack.c.l.b16 %v3380
        %v3454 = vunpack.c.l.b16 %v3381
        %v3455 = vpack.c.b16 %v3424, %v3423
        %v3456 = vpack.c.b16 %v3426, %v3425
        %v3457 = vpack.c.b16 %v3428, %v3427
        %v3458 = vpack.c.b16 %v3430, %v3429
        %v3459 = vpack.c.b16 %v3432, %v3431
        %v3460 = vpack.c.b16 %v3434, %v3433
        %v3461 = vpack.c.b16 %v3436, %v3435
        %v3462 = vpack.c.b16 %v3438, %v3437
        %v3463 = vpack.c.b16 %v3440, %v3439
        %v3464 = vpack.c.b16 %v3442, %v3441
        %v3465 = vpack.c.b16 %v3444, %v3443
        %v3466 = vpack.c.b16 %v3446, %v3445
        %v3467 = vpack.c.b16 %v3448, %v3447
        %v3468 = vpack.c.b16 %v3450, %v3449
        %v3469 = vpack.c.b16 %v3452, %v3451
        %v3470 = vpack.c.b16 %v3454, %v3453
        %v3480 = vunpack.c.l.b16 %v3382
        %v3481 = vunpack.c.l.b16 %v3383
        %v3482 = vunpack.c.l.b16 %v3384
        %v3483 = vunpack.c.l.b16 %v3385
        %v3484 = vunpack.c.l.b16 %v3386
        %v3485 = vunpack.c.l.b16 %v3387
        %v3486 = vunpack.c.l.b16 %v3388
        %v3487 = vunpack.c.l.b16 %v3389
        %v3488 = vunpack.c.l.b16 %v3390
        %v3489 = vpack.c.b16 %v3481, %v3480
        %v3490 = vpack.c.b16 %v3483, %v3482
        %v3491 = vpack.c.b16 %v3485, %v3484
        %v3492 = vpack.c.b16 %v3487, %v3486
        %v3493 = vpack.c.b16 %v3488, %v3488
        %vm3498 = vcmask 588800
        %v3500 = vsel %vm3498, %v3455, 0
        %v3503 = vsel %vm3498, %v3456, 0
        %v3506 = vsel %vm3498, %v3457, 0
        %v3509 = vsel %vm3498, %v3458, 0
        %v3512 = vsel %vm3498, %v3459, 0
        %v3515 = vsel %vm3498, %v3460, 0
        %v3518 = vsel %vm3498, %v3461, 0
        %v3521 = vsel %vm3498, %v3462, 0
        %v3524 = vsel %vm3498, %v3463, 0
        %v3527 = vsel %vm3498, %v3464, 0
        %v3530 = vsel %vm3498, %v3465, 0
        %v3533 = vsel %vm3498, %v3466, 0
        %v3536 = vsel %vm3498, %v3467, 0
        %v3539 = vsel %vm3498, %v3468, 0
        %v3542 = vsel %vm3498, %v3469, 0
        %v3545 = vsel %vm3498, %v3470, 0
        %vm3547 = vcmask 1043456
        %v3549 = vsel %vm3547, %v3493, 0
        %3551 = vmatprep.subr.bf16.mxu0 0
        %3552 = vmatpush1.bf16.msra.mxu0 0
        %3553 = vmatprep.subr.bf16.mxu0 0
        %3554 = vmatpush1.bf16.msra.mxu0 0
        %3555 = vmatprep.subr.bf16.mxu0 0
        %3556 = vmatpush1.bf16.msra.mxu0 0
        %3557 = vmatprep.subr.bf16.mxu0 0
        %3558 = vmatpush1.bf16.msra.mxu0 %v3549
        %3559 = vmatprep.subr.bf16.mxu0 0
        %3560 = vmatpush1.bf16.msra.mxu0 %v3492
        %3561 = vmatprep.subr.bf16.mxu0 0
        %3562 = vmatpush1.bf16.msra.mxu0 %v3491
        %3563 = vmatprep.subr.bf16.mxu0 0
        %3564 = vmatpush1.bf16.msra.mxu0 %v3490
        %3565 = vmatprep.subr.bf16.mxu0 0
        %3566 = vmatpush1.bf16.msra.mxu0 %v3489
        %3567 = vmatprep.subr.bf16.mxu0 0
        %3568 = vmatpush2.bf16.msra.mxu0 0
        %3569 = vmatprep.subr.bf16.mxu0 0
        %3570 = vmatpush2.bf16.msra.mxu0 0
        %3571 = vmatprep.subr.bf16.mxu0 0
        %3572 = vmatpush2.bf16.msra.mxu0 0
        %3573 = vmatprep.subr.bf16.mxu0 0
        %3574 = vmatpush2.bf16.msra.mxu0 0
        %3575 = vmatprep.subr.bf16.mxu0 0
        %3576 = vmatpush2.bf16.msra.mxu0 0
        %3577 = vmatprep.subr.bf16.mxu0 0
        %3578 = vmatpush2.bf16.msra.mxu0 0
        %3579 = vmatprep.subr.bf16.mxu0 0
        %3580 = vmatpush2.bf16.msra.mxu0 0
        %3581 = vmatprep.subr.bf16.mxu0 0
        %3582 = vmatpush2.bf16.msra.mxu0 0
        %3583 = vmatprep.mubr.bf16.mxu0 0
        %3584 = vmatmul.mubr.bf16.gmra.mxu0 %v3500
        %v3585 = vpop.f32.mrf.mxu0
        %v3586 = vadd.f32 0.0, %v3585
        %v3587 = vpop.f32.mrf.mxu0
        %v3588 = vpop.f32.mrf.mxu0
        %v3589 = vadd.f32 0.0, %v3588
        %v3590 = vpop.f32.mrf.mxu0
        %3591 = vmatprep.mubr.bf16.mxu0 0
        %3592 = vmatmul.mubr.bf16.gmra.mxu0 %v3503
        %v3593 = vpop.f32.mrf.mxu0
        %v3594 = vadd.f32 0.0, %v3593
        %v3595 = vpop.f32.mrf.mxu0
        %v3596 = vpop.f32.mrf.mxu0
        %v3597 = vadd.f32 0.0, %v3596
        %v3598 = vpop.f32.mrf.mxu0
        %3599 = vmatprep.mubr.bf16.mxu0 0
        %3600 = vmatmul.mubr.bf16.gmra.mxu0 %v3506
        %v3601 = vpop.f32.mrf.mxu0
        %v3602 = vadd.f32 0.0, %v3601
        %v3603 = vpop.f32.mrf.mxu0
        %v3604 = vpop.f32.mrf.mxu0
        %v3605 = vadd.f32 0.0, %v3604
        %v3606 = vpop.f32.mrf.mxu0
        %3607 = vmatprep.mubr.bf16.mxu0 0
        %3608 = vmatmul.mubr.bf16.gmra.mxu0 %v3509
        %v3609 = vpop.f32.mrf.mxu0
        %v3610 = vadd.f32 0.0, %v3609
        %v3611 = vpop.f32.mrf.mxu0
        %v3612 = vpop.f32.mrf.mxu0
        %v3613 = vadd.f32 0.0, %v3612
        %v3614 = vpop.f32.mrf.mxu0
        %3615 = vmatprep.mubr.bf16.mxu0 0
        %3616 = vmatmul.mubr.bf16.gmra.mxu0 %v3512
        %v3617 = vpop.f32.mrf.mxu0
        %v3618 = vadd.f32 0.0, %v3617
        %v3619 = vpop.f32.mrf.mxu0
        %v3620 = vpop.f32.mrf.mxu0
        %v3621 = vadd.f32 0.0, %v3620
        %v3622 = vpop.f32.mrf.mxu0
        %3623 = vmatprep.mubr.bf16.mxu0 0
        %3624 = vmatmul.mubr.bf16.gmra.mxu0 %v3515
        %v3625 = vpop.f32.mrf.mxu0
        %v3626 = vadd.f32 0.0, %v3625
        %v3627 = vpop.f32.mrf.mxu0
        %v3628 = vpop.f32.mrf.mxu0
        %v3629 = vadd.f32 0.0, %v3628
        %v3630 = vpop.f32.mrf.mxu0
        %3631 = vmatprep.mubr.bf16.mxu0 0
        %3632 = vmatmul.mubr.bf16.gmra.mxu0 %v3518
        %v3633 = vpop.f32.mrf.mxu0
        %v3634 = vadd.f32 0.0, %v3633
        %v3635 = vpop.f32.mrf.mxu0
        %v3636 = vpop.f32.mrf.mxu0
        %v3637 = vadd.f32 0.0, %v3636
        %v3638 = vpop.f32.mrf.mxu0
        %3639 = vmatprep.mubr.bf16.mxu0 0
        %3640 = vmatmul.mubr.bf16.gmra.mxu0 %v3521
        %v3641 = vpop.f32.mrf.mxu0
        %v3642 = vadd.f32 0.0, %v3641
        %v3643 = vpop.f32.mrf.mxu0
        %v3644 = vpop.f32.mrf.mxu0
        %v3645 = vadd.f32 0.0, %v3644
        %v3646 = vpop.f32.mrf.mxu0
        %3647 = vmatprep.mubr.bf16.mxu0 0
        %3648 = vmatmul.mubr.bf16.gmra.mxu0 %v3524
        %v3649 = vpop.f32.mrf.mxu0
        %v3650 = vadd.f32 0.0, %v3649
        %v3651 = vpop.f32.mrf.mxu0
        %v3652 = vpop.f32.mrf.mxu0
        %v3653 = vadd.f32 0.0, %v3652
        %v3654 = vpop.f32.mrf.mxu0
        %3655 = vmatprep.mubr.bf16.mxu0 0
        %3656 = vmatmul.mubr.bf16.gmra.mxu0 %v3527
        %v3657 = vpop.f32.mrf.mxu0
        %v3658 = vadd.f32 0.0, %v3657
        %v3659 = vpop.f32.mrf.mxu0
        %v3660 = vpop.f32.mrf.mxu0
        %v3661 = vadd.f32 0.0, %v3660
        %v3662 = vpop.f32.mrf.mxu0
        %3663 = vmatprep.mubr.bf16.mxu0 0
        %3664 = vmatmul.mubr.bf16.gmra.mxu0 %v3530
        %v3665 = vpop.f32.mrf.mxu0
        %v3666 = vadd.f32 0.0, %v3665
        %v3667 = vpop.f32.mrf.mxu0
        %v3668 = vpop.f32.mrf.mxu0
        %v3669 = vadd.f32 0.0, %v3668
        %v3670 = vpop.f32.mrf.mxu0
        %3671 = vmatprep.mubr.bf16.mxu0 0
        %3672 = vmatmul.mubr.bf16.gmra.mxu0 %v3533
        %v3673 = vpop.f32.mrf.mxu0
        %v3674 = vadd.f32 0.0, %v3673
        %v3675 = vpop.f32.mrf.mxu0
        %v3676 = vpop.f32.mrf.mxu0
        %v3677 = vadd.f32 0.0, %v3676
        %v3678 = vpop.f32.mrf.mxu0
        %3679 = vmatprep.mubr.bf16.mxu0 0
        %3680 = vmatmul.mubr.bf16.gmra.mxu0 %v3536
        %v3681 = vpop.f32.mrf.mxu0
        %v3682 = vadd.f32 0.0, %v3681
        %v3683 = vpop.f32.mrf.mxu0
        %v3684 = vpop.f32.mrf.mxu0
        %v3685 = vadd.f32 0.0, %v3684
        %v3686 = vpop.f32.mrf.mxu0
        %3687 = vmatprep.mubr.bf16.mxu0 0
        %3688 = vmatmul.mubr.bf16.gmra.mxu0 %v3539
        %v3689 = vpop.f32.mrf.mxu0
        %v3690 = vadd.f32 0.0, %v3689
        %v3691 = vpop.f32.mrf.mxu0
        %v3692 = vpop.f32.mrf.mxu0
        %v3693 = vadd.f32 0.0, %v3692
        %v3694 = vpop.f32.mrf.mxu0
        %3695 = vmatprep.mubr.bf16.mxu0 0
        %3696 = vmatmul.mubr.bf16.gmra.mxu0 %v3542
        %v3697 = vpop.f32.mrf.mxu0
        %v3698 = vadd.f32 0.0, %v3697
        %v3699 = vpop.f32.mrf.mxu0
        %v3700 = vpop.f32.mrf.mxu0
        %v3701 = vadd.f32 0.0, %v3700
        %v3702 = vpop.f32.mrf.mxu0
        %3703 = vmatprep.mubr.bf16.mxu0 0
        %3704 = vmatmul.mubr.bf16.gmra.mxu0 %v3545
        %v3705 = vpop.f32.mrf.mxu0
        %v3706 = vadd.f32 0.0, %v3705
        %v3707 = vpop.f32.mrf.mxu0
        %v3708 = vpop.f32.mrf.mxu0
        %v3709 = vadd.f32 0.0, %v3708
        %v3710 = vpop.f32.mrf.mxu0
        %3711 = vdwg.mxu0
        %v3712 = vadd.f32 %v3586, %v3589
        %v3713 = vadd.f32 %v3712, %v3594
        %v3714 = vadd.f32 %v3713, %v3597
        %v3715 = vadd.f32 %v3714, %v3602
        %v3716 = vadd.f32 %v3715, %v3605
        %v3717 = vadd.f32 %v3716, %v3610
        %v3718 = vadd.f32 %v3717, %v3613
        %v3719 = vadd.f32 %v3718, %v3618
        %v3720 = vadd.f32 %v3719, %v3621
        %v3721 = vadd.f32 %v3720, %v3626
        %v3722 = vadd.f32 %v3721, %v3629
        %v3723 = vadd.f32 %v3722, %v3634
        %v3724 = vadd.f32 %v3723, %v3637
        %v3725 = vadd.f32 %v3724, %v3642
        %v3726 = vadd.f32 %v3725, %v3645
        %v3727 = vadd.f32 %v3726, %v3650
        %v3728 = vadd.f32 %v3727, %v3653
        %v3729 = vadd.f32 %v3728, %v3658
        %v3730 = vadd.f32 %v3729, %v3661
        %v3731 = vadd.f32 %v3730, %v3666
        %v3732 = vadd.f32 %v3731, %v3669
        %v3733 = vadd.f32 %v3732, %v3674
        %v3734 = vadd.f32 %v3733, %v3677
        %v3735 = vadd.f32 %v3734, %v3682
        %v3736 = vadd.f32 %v3735, %v3685
        %v3737 = vadd.f32 %v3736, %v3690
        %v3738 = vadd.f32 %v3737, %v3693
        %v3739 = vadd.f32 %v3738, %v3698
        %v3740 = vadd.f32 %v3739, %v3701
        %v3741 = vadd.f32 %v3740, %v3706
        %v3742 = vadd.f32 %v3741, %v3709
        %v3743 = vrot.slane %v3742, 4
        %v3744 = vadd.f32 %v3742, %v3743
        %v3745 = vrot.slane %v3744, 2
        %v3746 = vadd.f32 %v3744, %v3745
        %v3747 = vrot.slane %v3746, 1
        %v3748 = vadd.f32 %v3746, %v3747
        %v3749 = vrcp.pop 256.0
        %v3750 = vmul.f32 %v3748, %v3749
        %v3751 = vsub.f32 %v3586, %v3750
        %v3752 = vsub.f32 %v3589, %v3750
        %v3753 = vsub.f32 %v3594, %v3750
        %v3754 = vsub.f32 %v3597, %v3750
        %v3755 = vsub.f32 %v3602, %v3750
        %v3756 = vsub.f32 %v3605, %v3750
        %v3757 = vsub.f32 %v3610, %v3750
        %v3758 = vsub.f32 %v3613, %v3750
        %v3759 = vsub.f32 %v3618, %v3750
        %v3760 = vsub.f32 %v3621, %v3750
        %v3761 = vsub.f32 %v3626, %v3750
        %v3762 = vsub.f32 %v3629, %v3750
        %v3763 = vsub.f32 %v3634, %v3750
        %v3764 = vsub.f32 %v3637, %v3750
        %v3765 = vsub.f32 %v3642, %v3750
        %v3766 = vsub.f32 %v3645, %v3750
        %v3767 = vsub.f32 %v3650, %v3750
        %v3768 = vsub.f32 %v3653, %v3750
        %v3769 = vsub.f32 %v3658, %v3750
        %v3770 = vsub.f32 %v3661, %v3750
        %v3771 = vsub.f32 %v3666, %v3750
        %v3772 = vsub.f32 %v3669, %v3750
        %v3773 = vsub.f32 %v3674, %v3750
        %v3774 = vsub.f32 %v3677, %v3750
        %v3775 = vsub.f32 %v3682, %v3750
        %v3776 = vsub.f32 %v3685, %v3750
        %v3777 = vsub.f32 %v3690, %v3750
        %v3778 = vsub.f32 %v3693, %v3750
        %v3779 = vsub.f32 %v3698, %v3750
        %v3780 = vsub.f32 %v3701, %v3750
        %v3781 = vsub.f32 %v3706, %v3750
        %v3782 = vsub.f32 %v3709, %v3750
        %v3783 = vmul.f32 %v3751, %v3751
        %v3784 = vmul.f32 %v3752, %v3752
        %v3785 = vmul.f32 %v3753, %v3753
        %v3786 = vmul.f32 %v3754, %v3754
        %v3787 = vmul.f32 %v3755, %v3755
        %v3788 = vmul.f32 %v3756, %v3756
        %v3789 = vmul.f32 %v3757, %v3757
        %v3790 = vmul.f32 %v3758, %v3758
        %v3791 = vmul.f32 %v3759, %v3759
        %v3792 = vmul.f32 %v3760, %v3760
        %v3793 = vmul.f32 %v3761, %v3761
        %v3794 = vmul.f32 %v3762, %v3762
        %v3795 = vmul.f32 %v3763, %v3763
        %v3796 = vmul.f32 %v3764, %v3764
        %v3797 = vmul.f32 %v3765, %v3765
        %v3798 = vmul.f32 %v3766, %v3766
        %v3799 = vmul.f32 %v3767, %v3767
        %v3800 = vmul.f32 %v3768, %v3768
        %v3801 = vmul.f32 %v3769, %v3769
        %v3802 = vmul.f32 %v3770, %v3770
        %v3803 = vmul.f32 %v3771, %v3771
        %v3804 = vmul.f32 %v3772, %v3772
        %v3805 = vmul.f32 %v3773, %v3773
        %v3806 = vmul.f32 %v3774, %v3774
        %v3807 = vmul.f32 %v3775, %v3775
        %v3808 = vmul.f32 %v3776, %v3776
        %v3809 = vmul.f32 %v3777, %v3777
        %v3810 = vmul.f32 %v3778, %v3778
        %v3811 = vmul.f32 %v3779, %v3779
        %v3812 = vmul.f32 %v3780, %v3780
        %v3813 = vmul.f32 %v3781, %v3781
        %v3814 = vmul.f32 %v3782, %v3782
        %v3815 = vadd.f32 %v3783, %v3784
        %v3816 = vadd.f32 %v3815, %v3785
        %v3817 = vadd.f32 %v3816, %v3786
        %v3818 = vadd.f32 %v3817, %v3787
        %v3819 = vadd.f32 %v3818, %v3788
        %v3820 = vadd.f32 %v3819, %v3789
        %v3821 = vadd.f32 %v3820, %v3790
        %v3822 = vadd.f32 %v3821, %v3791
        %v3823 = vadd.f32 %v3822, %v3792
        %v3824 = vadd.f32 %v3823, %v3793
        %v3825 = vadd.f32 %v3824, %v3794
        %v3826 = vadd.f32 %v3825, %v3795
        %v3827 = vadd.f32 %v3826, %v3796
        %v3828 = vadd.f32 %v3827, %v3797
        %v3829 = vadd.f32 %v3828, %v3798
        %v3830 = vadd.f32 %v3829, %v3799
        %v3831 = vadd.f32 %v3830, %v3800
        %v3832 = vadd.f32 %v3831, %v3801
        %v3833 = vadd.f32 %v3832, %v3802
        %v3834 = vadd.f32 %v3833, %v3803
        %v3835 = vadd.f32 %v3834, %v3804
        %v3836 = vadd.f32 %v3835, %v3805
        %v3837 = vadd.f32 %v3836, %v3806
        %v3838 = vadd.f32 %v3837, %v3807
        %v3839 = vadd.f32 %v3838, %v3808
        %v3840 = vadd.f32 %v3839, %v3809
        %v3841 = vadd.f32 %v3840, %v3810
        %v3842 = vadd.f32 %v3841, %v3811
        %v3843 = vadd.f32 %v3842, %v3812
        %v3844 = vadd.f32 %v3843, %v3813
        %v3845 = vadd.f32 %v3844, %v3814
        %v3846 = vrot.slane %v3845, 4
        %v3847 = vadd.f32 %v3845, %v3846
        %v3848 = vrot.slane %v3847, 2
        %v3849 = vadd.f32 %v3847, %v3848
        %v3850 = vrot.slane %v3849, 1
        %v3851 = vadd.f32 %v3849, %v3850
        %v3852 = vmul.f32 %v3851, %v3749
        %v3853 = vadd.f32 %v3852, 1e-05
        %v3854 = vrsqrt.pop %v3853
        %v3855 = vmul.f32 %v3751, %v3854
        %v3856 = vmul.f32 %v3752, %v3854
        %v3857 = vmul.f32 %v3753, %v3854
        %v3858 = vmul.f32 %v3754, %v3854
        %v3859 = vmul.f32 %v3755, %v3854
        %v3860 = vmul.f32 %v3756, %v3854
        %v3861 = vmul.f32 %v3757, %v3854
        %v3862 = vmul.f32 %v3758, %v3854
        %v3863 = vmul.f32 %v3759, %v3854
        %v3864 = vmul.f32 %v3760, %v3854
        %v3865 = vmul.f32 %v3761, %v3854
        %v3866 = vmul.f32 %v3762, %v3854
        %v3867 = vmul.f32 %v3763, %v3854
        %v3868 = vmul.f32 %v3764, %v3854
        %v3869 = vmul.f32 %v3765, %v3854
        %v3870 = vmul.f32 %v3766, %v3854
        %v3871 = vmul.f32 %v3767, %v3854
        %v3872 = vmul.f32 %v3768, %v3854
        %v3873 = vmul.f32 %v3769, %v3854
        %v3874 = vmul.f32 %v3770, %v3854
        %v3875 = vmul.f32 %v3771, %v3854
        %v3876 = vmul.f32 %v3772, %v3854
        %v3877 = vmul.f32 %v3773, %v3854
        %v3878 = vmul.f32 %v3774, %v3854
        %v3879 = vmul.f32 %v3775, %v3854
        %v3880 = vmul.f32 %v3776, %v3854
        %v3881 = vmul.f32 %v3777, %v3854
        %v3882 = vmul.f32 %v3778, %v3854
        %v3883 = vmul.f32 %v3779, %v3854
        %v3884 = vmul.f32 %v3780, %v3854
        %v3885 = vmul.f32 %v3781, %v3854
        %v3886 = vmul.f32 %v3782, %v3854
        %v3887 = vld [vmem:[%s2] sm:$0x1]
        %v3889 = vlaneseq
        %v3890 = vshrl.u32 %v3889, 7
        %v3891 = vsub.s32 0, %v3890
        %v3892 = vrot.slane %v3887, %v3891
        %v3894 = vmul.f32 %v3855, %v3892
        %v3895 = vmul.f32 %v3856, %v3892
        %v3896 = vmul.f32 %v3857, %v3892
        %v3897 = vmul.f32 %v3858, %v3892
        %v3898 = vmul.f32 %v3859, %v3892
        %v3899 = vmul.f32 %v3860, %v3892
        %v3900 = vmul.f32 %v3861, %v3892
        %v3901 = vmul.f32 %v3862, %v3892
        %v3902 = vmul.f32 %v3863, %v3892
        %v3903 = vmul.f32 %v3864, %v3892
        %v3904 = vmul.f32 %v3865, %v3892
        %v3905 = vmul.f32 %v3866, %v3892
        %v3906 = vmul.f32 %v3867, %v3892
        %v3907 = vmul.f32 %v3868, %v3892
        %v3908 = vmul.f32 %v3869, %v3892
        %v3909 = vmul.f32 %v3870, %v3892
        %v3910 = vmul.f32 %v3871, %v3892
        %v3911 = vmul.f32 %v3872, %v3892
        %v3912 = vmul.f32 %v3873, %v3892
        %v3913 = vmul.f32 %v3874, %v3892
        %v3914 = vmul.f32 %v3875, %v3892
        %v3915 = vmul.f32 %v3876, %v3892
        %v3916 = vmul.f32 %v3877, %v3892
        %v3917 = vmul.f32 %v3878, %v3892
        %v3918 = vmul.f32 %v3879, %v3892
        %v3919 = vmul.f32 %v3880, %v3892
        %v3920 = vmul.f32 %v3881, %v3892
        %v3921 = vmul.f32 %v3882, %v3892
        %v3922 = vmul.f32 %v3883, %v3892
        %v3923 = vmul.f32 %v3884, %v3892
        %v3924 = vmul.f32 %v3885, %v3892
        %v3925 = vmul.f32 %v3886, %v3892
        %v3926 = vld [vmem:[%s3] sm:$0x1]
        %v3928 = vlaneseq
        %v3929 = vshrl.u32 %v3928, 7
        %v3930 = vsub.s32 0, %v3929
        %v3931 = vrot.slane %v3926, %v3930
        %v3933 = vadd.f32 %v3894, %v3931
        %v3934 = vadd.f32 %v3895, %v3931
        %v3935 = vadd.f32 %v3896, %v3931
        %v3936 = vadd.f32 %v3897, %v3931
        %v3937 = vadd.f32 %v3898, %v3931
        %v3938 = vadd.f32 %v3899, %v3931
        %v3939 = vadd.f32 %v3900, %v3931
        %v3940 = vadd.f32 %v3901, %v3931
        %v3941 = vadd.f32 %v3902, %v3931
        %v3942 = vadd.f32 %v3903, %v3931
        %v3943 = vadd.f32 %v3904, %v3931
        %v3944 = vadd.f32 %v3905, %v3931
        %v3945 = vadd.f32 %v3906, %v3931
        %v3946 = vadd.f32 %v3907, %v3931
        %v3947 = vadd.f32 %v3908, %v3931
        %v3948 = vadd.f32 %v3909, %v3931
        %v3949 = vadd.f32 %v3910, %v3931
        %v3950 = vadd.f32 %v3911, %v3931
        %v3951 = vadd.f32 %v3912, %v3931
        %v3952 = vadd.f32 %v3913, %v3931
        %v3953 = vadd.f32 %v3914, %v3931
        %v3954 = vadd.f32 %v3915, %v3931
        %v3955 = vadd.f32 %v3916, %v3931
        %v3956 = vadd.f32 %v3917, %v3931
        %v3957 = vadd.f32 %v3918, %v3931
        %v3958 = vadd.f32 %v3919, %v3931
        %v3959 = vadd.f32 %v3920, %v3931
        %v3960 = vadd.f32 %v3921, %v3931
        %v3961 = vadd.f32 %v3922, %v3931
        %v3962 = vadd.f32 %v3923, %v3931
        %v3963 = vadd.f32 %v3924, %v3931
        %v3964 = vadd.f32 %v3925, %v3931
        %v3965 = vmax.f32 %v3933, 0.0
        %v3966 = vmax.f32 %v3934, 0.0
        %v3967 = vmax.f32 %v3935, 0.0
        %v3968 = vmax.f32 %v3936, 0.0
        %v3969 = vmax.f32 %v3937, 0.0
        %v3970 = vmax.f32 %v3938, 0.0
        %v3971 = vmax.f32 %v3939, 0.0
        %v3972 = vmax.f32 %v3940, 0.0
        %v3973 = vmax.f32 %v3941, 0.0
        %v3974 = vmax.f32 %v3942, 0.0
        %v3975 = vmax.f32 %v3943, 0.0
        %v3976 = vmax.f32 %v3944, 0.0
        %v3977 = vmax.f32 %v3945, 0.0
        %v3978 = vmax.f32 %v3946, 0.0
        %v3979 = vmax.f32 %v3947, 0.0
        %v3980 = vmax.f32 %v3948, 0.0
        %v3981 = vmax.f32 %v3949, 0.0
        %v3982 = vmax.f32 %v3950, 0.0
        %v3983 = vmax.f32 %v3951, 0.0
        %v3984 = vmax.f32 %v3952, 0.0
        %v3985 = vmax.f32 %v3953, 0.0
        %v3986 = vmax.f32 %v3954, 0.0
        %v3987 = vmax.f32 %v3955, 0.0
        %v3988 = vmax.f32 %v3956, 0.0
        %v3989 = vmax.f32 %v3957, 0.0
        %v3990 = vmax.f32 %v3958, 0.0
        %v3991 = vmax.f32 %v3959, 0.0
        %v3992 = vmax.f32 %v3960, 0.0
        %v3993 = vmax.f32 %v3961, 0.0
        %v3994 = vmax.f32 %v3962, 0.0
        %v3995 = vmax.f32 %v3963, 0.0
        %v3996 = vmax.f32 %v3964, 0.0
        %3997 = vst [vmem:[#allocation3] sm:$0xff] %v3965
        %3998 = vst [vmem:[#allocation3 + $0x8] sm:$0xff] %v3966
        %3999 = vst [vmem:[#allocation3 + $0x10] sm:$0xff] %v3967
        %4000 = vst [vmem:[#allocation3 + $0x18] sm:$0xff] %v3968
        %4001 = vst [vmem:[#allocation3 + $0x20] sm:$0xff] %v3969
        %4002 = vst [vmem:[#allocation3 + $0x28] sm:$0xff] %v3970
        %4003 = vst [vmem:[#allocation3 + $0x30] sm:$0xff] %v3971
        %4004 = vst [vmem:[#allocation3 + $0x38] sm:$0xff] %v3972
        %4005 = vst [vmem:[#allocation3 + $0x40] sm:$0xff] %v3973
        %4006 = vst [vmem:[#allocation3 + $0x48] sm:$0xff] %v3974
        %4007 = vst [vmem:[#allocation3 + $0x50] sm:$0xff] %v3975
        %4008 = vst [vmem:[#allocation3 + $0x58] sm:$0xff] %v3976
        %4009 = vst [vmem:[#allocation3 + $0x60] sm:$0xff] %v3977
        %4010 = vst [vmem:[#allocation3 + $0x68] sm:$0xff] %v3978
        %4011 = vst [vmem:[#allocation3 + $0x70] sm:$0xff] %v3979
        %4012 = vst [vmem:[#allocation3 + $0x78] sm:$0xff] %v3980
        %4013 = vst [vmem:[#allocation3 + $0x80] sm:$0xff] %v3981
        %4014 = vst [vmem:[#allocation3 + $0x88] sm:$0xff] %v3982
        %4015 = vst [vmem:[#allocation3 + $0x90] sm:$0xff] %v3983
        %4016 = vst [vmem:[#allocation3 + $0x98] sm:$0xff] %v3984
        %4017 = vst [vmem:[#allocation3 + $0xa0] sm:$0xff] %v3985
        %4018 = vst [vmem:[#allocation3 + $0xa8] sm:$0xff] %v3986
        %4019 = vst [vmem:[#allocation3 + $0xb0] sm:$0xff] %v3987
        %4020 = vst [vmem:[#allocation3 + $0xb8] sm:$0xff] %v3988
        %4021 = vst [vmem:[#allocation3 + $0xc0] sm:$0xff] %v3989
        %4022 = vst [vmem:[#allocation3 + $0xc8] sm:$0xff] %v3990
        %4023 = vst [vmem:[#allocation3 + $0xd0] sm:$0xff] %v3991
        %4024 = vst [vmem:[#allocation3 + $0xd8] sm:$0xff] %v3992
        %4025 = vst [vmem:[#allocation3 + $0xe0] sm:$0xff] %v3993
        %4026 = vst [vmem:[#allocation3 + $0xe8] sm:$0xff] %v3994
        %4027 = vst [vmem:[#allocation3 + $0xf0] sm:$0xff] %v3995
        %4028 = vst [vmem:[#allocation3 + $0xf8] sm:$0xff] %v3996
        %v4029 = vld [vmem:[#allocation3] ss:$2 sm:$0xff]
        %s4030 = scalar_lea.vmem [#allocation3], 16
        %v4031 = vld [vmem:[%s4030] ss:$2 sm:$0xff]
        %s4032 = scalar_lea.vmem [#allocation3], 32
        %v4033 = vld [vmem:[%s4032] ss:$2 sm:$0xff]
        %s4034 = scalar_lea.vmem [#allocation3], 48
        %v4035 = vld [vmem:[%s4034] ss:$2 sm:$0xff]
        %s4036 = scalar_lea.vmem [#allocation3], 64
        %v4037 = vld [vmem:[%s4036] ss:$2 sm:$0xff]
        %s4038 = scalar_lea.vmem [#allocation3], 80
        %v4039 = vld [vmem:[%s4038] ss:$2 sm:$0xff]
        %s4040 = scalar_lea.vmem [#allocation3], 96
        %v4041 = vld [vmem:[%s4040] ss:$2 sm:$0xff]
        %s4042 = scalar_lea.vmem [#allocation3], 112
        %v4043 = vld [vmem:[%s4042] ss:$2 sm:$0xff]
        %s4044 = scalar_lea.vmem [#allocation3], 128
        %v4045 = vld [vmem:[%s4044] ss:$2 sm:$0xff]
        %s4046 = scalar_lea.vmem [#allocation3], 144
        %v4047 = vld [vmem:[%s4046] ss:$2 sm:$0xff]
        %s4048 = scalar_lea.vmem [#allocation3], 160
        %v4049 = vld [vmem:[%s4048] ss:$2 sm:$0xff]
        %s4050 = scalar_lea.vmem [#allocation3], 176
        %v4051 = vld [vmem:[%s4050] ss:$2 sm:$0xff]
        %s4052 = scalar_lea.vmem [#allocation3], 192
        %v4053 = vld [vmem:[%s4052] ss:$2 sm:$0xff]
        %s4054 = scalar_lea.vmem [#allocation3], 208
        %v4055 = vld [vmem:[%s4054] ss:$2 sm:$0xff]
        %s4056 = scalar_lea.vmem [#allocation3], 224
        %v4057 = vld [vmem:[%s4056] ss:$2 sm:$0xff]
        %s4058 = scalar_lea.vmem [#allocation3], 240
        %v4059 = vld [vmem:[%s4058] ss:$2 sm:$0xff]
        %s4060 = scalar_lea.vmem [#allocation3], 1
        %v4061 = vld [vmem:[%s4060] ss:$2 sm:$0xff]
        %s4062 = scalar_lea.vmem [#allocation3], 17
        %v4063 = vld [vmem:[%s4062] ss:$2 sm:$0xff]
        %s4064 = scalar_lea.vmem [#allocation3], 33
        %v4065 = vld [vmem:[%s4064] ss:$2 sm:$0xff]
        %s4066 = scalar_lea.vmem [#allocation3], 49
        %v4067 = vld [vmem:[%s4066] ss:$2 sm:$0xff]
        %s4068 = scalar_lea.vmem [#allocation3], 65
        %v4069 = vld [vmem:[%s4068] ss:$2 sm:$0xff]
        %s4070 = scalar_lea.vmem [#allocation3], 81
        %v4071 = vld [vmem:[%s4070] ss:$2 sm:$0xff]
        %s4072 = scalar_lea.vmem [#allocation3], 97
        %v4073 = vld [vmem:[%s4072] ss:$2 sm:$0xff]
        %s4074 = scalar_lea.vmem [#allocation3], 113
        %v4075 = vld [vmem:[%s4074] ss:$2 sm:$0xff]
        %s4076 = scalar_lea.vmem [#allocation3], 129
        %v4077 = vld [vmem:[%s4076] ss:$2 sm:$0xff]
        %s4078 = scalar_lea.vmem [#allocation3], 145
        %v4079 = vld [vmem:[%s4078] ss:$2 sm:$0xff]
        %s4080 = scalar_lea.vmem [#allocation3], 161
        %v4081 = vld [vmem:[%s4080] ss:$2 sm:$0xff]
        %s4082 = scalar_lea.vmem [#allocation3], 177
        %v4083 = vld [vmem:[%s4082] ss:$2 sm:$0xff]
        %s4084 = scalar_lea.vmem [#allocation3], 193
        %v4085 = vld [vmem:[%s4084] ss:$2 sm:$0xff]
        %s4086 = scalar_lea.vmem [#allocation3], 209
        %v4087 = vld [vmem:[%s4086] ss:$2 sm:$0xff]
        %s4088 = scalar_lea.vmem [#allocation3], 225
        %v4089 = vld [vmem:[%s4088] ss:$2 sm:$0xff]
        %s4090 = scalar_lea.vmem [#allocation3], 241
        %v4091 = vld [vmem:[%s4090] ss:$2 sm:$0xff]
        %v4092 = vadd.f32 %v4029, %v4061
        %v4093 = vadd.f32 %v4031, %v4063
        %v4094 = vadd.f32 %v4033, %v4065
        %v4095 = vadd.f32 %v4035, %v4067
        %v4096 = vadd.f32 %v4037, %v4069
        %v4097 = vadd.f32 %v4039, %v4071
        %v4098 = vadd.f32 %v4041, %v4073
        %v4099 = vadd.f32 %v4043, %v4075
        %v4100 = vadd.f32 %v4045, %v4077
        %v4101 = vadd.f32 %v4047, %v4079
        %v4102 = vadd.f32 %v4049, %v4081
        %v4103 = vadd.f32 %v4051, %v4083
        %v4104 = vadd.f32 %v4053, %v4085
        %v4105 = vadd.f32 %v4055, %v4087
        %v4106 = vadd.f32 %v4057, %v4089
        %v4107 = vadd.f32 %v4059, %v4091
        %v4108 = vadd.f32 %v4092, %v4093
        %v4109 = vadd.f32 %v4094, %v4095
        %v4110 = vadd.f32 %v4096, %v4097
        %v4111 = vadd.f32 %v4098, %v4099
        %v4112 = vadd.f32 %v4100, %v4101
        %v4113 = vadd.f32 %v4102, %v4103
        %v4114 = vadd.f32 %v4104, %v4105
        %v4115 = vadd.f32 %v4106, %v4107
        %v4116 = vmul.f32 %v4108, 0.25
        %v4117 = vmul.f32 %v4109, 0.25
        %v4118 = vmul.f32 %v4110, 0.25
        %v4119 = vmul.f32 %v4111, 0.25
        %v4120 = vmul.f32 %v4112, 0.25
        %v4121 = vmul.f32 %v4113, 0.25
        %v4122 = vmul.f32 %v4114, 0.25
        %v4123 = vmul.f32 %v4115, 0.25
        %4124 = vst [vmem:[%s190] sm:$0xff] %v4116
        %4125 = vst [vmem:[%s190 + $0x8] sm:$0xff] %v4117
        %4126 = vst [vmem:[%s190 + $0x10] sm:$0xff] %v4118
        %4127 = vst [vmem:[%s190 + $0x18] sm:$0xff] %v4119
        %4128 = vst [vmem:[%s190 + $0x20] sm:$0xff] %v4120
        %4129 = vst [vmem:[%s190 + $0x28] sm:$0xff] %v4121
        %4130 = vst [vmem:[%s190 + $0x30] sm:$0xff] %v4122
        %4131 = vst [vmem:[%s190 + $0x38] sm:$0xff] %v4123
        %s4132 = sand.u32 %s115, 1
        %s4133 = scalar_lea.sflag [#allocation5], %s4132
        %s4134 = sand.u32 %s115, 1
        %s4135 = smul.addr %s4134, 64
        %s4136 = scalar_lea.vmem [#allocation4], %s4135
        // Predicated region
        $region37: #{tpu_custom_call.1} parent=35 // pred_check
          %p4137 = pneg %p125
        $region38: #{tpu_custom_call.1} parent=35 // pred_check_branch
          %4139 = sbr.rel (%p4137) target = $region40
        $region39: #{tpu_custom_call.1} parent=35 // pred_region
          %s4141 = ssub.s32 1024, 1024
          %4142 = vsyncadd %s4133, %s4141
          %s4143 = smul.addr %s18, 8
          %s4144 = smul.addr %s4143, 128
          %s4145 = scalar_lea.hbm %s4, %s4144
          %s4146 = sshll.u32 %s4136, 4
          %s4147 = int_to_ptr.vmem [resolvable:$true] %s4146
          %4152 = dma.vmem_to_hbm [thread:$0]  %s4147, 1024, %s4145, %s4133, 128, 128, 8
        $region40: #{tpu_custom_call.1} parent=35 // pred_fallthru
          _
      $region36: #{tpu_custom_call.1} parent=5 // pred_fallthru
        _
      %p4153 = scmp.le.s32.totalorder 2, %s13
      // Predicated region
      $region41: #{tpu_custom_call.1} parent=5 // pred_check
        %p4154 = pneg %p4153
      $region42: #{tpu_custom_call.1} parent=5 // pred_check_branch
        %4156 = sbr.rel (%p4154) target = $region44
      $region43: #{tpu_custom_call.1} parent=5 // pred_region
        %s4157 = ssub.s32 %s13, 2
        // Predicated region
        $region45: #{tpu_custom_call.1} parent=43 // pred_check
          %p4158 = pneg %p131
        $region46: #{tpu_custom_call.1} parent=43 // pred_check_branch
          %4160 = sbr.rel (%p4158) target = $region48
        $region47: #{tpu_custom_call.1} parent=43 // pred_region
          %s4161 = sand.u32 %s116, 1
          %s4162 = scalar_lea.sflag [#allocation5], %s4161
          %s4163 = sand.u32 %s116, 1
          %s4164 = smul.addr %s4163, 64
          %s4165 = scalar_lea.vmem [#allocation4], %s4164
          %4166 = dma.done %s4162, 1024
        $region48: #{tpu_custom_call.1} parent=43 // pred_fallthru
          _
      $region44: #{tpu_custom_call.1} parent=5 // pred_fallthru
        _
    $region6: #{tpu_custom_call.1} parent=1 // loop_footer
      %s17 = sadd.s32 1, %s13
    $region7: #{tpu_custom_call.1} parent=1 // loop_footer_branch
      %12 = sbr.rel target = $region3
    $region8: #{tpu_custom_call.1} parent=1 // loop_exit
      _
    %4167 = vsyncpa [#allocation5], 1
    %s4168 = scalar_lea.sflag [#allocation5], 1
    %4169 = vsyncpa %s4168, 1

</llo_original>
